<compile_context>
chip_gen: v7x
topology: tpu7x:2x2x1
jax: 0.10.0
libtpu: 0.0.40
codegen_flags: <defaults>
</compile_context>

<pallas_src>
import math

import jax
import jax.numpy as jnp
from jax.experimental import pallas as pl
from jax.experimental.pallas import tpu as pltpu

# ----------------------------- configuration -------------------------------
B = 2            # batch size of conditioning labels c
C_DIM = 4        # conditioning dim
Z_DIM = 32       # G.z_dim
W_DIM = 32       # mapping output dim
C0 = 8           # synthesis feature channels
IMG_RES = 16     # G.img_resolution
IMG_CH = 1       # G.img_channels  (==1 exercises the repeat-to-3-channels path)
CROP = True      # self.crop

SQRT2 = math.sqrt(2.0)
VGG_MEAN = (123.675, 116.28, 103.53)
VGG_STD = (58.395, 57.12, 57.375)


def _lrelu(x):
    return jnp.where(x >= 0.0, x, 0.2 * x) * SQRT2


# ------------------------------ Pallas kernels ------------------------------


def _mapping_kernel(z_ref, c_ref, ew_ref, eb_ref, f1wz_ref, f1wc_ref, f1b_ref,
                    f2w_ref, f2b_ref, inw_ref, inb_ref, a1w_ref, a1b_ref,
                    a2w_ref, a2b_ref, x0_ref, s1_ref, s2_ref):
    """Whole mapping MLP + synthesis-input FC + both block style affines, one call."""
    z = z_ref[...]
    z = z * jax.lax.rsqrt(jnp.mean(z * z, axis=1, keepdims=True) + 1e-8)
    ce = jnp.dot(c_ref[...], ew_ref[...], preferred_element_type=jnp.float32) + eb_ref[...]
    ce = ce * jax.lax.rsqrt(jnp.mean(ce * ce, axis=1, keepdims=True) + 1e-8)
    # fc1 on concat([z, c_emb]) == z @ W_z + c_emb @ W_c  (weight split, no concat)
    h = (jnp.dot(z, f1wz_ref[...], preferred_element_type=jnp.float32)
         + jnp.dot(ce, f1wc_ref[...], preferred_element_type=jnp.float32)
         + f1b_ref[...])
    h = _lrelu(h)
    w = _lrelu(jnp.dot(h, f2w_ref[...], preferred_element_type=jnp.float32) + f2b_ref[...])
    x0_ref[...] = _lrelu(
        jnp.dot(w, inw_ref[...], preferred_element_type=jnp.float32) + inb_ref[...])
    s1_ref[...] = jnp.dot(w, a1w_ref[...], preferred_element_type=jnp.float32) + a1b_ref[...] + 1.0
    s2_ref[...] = jnp.dot(w, a2w_ref[...], preferred_element_type=jnp.float32) + a2b_ref[...] + 1.0


def _conv_noise_lrelu_kernel(p_ref, w_ref, b_ref, n_ref, o_ref):
    """Synthesis-block conv: (Cout,K)@(K,M) + bias + pre-scaled noise + lrelu.

    p: (K, M) bf16 patches, w: (Cout, K) bf16, b: (Cout, 1) f32,
    n: (1, M) f32 lane-dense noise row.  Output (Cout, M) lane-dense.
    """
    acc = jnp.dot(w_ref[...], p_ref[...], preferred_element_type=jnp.float32)
    acc = acc + b_ref[...] + n_ref[...]
    o_ref[...] = _lrelu(acc)


def _torgb_prep_kernel(x_ref, w_ref, b_ref, mean_ref, istd_ref, o_ref):
    """toRGB 1x1 conv + (img+1)*127.5 clip + 1->3 channel tile + VGG (x-mean)/std."""
    img = jnp.dot(w_ref[...], x_ref[...], preferred_element_type=jnp.float32) + b_ref[...]
    img = jnp.clip((img + 1.0) * 127.5, 0.0, 255.0)
    # (IMG_CH, M) broadcast against (3, 1) mean/std -> (3, M): replicates the
    # grayscale image to 3 channels and applies the per-channel normalization.
    o_ref[...] = (img - mean_ref[...]) * istd_ref[...]


def _conv_relu_kernel(p_ref, w_ref, b_ref, o_ref):
    """VGG conv: (Cout,K)@(K,M) + bias + ReLU, lane-dense output."""
    acc = jnp.dot(w_ref[...], p_ref[...], preferred_element_type=jnp.float32) + b_ref[...]
    o_ref[...] = jnp.maximum(acc, 0.0)


def _lpips_dist_kernel(f1a_ref, f1b_ref, s1_ref, f2a_ref, f2b_ref, s2_ref, o_ref):
    """LPIPS: channel-normalize (axis 0), scale, squared-diff, full sum -> (1,1)."""
    def part(a, b, s):
        na = a * jax.lax.rsqrt(jnp.sum(a * a, axis=0, keepdims=True) + 1e-10)
        nb = b * jax.lax.rsqrt(jnp.sum(b * b, axis=0, keepdims=True) + 1e-10)
        d = (na - nb) * s
        col = jnp.sum(d * d, axis=0, keepdims=True)           # (1, M)
        return jnp.sum(col, axis=1, keepdims=True)             # (1, 1)
    o_ref[...] = (part(f1a_ref[...], f1b_ref[...], s1_ref[...])
                  + part(f2a_ref[...], f2b_ref[...], s2_ref[...]))


# ---------------------- column-tiled fused GEMM wrapper ----------------------


def _fused_colwise(kernel_fn, inputs, out_rows, M):
    """Run `kernel_fn` with the big M (lane) dimension optionally split in two
    "parallel" column tiles (keeps v7x's two TensorCores busy, still only 1-2
    grid steps so per-step overhead stays negligible).

    `inputs` is a list of (array, column_tiled) in kernel-argument order.
    Column-tiled arrays have shape (rows, M); broadcast arrays are passed whole.
    """
    tn = M // 2 if (M >= 256 and M % 256 == 0) else M
    grid = (M // tn,)
    arrs, in_specs = [], []
    for arr, tiled in inputs:
        arrs.append(arr)
        if tiled:
            in_specs.append(pl.BlockSpec((arr.shape[0], tn), lambda j: (0, j)))
        else:
            in_specs.append(pl.BlockSpec(arr.shape, lambda j: (0, 0)))
    return pl.pallas_call(
        kernel_fn,
        out_shape=jax.ShapeDtypeStruct((out_rows, M), jnp.float32),
        grid=grid,
        in_specs=in_specs,
        out_specs=pl.BlockSpec((out_rows, tn), lambda j: (0, j)),
        compiler_params=pltpu.CompilerParams(dimension_semantics=("parallel",)),
    )(*arrs)


# ----------------------------- plain-JAX glue --------------------------------


def _im2col_cm(x):
    """3x3 / pad 1 / stride 1 im2col on channel-major (C, N, H, W) -> (9C, N*H*W).

    No activation transposes: just pad + 9 shifted slices + stack."""
    C, N, H, W = x.shape
    xp = jnp.pad(x, ((0, 0), (0, 0), (1, 1), (1, 1)))
    cols = [xp[:, :, i:i + H, j:j + W] for i in range(3) for j in range(3)]
    return jnp.stack(cols, axis=0).reshape(9 * C, N * H * W)


def _conv_w2d(weight):
    """(Cout, Cin, 3, 3) -> (Cout, 9*Cin), row order matching _im2col_cm."""
    cout = weight.shape[0]
    return weight.transpose(0, 2, 3, 1).reshape(cout, -1)


def _synth_block(x_cm, style, p, noise_key):
    """Style modulate + 2x nearest upsample (cheap XLA glue), then one fused
    Pallas kernel: conv3x3 GEMM + bias + noise + leaky-relu."""
    C, N, H, W = x_cm.shape
    x = x_cm * style.T[:, :, None, None]                       # per (n, c) modulation
    x = jnp.repeat(jnp.repeat(x, 2, axis=2), 2, axis=3)        # (C, N, 2H, 2W)
    H2, W2 = 2 * H, 2 * W
    M = N * H2 * W2
    patches = _im2col_cm(x)                                    # (9C, M)
    w2d = _conv_w2d(p["conv_w"])                               # (Cout, 9C)
    cout = w2d.shape[0]
    # fresh noise buffer every forward (matches buf.copy_(randn_like(buf)))
    noise = jax.random.normal(noise_key, (H2, W2), jnp.float32)
    noise_row = (jnp.broadcast_to(noise[None], (N, H2, W2)).reshape(1, M)
                 * p["noise_strength"])
    out = _fused_colwise(
        _conv_noise_lrelu_kernel,
        [(patches.astype(jnp.bfloat16), True),
         (w2d.astype(jnp.bfloat16), False),
         (p["conv_b"].reshape(cout, 1).astype(jnp.float32), False),
         (noise_row, True)],
        out_rows=cout, M=M)
    return out.reshape(cout, N, H2, W2)


def _torgb_and_preprocess(x_cm, p_syn):
    """toRGB 1x1 conv, crop, [0,255] clip, 1->3 tile and VGG mean/std, fused."""
    C, N, H, W = x_cm.shape
    if CROP:
        cc = H // 8
        # 1x1 toRGB conv is pointwise, so cropping before it is exact.
        x_cm = x_cm[:, :, cc * 3:cc * 7, cc * 2:cc * 6]
        H = W = cc * 4
    # TODO(synk): the `factor = G.img_resolution // 256` average-pool branch is
    # dead at IMG_RES=16 (factor == 0), so it is not lowered here.
    M = N * H * W
    w2d = p_syn["torgb_w"].reshape(IMG_CH, C)
    mean = jnp.asarray(VGG_MEAN, jnp.float32).reshape(3, 1)
    istd = (1.0 / jnp.asarray(VGG_STD, jnp.float32)).reshape(3, 1)
    out = _fused_colwise(
        _torgb_prep_kernel,
        [(x_cm.reshape(C, M).astype(jnp.bfloat16), True),
         (w2d.astype(jnp.bfloat16), False),
         (p_syn["torgb_b"].reshape(IMG_CH, 1).astype(jnp.float32), False),
         (mean, False),
         (istd, False)],
        out_rows=3, M=M)
    return out.reshape(3, N, H, W)


def _vgg_lpips_distance(img3, p):
    """Synthetic vgg16(return_lpips=True) + (lp1 - lp2)^2 sum, 3 fused kernels."""
    _, N, H, W = img3.shape
    c1 = p["c1_w"].shape[0]
    f1 = _fused_colwise(
        _conv_relu_kernel,
        [(_im2col_cm(img3).astype(jnp.bfloat16), True),
         (_conv_w2d(p["c1_w"]).astype(jnp.bfloat16), False),
         (p["c1_b"].reshape(c1, 1).astype(jnp.float32), False)],
        out_rows=c1, M=N * H * W)                              # (8, N*H*W)
    # 2x2 max pool (tiny, plain JAX)
    pooled = f1.reshape(c1, N, H // 2, 2, W // 2, 2).max(axis=(3, 5))
    H2, W2 = H // 2, W // 2
    c2 = p["c2_w"].shape[0]
    f2 = _fused_colwise(
        _conv_relu_kernel,
        [(_im2col_cm(pooled).astype(jnp.bfloat16), True),
         (_conv_w2d(p["c2_w"]).astype(jnp.bfloat16), False),
         (p["c2_b"].reshape(c2, 1).astype(jnp.float32), False)],
        out_rows=c2, M=N * H2 * W2)                            # (16, N*H2*W2)

    # scaling such that sum((lp1-lp2)^2) == sum_l mean_hw sum_c lin_c * diff^2
    s1 = jnp.sqrt(p["lin1"] / (H * W)).reshape(c1, 1)
    s2 = jnp.sqrt(p["lin2"] / (H2 * W2)).reshape(c2, 1)
    half1 = (N // 2) * H * W
    half2 = (N // 2) * H2 * W2
    dist = pl.pallas_call(
        _lpips_dist_kernel,
        out_shape=jax.ShapeDtypeStruct((1, 1), jnp.float32),
    )(f1[:, :half1], f1[:, half1:], s1, f2[:, :half2], f2[:, half2:], s2)
    return dist[0, 0]


# ------------------------------ full forward --------------------------------


@jax.jit
def lpips_distance_sampler_forward(params, c, rng):
    batch = c.shape[0]
    N = 2 * batch
    kz, k1, k2 = jax.random.split(rng, 3)
    z = jax.random.normal(kz, (N, Z_DIM), jnp.float32)
    c2 = jnp.concatenate([c, c], axis=0)

    m, s, v = params["mapping"], params["synthesis"], params["vgg"]
    fc1_wz, fc1_wc = m["fc1_w"][:Z_DIM], m["fc1_w"][Z_DIM:]

    # kernel 1: mapping MLP + synthesis input FC + both style affines
    x0, style1, style2 = pl.pallas_call(
        _mapping_kernel,
        out_shape=(jax.ShapeDtypeStruct((N, C0 * 4 * 4), jnp.float32),
                   jax.ShapeDtypeStruct((N, C0), jnp.float32),
                   jax.ShapeDtypeStruct((N, C0), jnp.float32)),
    )(z, c2,
      m["embed_w"], m["embed_b"].reshape(1, -1),
      fc1_wz, fc1_wc, m["fc1_b"].reshape(1, -1),
      m["fc2_w"], m["fc2_b"].reshape(1, -1),
      s["in_w"], s["in_b"].reshape(1, -1),
      s["b1"]["affine_w"], s["b1"]["affine_b"].reshape(1, -1),
      s["b2"]["affine_w"], s["b2"]["affine_b"].reshape(1, -1))

    # channel-major activations (C, N, H, W) from here on (lane-dense GEMM outputs)
    x = x0.reshape(N, C0, 4, 4).transpose(1, 0, 2, 3)          # (C0, N, 4, 4)
    x = _synth_block(x, style1, s["b1"], k1)                   # (C0, N, 8, 8)
    x = _synth_block(x, style2, s["b2"], k2)                   # (C0, N, 16, 16)
    img3 = _torgb_and_preprocess(x, s)                         # (3, N, 8, 8), VGG-normalized
    return _vgg_lpips_distance(img3, v)                        # scalar


# ------------------------------ parameter init -------------------------------


def init_params(key):
    ks = iter(jax.random.split(key, 32))

    def lin(fan_in, fan_out):
        w = jax.random.normal(next(ks), (fan_in, fan_out), jnp.float32) / math.sqrt(fan_in)
        return w, jnp.zeros((fan_out,), jnp.float32)

    def conv(cout, cin, kh, kw):
        w = jax.random.normal(next(ks), (cout, cin, kh, kw), jnp.float32) / math.sqrt(cin * kh * kw)
        return w, jnp.zeros((cout,), jnp.float32)

    m = {}
    m["embed_w"], m["embed_b"] = lin(C_DIM, W_DIM)
    m["fc1_w"], m["fc1_b"] = lin(Z_DIM + W_DIM, W_DIM)
    m["fc2_w"], m["fc2_b"] = lin(W_DIM, W_DIM)

    def block(cin, cout):
        b = {}
        b["affine_w"], b["affine_b"] = lin(W_DIM, cin)
        b["conv_w"], b["conv_b"] = conv(cout, cin, 3, 3)
        b["noise_strength"] = 0.1
        return b

    s = {}
    s["in_w"], s["in_b"] = lin(W_DIM, C0 * 4 * 4)
    s["b1"] = block(C0, C0)
    s["b2"] = block(C0, C0)
    s["torgb_w"], s["torgb_b"] = conv(IMG_CH, C0, 1, 1)

    v = {}
    v["c1_w"], v["c1_b"] = conv(8, 3, 3, 3)
    v["c2_w"], v["c2_b"] = conv(16, 8, 3, 3)
    v["lin1"] = jax.random.uniform(next(ks), (8,), jnp.float32, 0.1, 1.0)
    v["lin2"] = jax.random.uniform(next(ks), (16,), jnp.float32, 0.1, 1.0)

    return {"mapping": m, "synthesis": s, "vgg": v}


# ------------------------------------ main -----------------------------------

if __name__ == "__main__":
    key = jax.random.PRNGKey(0)
    kp, kc, kf = jax.random.split(key, 3)
    params = init_params(kp)
    c = jax.random.normal(kc, (B, C_DIM), jnp.float32)   # conditioning labels
    dist = lpips_distance_sampler_forward(params, c, kf)
    dist = jax.block_until_ready(dist)
    assert dist.shape == () and bool(jnp.isfinite(dist))
    print("KERNEL_OK")
</pallas_src>

<mosaic_0001>
module attributes {stable_mosaic.version = 11 : i64} {
  func.func @_mapping_kernel(%arg0: memref<4x32xf32, #tpu.memory_space<vmem>>, %arg1: memref<4x4xf32, #tpu.memory_space<vmem>>, %arg2: memref<4x32xf32, #tpu.memory_space<vmem>>, %arg3: memref<1x32xf32, #tpu.memory_space<vmem>>, %arg4: memref<32x32xf32, #tpu.memory_space<vmem>>, %arg5: memref<32x32xf32, #tpu.memory_space<vmem>>, %arg6: memref<1x32xf32, #tpu.memory_space<vmem>>, %arg7: memref<32x32xf32, #tpu.memory_space<vmem>>, %arg8: memref<1x32xf32, #tpu.memory_space<vmem>>, %arg9: memref<32x128xf32, #tpu.memory_space<vmem>>, %arg10: memref<1x128xf32, #tpu.memory_space<vmem>>, %arg11: memref<32x8xf32, #tpu.memory_space<vmem>>, %arg12: memref<1x8xf32, #tpu.memory_space<vmem>>, %arg13: memref<32x8xf32, #tpu.memory_space<vmem>>, %arg14: memref<1x8xf32, #tpu.memory_space<vmem>>, %arg15: memref<4x128xf32, #tpu.memory_space<vmem>>, %arg16: memref<4x8xf32, #tpu.memory_space<vmem>>, %arg17: memref<4x8xf32, #tpu.memory_space<vmem>>) attributes {dimension_semantics = [], scalar_prefetch = 0 : i64, scratch_operands = 0 : i64, tpu.core_type = #tpu.core_type<tc>} {
    %c0 = arith.constant 0 : index
    %c0_0 = arith.constant 0 : index
    %0 = vector.load %arg0[%c0, %c0_0] : memref<4x32xf32, #tpu.memory_space<vmem>>, vector<4x32xf32>
    %1 = arith.mulf %0, %0 : vector<4x32xf32>
    %cst = arith.constant dense<0.000000e+00> : vector<4xf32>
    %2 = vector.multi_reduction <add>, %1, %cst [1] : vector<4x32xf32> to vector<4xf32>
    %3 = vector.shape_cast %2 : vector<4xf32> to vector<4x1xf32>
    %cst_1 = arith.constant 3.200000e+01 : f32
    %4 = vector.broadcast %cst_1 : f32 to vector<4x1xf32>
    %5 = arith.divf %3, %4 : vector<4x1xf32>
    %cst_2 = arith.constant 9.99999993E-9 : f32
    %6 = vector.broadcast %cst_2 : f32 to vector<4x1xf32>
    %7 = arith.addf %5, %6 : vector<4x1xf32>
    %8 = math.rsqrt %7 : vector<4x1xf32>
    %9 = vector.broadcast %8 : vector<4x1xf32> to vector<4x32xf32>
    %10 = arith.mulf %0, %9 : vector<4x32xf32>
    %c0_3 = arith.constant 0 : index
    %c0_4 = arith.constant 0 : index
    %11 = vector.load %arg1[%c0_3, %c0_4] : memref<4x4xf32, #tpu.memory_space<vmem>>, vector<4x4xf32>
    %c0_5 = arith.constant 0 : index
    %c0_6 = arith.constant 0 : index
    %12 = vector.load %arg2[%c0_5, %c0_6] : memref<4x32xf32, #tpu.memory_space<vmem>>, vector<4x32xf32>
    %cst_7 = arith.constant dense<0.000000e+00> : vector<4x32xf32>
    %13 = tpu.matmul %11, %12, %cst_7 {dimension_numbers = #tpu.dot_dimension_numbers<[1], [0], [0], [1], [0, 0, 1, 1], [], []>} : vector<4x4xf32>, vector<4x32xf32>, vector<4x32xf32> -> vector<4x32xf32>
    %c0_8 = arith.constant 0 : index
    %c0_9 = arith.constant 0 : index
    %14 = vector.load %arg3[%c0_8, %c0_9] : memref<1x32xf32, #tpu.memory_space<vmem>>, vector<1x32xf32>
    %15 = vector.broadcast %14 : vector<1x32xf32> to vector<4x32xf32>
    %16 = arith.addf %13, %15 : vector<4x32xf32>
    %17 = arith.mulf %16, %16 : vector<4x32xf32>
    %cst_10 = arith.constant dense<0.000000e+00> : vector<4xf32>
    %18 = vector.multi_reduction <add>, %17, %cst_10 [1] : vector<4x32xf32> to vector<4xf32>
    %19 = vector.shape_cast %18 : vector<4xf32> to vector<4x1xf32>
    %cst_11 = arith.constant 3.200000e+01 : f32
    %20 = vector.broadcast %cst_11 : f32 to vector<4x1xf32>
    %21 = arith.divf %19, %20 : vector<4x1xf32>
    %cst_12 = arith.constant 9.99999993E-9 : f32
    %22 = vector.broadcast %cst_12 : f32 to vector<4x1xf32>
    %23 = arith.addf %21, %22 : vector<4x1xf32>
    %24 = math.rsqrt %23 : vector<4x1xf32>
    %25 = vector.broadcast %24 : vector<4x1xf32> to vector<4x32xf32>
    %26 = arith.mulf %16, %25 : vector<4x32xf32>
    %c0_13 = arith.constant 0 : index
    %c0_14 = arith.constant 0 : index
    %27 = vector.load %arg4[%c0_13, %c0_14] : memref<32x32xf32, #tpu.memory_space<vmem>>, vector<32x32xf32>
    %cst_15 = arith.constant dense<0.000000e+00> : vector<4x32xf32>
    %28 = tpu.matmul %10, %27, %cst_15 {dimension_numbers = #tpu.dot_dimension_numbers<[1], [0], [0], [1], [0, 0, 1, 1], [], []>} : vector<4x32xf32>, vector<32x32xf32>, vector<4x32xf32> -> vector<4x32xf32>
    %c0_16 = arith.constant 0 : index
    %c0_17 = arith.constant 0 : index
    %29 = vector.load %arg5[%c0_16, %c0_17] : memref<32x32xf32, #tpu.memory_space<vmem>>, vector<32x32xf32>
    %cst_18 = arith.constant dense<0.000000e+00> : vector<4x32xf32>
    %30 = tpu.matmul %26, %29, %cst_18 {dimension_numbers = #tpu.dot_dimension_numbers<[1], [0], [0], [1], [0, 0, 1, 1], [], []>} : vector<4x32xf32>, vector<32x32xf32>, vector<4x32xf32> -> vector<4x32xf32>
    %31 = arith.addf %28, %30 : vector<4x32xf32>
    %c0_19 = arith.constant 0 : index
    %c0_20 = arith.constant 0 : index
    %32 = vector.load %arg6[%c0_19, %c0_20] : memref<1x32xf32, #tpu.memory_space<vmem>>, vector<1x32xf32>
    %33 = vector.broadcast %32 : vector<1x32xf32> to vector<4x32xf32>
    %34 = arith.addf %31, %33 : vector<4x32xf32>
    %cst_21 = arith.constant 0.000000e+00 : f32
    %35 = vector.broadcast %cst_21 : f32 to vector<4x32xf32>
    %36 = arith.cmpf oge, %34, %35 : vector<4x32xf32>
    %cst_22 = arith.constant 2.000000e-01 : f32
    %37 = vector.broadcast %cst_22 : f32 to vector<4x32xf32>
    %38 = arith.mulf %37, %34 : vector<4x32xf32>
    %39 = arith.select %36, %34, %38 : vector<4x32xi1>, vector<4x32xf32>
    %cst_23 = arith.constant 1.41421354 : f32
    %40 = vector.broadcast %cst_23 : f32 to vector<4x32xf32>
    %41 = arith.mulf %39, %40 : vector<4x32xf32>
    %c0_24 = arith.constant 0 : index
    %c0_25 = arith.constant 0 : index
    %42 = vector.load %arg7[%c0_24, %c0_25] : memref<32x32xf32, #tpu.memory_space<vmem>>, vector<32x32xf32>
    %cst_26 = arith.constant dense<0.000000e+00> : vector<4x32xf32>
    %43 = tpu.matmul %41, %42, %cst_26 {dimension_numbers = #tpu.dot_dimension_numbers<[1], [0], [0], [1], [0, 0, 1, 1], [], []>} : vector<4x32xf32>, vector<32x32xf32>, vector<4x32xf32> -> vector<4x32xf32>
    %c0_27 = arith.constant 0 : index
    %c0_28 = arith.constant 0 : index
    %44 = vector.load %arg8[%c0_27, %c0_28] : memref<1x32xf32, #tpu.memory_space<vmem>>, vector<1x32xf32>
    %45 = vector.broadcast %44 : vector<1x32xf32> to vector<4x32xf32>
    %46 = arith.addf %43, %45 : vector<4x32xf32>
    %cst_29 = arith.constant 0.000000e+00 : f32
    %47 = vector.broadcast %cst_29 : f32 to vector<4x32xf32>
    %48 = arith.cmpf oge, %46, %47 : vector<4x32xf32>
    %cst_30 = arith.constant 2.000000e-01 : f32
    %49 = vector.broadcast %cst_30 : f32 to vector<4x32xf32>
    %50 = arith.mulf %49, %46 : vector<4x32xf32>
    %51 = arith.select %48, %46, %50 : vector<4x32xi1>, vector<4x32xf32>
    %cst_31 = arith.constant 1.41421354 : f32
    %52 = vector.broadcast %cst_31 : f32 to vector<4x32xf32>
    %53 = arith.mulf %51, %52 : vector<4x32xf32>
    %c0_32 = arith.constant 0 : index
    %c0_33 = arith.constant 0 : index
    %54 = vector.load %arg9[%c0_32, %c0_33] : memref<32x128xf32, #tpu.memory_space<vmem>>, vector<32x128xf32>
    %cst_34 = arith.constant dense<0.000000e+00> : vector<4x128xf32>
    %55 = tpu.matmul %53, %54, %cst_34 {dimension_numbers = #tpu.dot_dimension_numbers<[1], [0], [0], [1], [0, 0, 1, 1], [], []>} : vector<4x32xf32>, vector<32x128xf32>, vector<4x128xf32> -> vector<4x128xf32>
    %c0_35 = arith.constant 0 : index
    %c0_36 = arith.constant 0 : index
    %56 = vector.load %arg10[%c0_35, %c0_36] : memref<1x128xf32, #tpu.memory_space<vmem>>, vector<1x128xf32>
    %57 = vector.broadcast %56 : vector<1x128xf32> to vector<4x128xf32>
    %58 = arith.addf %55, %57 : vector<4x128xf32>
    %cst_37 = arith.constant 0.000000e+00 : f32
    %59 = vector.broadcast %cst_37 : f32 to vector<4x128xf32>
    %60 = arith.cmpf oge, %58, %59 : vector<4x128xf32>
    %cst_38 = arith.constant 2.000000e-01 : f32
    %61 = vector.broadcast %cst_38 : f32 to vector<4x128xf32>
    %62 = arith.mulf %61, %58 : vector<4x128xf32>
    %63 = arith.select %60, %58, %62 : vector<4x128xi1>, vector<4x128xf32>
    %cst_39 = arith.constant 1.41421354 : f32
    %64 = vector.broadcast %cst_39 : f32 to vector<4x128xf32>
    %65 = arith.mulf %63, %64 : vector<4x128xf32>
    %c0_40 = arith.constant 0 : index
    %c0_41 = arith.constant 0 : index
    %66 = vector.load %arg15[%c0_40, %c0_41] : memref<4x128xf32, #tpu.memory_space<vmem>>, vector<4x128xf32>
    tpu.vector_store %arg15[%c0_40, %c0_41], %65 {strides = array<i32>} : memref<4x128xf32, #tpu.memory_space<vmem>>, vector<4x128xf32>,
    %c0_42 = arith.constant 0 : index
    %c0_43 = arith.constant 0 : index
    %67 = vector.load %arg11[%c0_42, %c0_43] : memref<32x8xf32, #tpu.memory_space<vmem>>, vector<32x8xf32>
    %cst_44 = arith.constant dense<0.000000e+00> : vector<4x8xf32>
    %68 = tpu.matmul %53, %67, %cst_44 {dimension_numbers = #tpu.dot_dimension_numbers<[1], [0], [0], [1], [0, 0, 1, 1], [], []>} : vector<4x32xf32>, vector<32x8xf32>, vector<4x8xf32> -> vector<4x8xf32>
    %c0_45 = arith.constant 0 : index
    %c0_46 = arith.constant 0 : index
    %69 = vector.load %arg12[%c0_45, %c0_46] : memref<1x8xf32, #tpu.memory_space<vmem>>, vector<1x8xf32>
    %70 = vector.broadcast %69 : vector<1x8xf32> to vector<4x8xf32>
    %71 = arith.addf %68, %70 : vector<4x8xf32>
    %cst_47 = arith.constant 1.000000e+00 : f32
    %72 = vector.broadcast %cst_47 : f32 to vector<4x8xf32>
    %73 = arith.addf %71, %72 : vector<4x8xf32>
    %c0_48 = arith.constant 0 : index
    %c0_49 = arith.constant 0 : index
    %74 = vector.load %arg16[%c0_48, %c0_49] : memref<4x8xf32, #tpu.memory_space<vmem>>, vector<4x8xf32>
    tpu.vector_store %arg16[%c0_48, %c0_49], %73 {strides = array<i32>} : memref<4x8xf32, #tpu.memory_space<vmem>>, vector<4x8xf32>,
    %c0_50 = arith.constant 0 : index
    %c0_51 = arith.constant 0 : index
    %75 = vector.load %arg13[%c0_50, %c0_51] : memref<32x8xf32, #tpu.memory_space<vmem>>, vector<32x8xf32>
    %cst_52 = arith.constant dense<0.000000e+00> : vector<4x8xf32>
    %76 = tpu.matmul %53, %75, %cst_52 {dimension_numbers = #tpu.dot_dimension_numbers<[1], [0], [0], [1], [0, 0, 1, 1], [], []>} : vector<4x32xf32>, vector<32x8xf32>, vector<4x8xf32> -> vector<4x8xf32>
    %c0_53 = arith.constant 0 : index
    %c0_54 = arith.constant 0 : index
    %77 = vector.load %arg14[%c0_53, %c0_54] : memref<1x8xf32, #tpu.memory_space<vmem>>, vector<1x8xf32>
    %78 = vector.broadcast %77 : vector<1x8xf32> to vector<4x8xf32>
    %79 = arith.addf %76, %78 : vector<4x8xf32>
    %cst_55 = arith.constant 1.000000e+00 : f32
    %80 = vector.broadcast %cst_55 : f32 to vector<4x8xf32>
    %81 = arith.addf %79, %80 : vector<4x8xf32>
    %c0_56 = arith.constant 0 : index
    %c0_57 = arith.constant 0 : index
    %82 = vector.load %arg17[%c0_56, %c0_57] : memref<4x8xf32, #tpu.memory_space<vmem>>, vector<4x8xf32>
    tpu.vector_store %arg17[%c0_56, %c0_57], %81 {strides = array<i32>} : memref<4x8xf32, #tpu.memory_space<vmem>>, vector<4x8xf32>,
    return
  }
}

module attributes {stable_mosaic.version = 11 : i64} {
  func.func @_conv_noise_lrelu_kernel(%arg0: i32, %arg1: memref<72x128xbf16, #tpu.memory_space<vmem>>, %arg2: memref<8x72xbf16, #tpu.memory_space<vmem>>, %arg3: memref<8x1xf32, #tpu.memory_space<vmem>>, %arg4: memref<1x128xf32, #tpu.memory_space<vmem>>, %arg5: memref<8x128xf32, #tpu.memory_space<vmem>>) attributes {dimension_semantics = [#tpu.dimension_semantics<parallel>], iteration_bounds = array<i64: 2>, scalar_prefetch = 0 : i64, scratch_operands = 0 : i64, tpu.core_type = #tpu.core_type<tc>, window_params = [{transform_indices = @transform_0, window_bounds = array<i64: 72, 128>}, {pipeline_mode = #tpu.pipeline_mode<synchronous>, transform_indices = @transform_1, window_bounds = array<i64: 8, 72>}, {pipeline_mode = #tpu.pipeline_mode<synchronous>, transform_indices = @transform_2, window_bounds = array<i64: 8, 1>}, {transform_indices = @transform_3, window_bounds = array<i64: 1, 128>}, {transform_indices = @transform_4, window_bounds = array<i64: 8, 128>}]} {
    %c0 = arith.constant 0 : index
    %c0_0 = arith.constant 0 : index
    %0 = vector.load %arg2[%c0, %c0_0] : memref<8x72xbf16, #tpu.memory_space<vmem>>, vector<8x72xbf16>
    %c0_1 = arith.constant 0 : index
    %c0_2 = arith.constant 0 : index
    %1 = vector.load %arg1[%c0_1, %c0_2] : memref<72x128xbf16, #tpu.memory_space<vmem>>, vector<72x128xbf16>
    %cst = arith.constant dense<0.000000e+00> : vector<8x128xf32>
    %2 = tpu.matmul %0, %1, %cst {dimension_numbers = #tpu.dot_dimension_numbers<[1], [0], [0], [1], [0, 0, 1, 1], [], []>} : vector<8x72xbf16>, vector<72x128xbf16>, vector<8x128xf32> -> vector<8x128xf32>
    %c0_3 = arith.constant 0 : index
    %c0_4 = arith.constant 0 : index
    %3 = vector.load %arg3[%c0_3, %c0_4] : memref<8x1xf32, #tpu.memory_space<vmem>>, vector<8x1xf32>
    %4 = vector.broadcast %3 : vector<8x1xf32> to vector<8x128xf32>
    %5 = arith.addf %2, %4 : vector<8x128xf32>
    %c0_5 = arith.constant 0 : index
    %c0_6 = arith.constant 0 : index
    %6 = vector.load %arg4[%c0_5, %c0_6] : memref<1x128xf32, #tpu.memory_space<vmem>>, vector<1x128xf32>
    %7 = vector.broadcast %6 : vector<1x128xf32> to vector<8x128xf32>
    %8 = arith.addf %5, %7 : vector<8x128xf32>
    %cst_7 = arith.constant 0.000000e+00 : f32
    %9 = vector.broadcast %cst_7 : f32 to vector<8x128xf32>
    %10 = arith.cmpf oge, %8, %9 : vector<8x128xf32>
    %cst_8 = arith.constant 2.000000e-01 : f32
    %11 = vector.broadcast %cst_8 : f32 to vector<8x128xf32>
    %12 = arith.mulf %11, %8 : vector<8x128xf32>
    %13 = arith.select %10, %8, %12 : vector<8x128xi1>, vector<8x128xf32>
    %cst_9 = arith.constant 1.41421354 : f32
    %14 = vector.broadcast %cst_9 : f32 to vector<8x128xf32>
    %15 = arith.mulf %13, %14 : vector<8x128xf32>
    %c0_10 = arith.constant 0 : index
    %c0_11 = arith.constant 0 : index
    %16 = vector.load %arg5[%c0_10, %c0_11] : memref<8x128xf32, #tpu.memory_space<vmem>>, vector<8x128xf32>
    tpu.vector_store %arg5[%c0_10, %c0_11], %15 {strides = array<i32>} : memref<8x128xf32, #tpu.memory_space<vmem>>, vector<8x128xf32>,
    return
  }
  func.func @transform_0(%arg0: i32) -> (i32, i32) {
    %c0_i32 = arith.constant 0 : i32
    %c0_i32_0 = arith.constant 0 : i32
    return %c0_i32, %arg0 : i32, i32
  }
  func.func @transform_1(%arg0: i32) -> (i32, i32) {
    %c0_i32 = arith.constant 0 : i32
    %c0_i32_0 = arith.constant 0 : i32
    %c0_i32_1 = arith.constant 0 : i32
    return %c0_i32, %c0_i32_0 : i32, i32
  }
  func.func @transform_2(%arg0: i32) -> (i32, i32) {
    %c0_i32 = arith.constant 0 : i32
    %c0_i32_0 = arith.constant 0 : i32
    %c0_i32_1 = arith.constant 0 : i32
    return %c0_i32, %c0_i32_0 : i32, i32
  }
  func.func @transform_3(%arg0: i32) -> (i32, i32) {
    %c0_i32 = arith.constant 0 : i32
    %c0_i32_0 = arith.constant 0 : i32
    return %c0_i32, %arg0 : i32, i32
  }
  func.func @transform_4(%arg0: i32) -> (i32, i32) {
    %c0_i32 = arith.constant 0 : i32
    %c0_i32_0 = arith.constant 0 : i32
    return %c0_i32, %arg0 : i32, i32
  }
}

module attributes {stable_mosaic.version = 11 : i64} {
  func.func @_conv_noise_lrelu_kernel(%arg0: i32, %arg1: memref<72x512xbf16, #tpu.memory_space<vmem>>, %arg2: memref<8x72xbf16, #tpu.memory_space<vmem>>, %arg3: memref<8x1xf32, #tpu.memory_space<vmem>>, %arg4: memref<1x512xf32, #tpu.memory_space<vmem>>, %arg5: memref<8x512xf32, #tpu.memory_space<vmem>>) attributes {dimension_semantics = [#tpu.dimension_semantics<parallel>], iteration_bounds = array<i64: 2>, scalar_prefetch = 0 : i64, scratch_operands = 0 : i64, tpu.core_type = #tpu.core_type<tc>, window_params = [{transform_indices = @transform_0, window_bounds = array<i64: 72, 512>}, {pipeline_mode = #tpu.pipeline_mode<synchronous>, transform_indices = @transform_1, window_bounds = array<i64: 8, 72>}, {pipeline_mode = #tpu.pipeline_mode<synchronous>, transform_indices = @transform_2, window_bounds = array<i64: 8, 1>}, {transform_indices = @transform_3, window_bounds = array<i64: 1, 512>}, {transform_indices = @transform_4, window_bounds = array<i64: 8, 512>}]} {
    %c0 = arith.constant 0 : index
    %c0_0 = arith.constant 0 : index
    %0 = vector.load %arg2[%c0, %c0_0] : memref<8x72xbf16, #tpu.memory_space<vmem>>, vector<8x72xbf16>
    %c0_1 = arith.constant 0 : index
    %c0_2 = arith.constant 0 : index
    %1 = vector.load %arg1[%c0_1, %c0_2] : memref<72x512xbf16, #tpu.memory_space<vmem>>, vector<72x512xbf16>
    %cst = arith.constant dense<0.000000e+00> : vector<8x512xf32>
    %2 = tpu.matmul %0, %1, %cst {dimension_numbers = #tpu.dot_dimension_numbers<[1], [0], [0], [1], [0, 0, 1, 1], [], []>} : vector<8x72xbf16>, vector<72x512xbf16>, vector<8x512xf32> -> vector<8x512xf32>
    %c0_3 = arith.constant 0 : index
    %c0_4 = arith.constant 0 : index
    %3 = vector.load %arg3[%c0_3, %c0_4] : memref<8x1xf32, #tpu.memory_space<vmem>>, vector<8x1xf32>
    %4 = vector.broadcast %3 : vector<8x1xf32> to vector<8x512xf32>
    %5 = arith.addf %2, %4 : vector<8x512xf32>
    %c0_5 = arith.constant 0 : index
    %c0_6 = arith.constant 0 : index
    %6 = vector.load %arg4[%c0_5, %c0_6] : memref<1x512xf32, #tpu.memory_space<vmem>>, vector<1x512xf32>
    %7 = vector.broadcast %6 : vector<1x512xf32> to vector<8x512xf32>
    %8 = arith.addf %5, %7 : vector<8x512xf32>
    %cst_7 = arith.constant 0.000000e+00 : f32
    %9 = vector.broadcast %cst_7 : f32 to vector<8x512xf32>
    %10 = arith.cmpf oge, %8, %9 : vector<8x512xf32>
    %cst_8 = arith.constant 2.000000e-01 : f32
    %11 = vector.broadcast %cst_8 : f32 to vector<8x512xf32>
    %12 = arith.mulf %11, %8 : vector<8x512xf32>
    %13 = arith.select %10, %8, %12 : vector<8x512xi1>, vector<8x512xf32>
    %cst_9 = arith.constant 1.41421354 : f32
    %14 = vector.broadcast %cst_9 : f32 to vector<8x512xf32>
    %15 = arith.mulf %13, %14 : vector<8x512xf32>
    %c0_10 = arith.constant 0 : index
    %c0_11 = arith.constant 0 : index
    %16 = vector.load %arg5[%c0_10, %c0_11] : memref<8x512xf32, #tpu.memory_space<vmem>>, vector<8x512xf32>
    tpu.vector_store %arg5[%c0_10, %c0_11], %15 {strides = array<i32>} : memref<8x512xf32, #tpu.memory_space<vmem>>, vector<8x512xf32>,
    return
  }
  func.func @transform_0(%arg0: i32) -> (i32, i32) {
    %c0_i32 = arith.constant 0 : i32
    %c0_i32_0 = arith.constant 0 : i32
    return %c0_i32, %arg0 : i32, i32
  }
  func.func @transform_1(%arg0: i32) -> (i32, i32) {
    %c0_i32 = arith.constant 0 : i32
    %c0_i32_0 = arith.constant 0 : i32
    %c0_i32_1 = arith.constant 0 : i32
    return %c0_i32, %c0_i32_0 : i32, i32
  }
  func.func @transform_2(%arg0: i32) -> (i32, i32) {
    %c0_i32 = arith.constant 0 : i32
    %c0_i32_0 = arith.constant 0 : i32
    %c0_i32_1 = arith.constant 0 : i32
    return %c0_i32, %c0_i32_0 : i32, i32
  }
  func.func @transform_3(%arg0: i32) -> (i32, i32) {
    %c0_i32 = arith.constant 0 : i32
    %c0_i32_0 = arith.constant 0 : i32
    return %c0_i32, %arg0 : i32, i32
  }
  func.func @transform_4(%arg0: i32) -> (i32, i32) {
    %c0_i32 = arith.constant 0 : i32
    %c0_i32_0 = arith.constant 0 : i32
    return %c0_i32, %arg0 : i32, i32
  }
}

module attributes {stable_mosaic.version = 11 : i64} {
  func.func @_torgb_prep_kernel(%arg0: i32, %arg1: memref<8x128xbf16, #tpu.memory_space<vmem>>, %arg2: memref<1x8xbf16, #tpu.memory_space<vmem>>, %arg3: memref<1x1xf32, #tpu.memory_space<vmem>>, %arg4: memref<3x1xf32, #tpu.memory_space<vmem>>, %arg5: memref<3x1xf32, #tpu.memory_space<vmem>>, %arg6: memref<3x128xf32, #tpu.memory_space<vmem>>) attributes {dimension_semantics = [#tpu.dimension_semantics<parallel>], iteration_bounds = array<i64: 2>, scalar_prefetch = 0 : i64, scratch_operands = 0 : i64, tpu.core_type = #tpu.core_type<tc>, window_params = [{transform_indices = @transform_0, window_bounds = array<i64: 8, 128>}, {pipeline_mode = #tpu.pipeline_mode<synchronous>, transform_indices = @transform_1, window_bounds = array<i64: 1, 8>}, {pipeline_mode = #tpu.pipeline_mode<synchronous>, transform_indices = @transform_2, window_bounds = array<i64: 1, 1>}, {pipeline_mode = #tpu.pipeline_mode<synchronous>, transform_indices = @transform_3, window_bounds = array<i64: 3, 1>}, {pipeline_mode = #tpu.pipeline_mode<synchronous>, transform_indices = @transform_4, window_bounds = array<i64: 3, 1>}, {transform_indices = @transform_5, window_bounds = array<i64: 3, 128>}]} {
    %c0 = arith.constant 0 : index
    %c0_0 = arith.constant 0 : index
    %0 = vector.load %arg2[%c0, %c0_0] : memref<1x8xbf16, #tpu.memory_space<vmem>>, vector<1x8xbf16>
    %c0_1 = arith.constant 0 : index
    %c0_2 = arith.constant 0 : index
    %1 = vector.load %arg1[%c0_1, %c0_2] : memref<8x128xbf16, #tpu.memory_space<vmem>>, vector<8x128xbf16>
    %cst = arith.constant dense<0.000000e+00> : vector<1x128xf32>
    %2 = tpu.matmul %0, %1, %cst {dimension_numbers = #tpu.dot_dimension_numbers<[1], [0], [0], [1], [0, 0, 1, 1], [], []>} : vector<1x8xbf16>, vector<8x128xbf16>, vector<1x128xf32> -> vector<1x128xf32>
    %c0_3 = arith.constant 0 : index
    %c0_4 = arith.constant 0 : index
    %3 = vector.load %arg3[%c0_3, %c0_4] : memref<1x1xf32, #tpu.memory_space<vmem>>, vector<1x1xf32>
    %4 = vector.broadcast %3 : vector<1x1xf32> to vector<1x128xf32>
    %5 = arith.addf %2, %4 : vector<1x128xf32>
    %cst_5 = arith.constant 1.000000e+00 : f32
    %6 = vector.broadcast %cst_5 : f32 to vector<1x128xf32>
    %7 = arith.addf %5, %6 : vector<1x128xf32>
    %cst_6 = arith.constant 1.275000e+02 : f32
    %8 = vector.broadcast %cst_6 : f32 to vector<1x128xf32>
    %9 = arith.mulf %7, %8 : vector<1x128xf32>
    %cst_7 = arith.constant 0.000000e+00 : f32
    %cst_8 = arith.constant 2.550000e+02 : f32
    %10 = vector.broadcast %cst_7 : f32 to vector<1x128xf32>
    %11 = arith.maximumf %10, %9 : vector<1x128xf32>
    %12 = vector.broadcast %cst_8 : f32 to vector<1x128xf32>
    %13 = arith.minimumf %12, %11 : vector<1x128xf32>
    %c0_9 = arith.constant 0 : index
    %c0_10 = arith.constant 0 : index
    %14 = vector.load %arg4[%c0_9, %c0_10] : memref<3x1xf32, #tpu.memory_space<vmem>>, vector<3x1xf32>
    %15 = vector.broadcast %13 : vector<1x128xf32> to vector<3x128xf32>
    %16 = vector.broadcast %14 : vector<3x1xf32> to vector<3x128xf32>
    %17 = arith.subf %15, %16 : vector<3x128xf32>
    %c0_11 = arith.constant 0 : index
    %c0_12 = arith.constant 0 : index
    %18 = vector.load %arg5[%c0_11, %c0_12] : memref<3x1xf32, #tpu.memory_space<vmem>>, vector<3x1xf32>
    %19 = vector.broadcast %18 : vector<3x1xf32> to vector<3x128xf32>
    %20 = arith.mulf %17, %19 : vector<3x128xf32>
    %c0_13 = arith.constant 0 : index
    %c0_14 = arith.constant 0 : index
    %21 = vector.load %arg6[%c0_13, %c0_14] : memref<3x128xf32, #tpu.memory_space<vmem>>, vector<3x128xf32>
    tpu.vector_store %arg6[%c0_13, %c0_14], %20 {strides = array<i32>} : memref<3x128xf32, #tpu.memory_space<vmem>>, vector<3x128xf32>,
    return
  }
  func.func @transform_0(%arg0: i32) -> (i32, i32) {
    %c0_i32 = arith.constant 0 : i32
    %c0_i32_0 = arith.constant 0 : i32
    return %c0_i32, %arg0 : i32, i32
  }
  func.func @transform_1(%arg0: i32) -> (i32, i32) {
    %c0_i32 = arith.constant 0 : i32
    %c0_i32_0 = arith.constant 0 : i32
    %c0_i32_1 = arith.constant 0 : i32
    return %c0_i32, %c0_i32_0 : i32, i32
  }
  func.func @transform_2(%arg0: i32) -> (i32, i32) {
    %c0_i32 = arith.constant 0 : i32
    %c0_i32_0 = arith.constant 0 : i32
    %c0_i32_1 = arith.constant 0 : i32
    return %c0_i32, %c0_i32_0 : i32, i32
  }
  func.func @transform_3(%arg0: i32) -> (i32, i32) {
    %c0_i32 = arith.constant 0 : i32
    %c0_i32_0 = arith.constant 0 : i32
    %c0_i32_1 = arith.constant 0 : i32
    return %c0_i32, %c0_i32_0 : i32, i32
  }
  func.func @transform_4(%arg0: i32) -> (i32, i32) {
    %c0_i32 = arith.constant 0 : i32
    %c0_i32_0 = arith.constant 0 : i32
    %c0_i32_1 = arith.constant 0 : i32
    return %c0_i32, %c0_i32_0 : i32, i32
  }
  func.func @transform_5(%arg0: i32) -> (i32, i32) {
    %c0_i32 = arith.constant 0 : i32
    %c0_i32_0 = arith.constant 0 : i32
    return %c0_i32, %arg0 : i32, i32
  }
}

module attributes {stable_mosaic.version = 11 : i64} {
  func.func @_conv_relu_kernel(%arg0: i32, %arg1: memref<27x128xbf16, #tpu.memory_space<vmem>>, %arg2: memref<8x27xbf16, #tpu.memory_space<vmem>>, %arg3: memref<8x1xf32, #tpu.memory_space<vmem>>, %arg4: memref<8x128xf32, #tpu.memory_space<vmem>>) attributes {dimension_semantics = [#tpu.dimension_semantics<parallel>], iteration_bounds = array<i64: 2>, scalar_prefetch = 0 : i64, scratch_operands = 0 : i64, tpu.core_type = #tpu.core_type<tc>, window_params = [{transform_indices = @transform_0, window_bounds = array<i64: 27, 128>}, {pipeline_mode = #tpu.pipeline_mode<synchronous>, transform_indices = @transform_1, window_bounds = array<i64: 8, 27>}, {pipeline_mode = #tpu.pipeline_mode<synchronous>, transform_indices = @transform_2, window_bounds = array<i64: 8, 1>}, {transform_indices = @transform_3, window_bounds = array<i64: 8, 128>}]} {
    %c0 = arith.constant 0 : index
    %c0_0 = arith.constant 0 : index
    %0 = vector.load %arg2[%c0, %c0_0] : memref<8x27xbf16, #tpu.memory_space<vmem>>, vector<8x27xbf16>
    %c0_1 = arith.constant 0 : index
    %c0_2 = arith.constant 0 : index
    %1 = vector.load %arg1[%c0_1, %c0_2] : memref<27x128xbf16, #tpu.memory_space<vmem>>, vector<27x128xbf16>
    %cst = arith.constant dense<0.000000e+00> : vector<8x128xf32>
    %2 = tpu.matmul %0, %1, %cst {dimension_numbers = #tpu.dot_dimension_numbers<[1], [0], [0], [1], [0, 0, 1, 1], [], []>} : vector<8x27xbf16>, vector<27x128xbf16>, vector<8x128xf32> -> vector<8x128xf32>
    %c0_3 = arith.constant 0 : index
    %c0_4 = arith.constant 0 : index
    %3 = vector.load %arg3[%c0_3, %c0_4] : memref<8x1xf32, #tpu.memory_space<vmem>>, vector<8x1xf32>
    %4 = vector.broadcast %3 : vector<8x1xf32> to vector<8x128xf32>
    %5 = arith.addf %2, %4 : vector<8x128xf32>
    %cst_5 = arith.constant 0.000000e+00 : f32
    %6 = vector.broadcast %cst_5 : f32 to vector<8x128xf32>
    %7 = arith.maximumf %5, %6 : vector<8x128xf32>
    %c0_6 = arith.constant 0 : index
    %c0_7 = arith.constant 0 : index
    %8 = vector.load %arg4[%c0_6, %c0_7] : memref<8x128xf32, #tpu.memory_space<vmem>>, vector<8x128xf32>
    tpu.vector_store %arg4[%c0_6, %c0_7], %7 {strides = array<i32>} : memref<8x128xf32, #tpu.memory_space<vmem>>, vector<8x128xf32>,
    return
  }
  func.func @transform_0(%arg0: i32) -> (i32, i32) {
    %c0_i32 = arith.constant 0 : i32
    %c0_i32_0 = arith.constant 0 : i32
    return %c0_i32, %arg0 : i32, i32
  }
  func.func @transform_1(%arg0: i32) -> (i32, i32) {
    %c0_i32 = arith.constant 0 : i32
    %c0_i32_0 = arith.constant 0 : i32
    %c0_i32_1 = arith.constant 0 : i32
    return %c0_i32, %c0_i32_0 : i32, i32
  }
  func.func @transform_2(%arg0: i32) -> (i32, i32) {
    %c0_i32 = arith.constant 0 : i32
    %c0_i32_0 = arith.constant 0 : i32
    %c0_i32_1 = arith.constant 0 : i32
    return %c0_i32, %c0_i32_0 : i32, i32
  }
  func.func @transform_3(%arg0: i32) -> (i32, i32) {
    %c0_i32 = arith.constant 0 : i32
    %c0_i32_0 = arith.constant 0 : i32
    return %c0_i32, %arg0 : i32, i32
  }
}

module attributes {stable_mosaic.version = 11 : i64} {
  func.func @_conv_relu_kernel(%arg0: i32, %arg1: memref<72x64xbf16, #tpu.memory_space<vmem>>, %arg2: memref<16x72xbf16, #tpu.memory_space<vmem>>, %arg3: memref<16x1xf32, #tpu.memory_space<vmem>>, %arg4: memref<16x64xf32, #tpu.memory_space<vmem>>) attributes {dimension_semantics = [#tpu.dimension_semantics<parallel>], iteration_bounds = array<i64: 1>, scalar_prefetch = 0 : i64, scratch_operands = 0 : i64, tpu.core_type = #tpu.core_type<tc>, window_params = [{transform_indices = @transform_0, window_bounds = array<i64: 72, 64>}, {pipeline_mode = #tpu.pipeline_mode<synchronous>, transform_indices = @transform_1, window_bounds = array<i64: 16, 72>}, {pipeline_mode = #tpu.pipeline_mode<synchronous>, transform_indices = @transform_2, window_bounds = array<i64: 16, 1>}, {transform_indices = @transform_3, window_bounds = array<i64: 16, 64>}]} {
    %c0 = arith.constant 0 : index
    %c0_0 = arith.constant 0 : index
    %0 = vector.load %arg2[%c0, %c0_0] : memref<16x72xbf16, #tpu.memory_space<vmem>>, vector<16x72xbf16>
    %c0_1 = arith.constant 0 : index
    %c0_2 = arith.constant 0 : index
    %1 = vector.load %arg1[%c0_1, %c0_2] : memref<72x64xbf16, #tpu.memory_space<vmem>>, vector<72x64xbf16>
    %cst = arith.constant dense<0.000000e+00> : vector<16x64xf32>
    %2 = tpu.matmul %0, %1, %cst {dimension_numbers = #tpu.dot_dimension_numbers<[1], [0], [0], [1], [0, 0, 1, 1], [], []>} : vector<16x72xbf16>, vector<72x64xbf16>, vector<16x64xf32> -> vector<16x64xf32>
    %c0_3 = arith.constant 0 : index
    %c0_4 = arith.constant 0 : index
    %3 = vector.load %arg3[%c0_3, %c0_4] : memref<16x1xf32, #tpu.memory_space<vmem>>, vector<16x1xf32>
    %4 = vector.broadcast %3 : vector<16x1xf32> to vector<16x64xf32>
    %5 = arith.addf %2, %4 : vector<16x64xf32>
    %cst_5 = arith.constant 0.000000e+00 : f32
    %6 = vector.broadcast %cst_5 : f32 to vector<16x64xf32>
    %7 = arith.maximumf %5, %6 : vector<16x64xf32>
    %c0_6 = arith.constant 0 : index
    %c0_7 = arith.constant 0 : index
    %8 = vector.load %arg4[%c0_6, %c0_7] : memref<16x64xf32, #tpu.memory_space<vmem>>, vector<16x64xf32>
    tpu.vector_store %arg4[%c0_6, %c0_7], %7 {strides = array<i32>} : memref<16x64xf32, #tpu.memory_space<vmem>>, vector<16x64xf32>,
    return
  }
  func.func @transform_0(%arg0: i32) -> (i32, i32) {
    %c0_i32 = arith.constant 0 : i32
    %c0_i32_0 = arith.constant 0 : i32
    return %c0_i32, %arg0 : i32, i32
  }
  func.func @transform_1(%arg0: i32) -> (i32, i32) {
    %c0_i32 = arith.constant 0 : i32
    %c0_i32_0 = arith.constant 0 : i32
    %c0_i32_1 = arith.constant 0 : i32
    return %c0_i32, %c0_i32_0 : i32, i32
  }
  func.func @transform_2(%arg0: i32) -> (i32, i32) {
    %c0_i32 = arith.constant 0 : i32
    %c0_i32_0 = arith.constant 0 : i32
    %c0_i32_1 = arith.constant 0 : i32
    return %c0_i32, %c0_i32_0 : i32, i32
  }
  func.func @transform_3(%arg0: i32) -> (i32, i32) {
    %c0_i32 = arith.constant 0 : i32
    %c0_i32_0 = arith.constant 0 : i32
    return %c0_i32, %arg0 : i32, i32
  }
}

module attributes {stable_mosaic.version = 11 : i64} {
  func.func @_lpips_dist_kernel(%arg0: memref<8x128xf32, #tpu.memory_space<vmem>>, %arg1: memref<8x128xf32, #tpu.memory_space<vmem>>, %arg2: memref<8x1xf32, #tpu.memory_space<vmem>>, %arg3: memref<16x32xf32, #tpu.memory_space<vmem>>, %arg4: memref<16x32xf32, #tpu.memory_space<vmem>>, %arg5: memref<16x1xf32, #tpu.memory_space<vmem>>, %arg6: memref<1x1xf32, #tpu.memory_space<vmem>>) attributes {dimension_semantics = [], scalar_prefetch = 0 : i64, scratch_operands = 0 : i64, tpu.core_type = #tpu.core_type<tc>} {
    %c0 = arith.constant 0 : index
    %c0_0 = arith.constant 0 : index
    %0 = vector.load %arg0[%c0, %c0_0] : memref<8x128xf32, #tpu.memory_space<vmem>>, vector<8x128xf32>
    %c0_1 = arith.constant 0 : index
    %c0_2 = arith.constant 0 : index
    %1 = vector.load %arg1[%c0_1, %c0_2] : memref<8x128xf32, #tpu.memory_space<vmem>>, vector<8x128xf32>
    %c0_3 = arith.constant 0 : index
    %c0_4 = arith.constant 0 : index
    %2 = vector.load %arg2[%c0_3, %c0_4] : memref<8x1xf32, #tpu.memory_space<vmem>>, vector<8x1xf32>
    %3 = arith.mulf %0, %0 : vector<8x128xf32>
    %cst = arith.constant dense<0.000000e+00> : vector<128xf32>
    %4 = vector.multi_reduction <add>, %3, %cst [0] : vector<8x128xf32> to vector<128xf32>
    %5 = vector.shape_cast %4 : vector<128xf32> to vector<1x128xf32>
    %cst_5 = arith.constant 1.000000e-10 : f32
    %6 = vector.broadcast %cst_5 : f32 to vector<1x128xf32>
    %7 = arith.addf %5, %6 : vector<1x128xf32>
    %8 = math.rsqrt %7 : vector<1x128xf32>
    %9 = vector.broadcast %8 : vector<1x128xf32> to vector<8x128xf32>
    %10 = arith.mulf %0, %9 : vector<8x128xf32>
    %11 = arith.mulf %1, %1 : vector<8x128xf32>
    %cst_6 = arith.constant dense<0.000000e+00> : vector<128xf32>
    %12 = vector.multi_reduction <add>, %11, %cst_6 [0] : vector<8x128xf32> to vector<128xf32>
    %13 = vector.shape_cast %12 : vector<128xf32> to vector<1x128xf32>
    %cst_7 = arith.constant 1.000000e-10 : f32
    %14 = vector.broadcast %cst_7 : f32 to vector<1x128xf32>
    %15 = arith.addf %13, %14 : vector<1x128xf32>
    %16 = math.rsqrt %15 : vector<1x128xf32>
    %17 = vector.broadcast %16 : vector<1x128xf32> to vector<8x128xf32>
    %18 = arith.mulf %1, %17 : vector<8x128xf32>
    %19 = arith.subf %10, %18 : vector<8x128xf32>
    %20 = vector.broadcast %2 : vector<8x1xf32> to vector<8x128xf32>
    %21 = arith.mulf %19, %20 : vector<8x128xf32>
    %22 = arith.mulf %21, %21 : vector<8x128xf32>
    %cst_8 = arith.constant dense<0.000000e+00> : vector<128xf32>
    %23 = vector.multi_reduction <add>, %22, %cst_8 [0] : vector<8x128xf32> to vector<128xf32>
    %24 = vector.shape_cast %23 : vector<128xf32> to vector<1x128xf32>
    %cst_9 = arith.constant dense<0.000000e+00> : vector<1xf32>
    %25 = vector.multi_reduction <add>, %24, %cst_9 [1] : vector<1x128xf32> to vector<1xf32>
    %26 = vector.shape_cast %25 : vector<1xf32> to vector<1x1xf32>
    %c0_10 = arith.constant 0 : index
    %c0_11 = arith.constant 0 : index
    %27 = vector.load %arg3[%c0_10, %c0_11] : memref<16x32xf32, #tpu.memory_space<vmem>>, vector<16x32xf32>
    %c0_12 = arith.constant 0 : index
    %c0_13 = arith.constant 0 : index
    %28 = vector.load %arg4[%c0_12, %c0_13] : memref<16x32xf32, #tpu.memory_space<vmem>>, vector<16x32xf32>
    %c0_14 = arith.constant 0 : index
    %c0_15 = arith.constant 0 : index
    %29 = vector.load %arg5[%c0_14, %c0_15] : memref<16x1xf32, #tpu.memory_space<vmem>>, vector<16x1xf32>
    %30 = arith.mulf %27, %27 : vector<16x32xf32>
    %cst_16 = arith.constant dense<0.000000e+00> : vector<32xf32>
    %31 = vector.multi_reduction <add>, %30, %cst_16 [0] : vector<16x32xf32> to vector<32xf32>
    %32 = vector.shape_cast %31 : vector<32xf32> to vector<1x32xf32>
    %cst_17 = arith.constant 1.000000e-10 : f32
    %33 = vector.broadcast %cst_17 : f32 to vector<1x32xf32>
    %34 = arith.addf %32, %33 : vector<1x32xf32>
    %35 = math.rsqrt %34 : vector<1x32xf32>
    %36 = vector.broadcast %35 : vector<1x32xf32> to vector<16x32xf32>
    %37 = arith.mulf %27, %36 : vector<16x32xf32>
    %38 = arith.mulf %28, %28 : vector<16x32xf32>
    %cst_18 = arith.constant dense<0.000000e+00> : vector<32xf32>
    %39 = vector.multi_reduction <add>, %38, %cst_18 [0] : vector<16x32xf32> to vector<32xf32>
    %40 = vector.shape_cast %39 : vector<32xf32> to vector<1x32xf32>
    %cst_19 = arith.constant 1.000000e-10 : f32
    %41 = vector.broadcast %cst_19 : f32 to vector<1x32xf32>
    %42 = arith.addf %40, %41 : vector<1x32xf32>
    %43 = math.rsqrt %42 : vector<1x32xf32>
    %44 = vector.broadcast %43 : vector<1x32xf32> to vector<16x32xf32>
    %45 = arith.mulf %28, %44 : vector<16x32xf32>
    %46 = arith.subf %37, %45 : vector<16x32xf32>
    %47 = vector.broadcast %29 : vector<16x1xf32> to vector<16x32xf32>
    %48 = arith.mulf %46, %47 : vector<16x32xf32>
    %49 = arith.mulf %48, %48 : vector<16x32xf32>
    %cst_20 = arith.constant dense<0.000000e+00> : vector<32xf32>
    %50 = vector.multi_reduction <add>, %49, %cst_20 [0] : vector<16x32xf32> to vector<32xf32>
    %51 = vector.shape_cast %50 : vector<32xf32> to vector<1x32xf32>
    %cst_21 = arith.constant dense<0.000000e+00> : vector<1xf32>
    %52 = vector.multi_reduction <add>, %51, %cst_21 [1] : vector<1x32xf32> to vector<1xf32>
    %53 = vector.shape_cast %52 : vector<1xf32> to vector<1x1xf32>
    %54 = arith.addf %26, %53 : vector<1x1xf32>
    %c0_22 = arith.constant 0 : index
    %c0_23 = arith.constant 0 : index
    %55 = vector.load %arg6[%c0_22, %c0_23] : memref<1x1xf32, #tpu.memory_space<vmem>>, vector<1x1xf32>
    tpu.vector_store %arg6[%c0_22, %c0_23], %54 {strides = array<i32>} : memref<1x1xf32, #tpu.memory_space<vmem>>, vector<1x1xf32>,
    return
  }
}

</mosaic_0001>

<llo_original>
// kernel: lpips_distance_sampler_forward.9
$region0: #{lpips_distance_sampler_forward.9}
  #allocation0 [shape = 'u32[]', space=smem, size = 0x4, offset = 0x4, fixed_abs, tag = 'smem constant byte address 0x4 - core index']
  #allocation1 [shape = 'u32[144,128]{1,0:T(1,128)}', space=vmem, size = 0x12000, scoped, tag = 'internal scratch']
  %s0 = inlined_call_operand.vmem [shape: f32[4,32], index: 0, kind: input, shape index: {}]
  %s1 = inlined_call_operand.vmem [shape: f32[4,4], index: 1, kind: input, shape index: {}]
  %s2 = inlined_call_operand.hbm [shape: f32[4,32], index: 2, kind: input, shape index: {}]
  %s3 = inlined_call_operand.hbm [shape: f32[1,32], index: 3, kind: input, shape index: {}]
  %s4 = inlined_call_operand.vmem [shape: f32[32,32], index: 4, kind: input, shape index: {}]
  %s5 = inlined_call_operand.vmem [shape: f32[32,32], index: 5, kind: input, shape index: {}]
  %s6 = inlined_call_operand.hbm [shape: f32[1,32], index: 6, kind: input, shape index: {}]
  %s7 = inlined_call_operand.hbm [shape: f32[32,32], index: 7, kind: input, shape index: {}]
  %s8 = inlined_call_operand.hbm [shape: f32[1,32], index: 8, kind: input, shape index: {}]
  %s9 = inlined_call_operand.hbm [shape: f32[32,128], index: 9, kind: input, shape index: {}]
  %s10 = inlined_call_operand.hbm [shape: f32[1,128], index: 10, kind: input, shape index: {}]
  %s11 = inlined_call_operand.vmem [shape: f32[32,8], index: 11, kind: input, shape index: {}]
  %s12 = inlined_call_operand.hbm [shape: f32[1,8], index: 12, kind: input, shape index: {}]
  %s13 = inlined_call_operand.vmem [shape: f32[32,8], index: 13, kind: input, shape index: {}]
  %s14 = inlined_call_operand.hbm [shape: f32[1,8], index: 14, kind: input, shape index: {}]
  %s15 = inlined_call_operand.vmem [shape: f32[4,128], index: 15, kind: output, shape index: {0}]
  %s16 = inlined_call_operand.vmem [shape: f32[4,8], index: 16, kind: output, shape index: {1}]
  %s17 = inlined_call_operand.vmem [shape: f32[4,8], index: 17, kind: output, shape index: {2}]
  %18 = xla_tuple %s15, %s16, %s17
  %s19 = sld [smem:[#allocation0]]
  $region122: #{lpips_distance_sampler_forward.9} parent=0
    _
  %s21 = ssub.s32 1, %s19
  %s22 = scalar_select 0, %s21, %s19
  $region1: #{lpips_distance_sampler_forward.9} parent=0
    #allocation2 [shape = 'u8[2048]{0}', space=vmem, size = 0x800, scoped, tag = 'input window, operand 2, single buffered']
    #allocation3 [shape = 's32[1]{0}', space=sflag, size = 0x4, scoped, tag = 'scoped memory for lpips_distance_sampler_forward.9']
    #allocation4 [shape = 'u8[512]{0}', space=vmem, size = 0x400, scoped, tag = 'input window, operand 3, single buffered']
    #allocation5 [shape = 's32[1]{0}', space=sflag, size = 0x4, scoped, tag = 'scoped memory for lpips_distance_sampler_forward.9']
    #allocation6 [shape = 'u8[512]{0}', space=vmem, size = 0x400, scoped, tag = 'input window, operand 6, single buffered']
    #allocation7 [shape = 'u8[16384]{0}', space=vmem, size = 0x4000, scoped, tag = 'input window, operand 7, single buffered']
    #allocation8 [shape = 's32[1]{0}', space=sflag, size = 0x4, scoped, tag = 'scoped memory for lpips_distance_sampler_forward.9']
    #allocation9 [shape = 'u8[512]{0}', space=vmem, size = 0x400, scoped, tag = 'input window, operand 8, single buffered']
    #allocation10 [shape = 'u8[16384]{0}', space=vmem, size = 0x4000, scoped, tag = 'input window, operand 9, single buffered']
    #allocation11 [shape = 's32[1]{0}', space=sflag, size = 0x4, scoped, tag = 'scoped memory for lpips_distance_sampler_forward.9']
    #allocation12 [shape = 'u8[512]{0}', space=vmem, size = 0x400, scoped, tag = 'input window, operand 10, single buffered']
    #allocation13 [shape = 'u8[512]{0}', space=vmem, size = 0x400, scoped, tag = 'input window, operand 12, single buffered']
    #allocation14 [shape = 's32[1]{0}', space=sflag, size = 0x4, scoped, tag = 'scoped memory for lpips_distance_sampler_forward.9']
    #allocation15 [shape = 'u8[512]{0}', space=vmem, size = 0x400, scoped, tag = 'input window, operand 14, single buffered']
    %23 = vsyncpa [#allocation3], 0
    %24 = vsyncpa [#allocation5], 0
    %25 = vsyncpa [#allocation8], 0
    %26 = vsyncpa [#allocation11], 0
    %27 = vsyncpa [#allocation14], 0
    // Predicated region
    $region2: #{lpips_distance_sampler_forward.9} parent=1 // pred_check
      _
    $region3: #{lpips_distance_sampler_forward.9} parent=1 // pred_check_branch
      %29 = sbr.rel (0) target = $region5
    $region4: #{lpips_distance_sampler_forward.9} parent=1 // pred_region
      _
    $region5: #{lpips_distance_sampler_forward.9} parent=1 // pred_fallthru
      _
    // Predicated region
    $region6: #{lpips_distance_sampler_forward.9} parent=1 // pred_check
      _
    $region7: #{lpips_distance_sampler_forward.9} parent=1 // pred_check_branch
      %31 = sbr.rel (0) target = $region9
    $region8: #{lpips_distance_sampler_forward.9} parent=1 // pred_region
      _
    $region9: #{lpips_distance_sampler_forward.9} parent=1 // pred_fallthru
      _
    // Predicated region
    $region10: #{lpips_distance_sampler_forward.9} parent=1 // pred_check
      _
    $region11: #{lpips_distance_sampler_forward.9} parent=1 // pred_check_branch
      %33 = sbr.rel (0) target = $region13
    $region12: #{lpips_distance_sampler_forward.9} parent=1 // pred_region
      %s35 = ssub.s32 64, 64
      %36 = vsyncadd [#allocation3], %s35
      %s38 = sshll.u32 [#allocation2], 4
      %s39 = int_to_ptr.vmem [resolvable:$true] %s38
      %41 = dma.hbm_to_vmem [thread:$0]  %s2, 64, %s39, [#allocation3]
    $region13: #{lpips_distance_sampler_forward.9} parent=1 // pred_fallthru
      _
    // Predicated region
    $region14: #{lpips_distance_sampler_forward.9} parent=1 // pred_check
      _
    $region15: #{lpips_distance_sampler_forward.9} parent=1 // pred_check_branch
      %43 = sbr.rel (0) target = $region17
    $region16: #{lpips_distance_sampler_forward.9} parent=1 // pred_region
      %s45 = ssub.s32 16, 16
      %46 = vsyncadd [#allocation5], %s45
      %s48 = sshll.u32 [#allocation4], 4
      %s49 = int_to_ptr.vmem [resolvable:$true] %s48
      %51 = dma.hbm_to_vmem [thread:$0]  %s3, 16, %s49, [#allocation5]
    $region17: #{lpips_distance_sampler_forward.9} parent=1 // pred_fallthru
      _
    // Predicated region
    $region18: #{lpips_distance_sampler_forward.9} parent=1 // pred_check
      _
    $region19: #{lpips_distance_sampler_forward.9} parent=1 // pred_check_branch
      %53 = sbr.rel (0) target = $region21
    $region20: #{lpips_distance_sampler_forward.9} parent=1 // pred_region
      _
    $region21: #{lpips_distance_sampler_forward.9} parent=1 // pred_fallthru
      _
    // Predicated region
    $region22: #{lpips_distance_sampler_forward.9} parent=1 // pred_check
      _
    $region23: #{lpips_distance_sampler_forward.9} parent=1 // pred_check_branch
      %55 = sbr.rel (0) target = $region25
    $region24: #{lpips_distance_sampler_forward.9} parent=1 // pred_region
      _
    $region25: #{lpips_distance_sampler_forward.9} parent=1 // pred_fallthru
      _
    // Predicated region
    $region26: #{lpips_distance_sampler_forward.9} parent=1 // pred_check
      _
    $region27: #{lpips_distance_sampler_forward.9} parent=1 // pred_check_branch
      %57 = sbr.rel (0) target = $region29
    $region28: #{lpips_distance_sampler_forward.9} parent=1 // pred_region
      %s59 = ssub.s32 16, 16
      %60 = vsyncadd [#allocation5], %s59
      %s62 = sshll.u32 [#allocation6], 4
      %s63 = int_to_ptr.vmem [resolvable:$true] %s62
      %65 = dma.hbm_to_vmem [thread:$0]  %s6, 16, %s63, [#allocation5]
    $region29: #{lpips_distance_sampler_forward.9} parent=1 // pred_fallthru
      _
    // Predicated region
    $region30: #{lpips_distance_sampler_forward.9} parent=1 // pred_check
      _
    $region31: #{lpips_distance_sampler_forward.9} parent=1 // pred_check_branch
      %67 = sbr.rel (0) target = $region33
    $region32: #{lpips_distance_sampler_forward.9} parent=1 // pred_region
      %s69 = ssub.s32 512, 512
      %70 = vsyncadd [#allocation8], %s69
      %s71 = sshll.u32 [#allocation7], 4
      %s72 = int_to_ptr.vmem [resolvable:$true] %s71
      %77 = dma.hbm_to_vmem [thread:$0]  %s7, 512, %s72, [#allocation8], 128, 128, 8
    $region33: #{lpips_distance_sampler_forward.9} parent=1 // pred_fallthru
      _
    // Predicated region
    $region34: #{lpips_distance_sampler_forward.9} parent=1 // pred_check
      _
    $region35: #{lpips_distance_sampler_forward.9} parent=1 // pred_check_branch
      %79 = sbr.rel (0) target = $region37
    $region36: #{lpips_distance_sampler_forward.9} parent=1 // pred_region
      %s81 = ssub.s32 16, 16
      %82 = vsyncadd [#allocation8], %s81
      %s84 = sshll.u32 [#allocation9], 4
      %s85 = int_to_ptr.vmem [resolvable:$true] %s84
      %87 = dma.hbm_to_vmem [thread:$0]  %s8, 16, %s85, [#allocation8]
    $region37: #{lpips_distance_sampler_forward.9} parent=1 // pred_fallthru
      _
    // Predicated region
    $region38: #{lpips_distance_sampler_forward.9} parent=1 // pred_check
      _
    $region39: #{lpips_distance_sampler_forward.9} parent=1 // pred_check_branch
      %89 = sbr.rel (0) target = $region41
    $region40: #{lpips_distance_sampler_forward.9} parent=1 // pred_region
      %s91 = ssub.s32 512, 512
      %92 = vsyncadd [#allocation11], %s91
      %s93 = sshll.u32 [#allocation10], 4
      %s94 = int_to_ptr.vmem [resolvable:$true] %s93
      %99 = dma.hbm_to_vmem [thread:$0]  %s9, 512, %s94, [#allocation11], 128, 128, 8
    $region41: #{lpips_distance_sampler_forward.9} parent=1 // pred_fallthru
      _
    // Predicated region
    $region42: #{lpips_distance_sampler_forward.9} parent=1 // pred_check
      _
    $region43: #{lpips_distance_sampler_forward.9} parent=1 // pred_check_branch
      %101 = sbr.rel (0) target = $region45
    $region44: #{lpips_distance_sampler_forward.9} parent=1 // pred_region
      %s103 = ssub.s32 16, 16
      %104 = vsyncadd [#allocation11], %s103
      %s106 = sshll.u32 [#allocation12], 4
      %s107 = int_to_ptr.vmem [resolvable:$true] %s106
      %109 = dma.hbm_to_vmem [thread:$0]  %s10, 16, %s107, [#allocation11]
    $region45: #{lpips_distance_sampler_forward.9} parent=1 // pred_fallthru
      _
    // Predicated region
    $region46: #{lpips_distance_sampler_forward.9} parent=1 // pred_check
      _
    $region47: #{lpips_distance_sampler_forward.9} parent=1 // pred_check_branch
      %111 = sbr.rel (0) target = $region49
    $region48: #{lpips_distance_sampler_forward.9} parent=1 // pred_region
      _
    $region49: #{lpips_distance_sampler_forward.9} parent=1 // pred_fallthru
      _
    // Predicated region
    $region50: #{lpips_distance_sampler_forward.9} parent=1 // pred_check
      _
    $region51: #{lpips_distance_sampler_forward.9} parent=1 // pred_check_branch
      %113 = sbr.rel (0) target = $region53
    $region52: #{lpips_distance_sampler_forward.9} parent=1 // pred_region
      %s115 = ssub.s32 16, 16
      %116 = vsyncadd [#allocation14], %s115
      %s118 = sshll.u32 [#allocation13], 4
      %s119 = int_to_ptr.vmem [resolvable:$true] %s118
      %121 = dma.hbm_to_vmem [thread:$0]  %s12, 16, %s119, [#allocation14]
    $region53: #{lpips_distance_sampler_forward.9} parent=1 // pred_fallthru
      _
    // Predicated region
    $region54: #{lpips_distance_sampler_forward.9} parent=1 // pred_check
      _
    $region55: #{lpips_distance_sampler_forward.9} parent=1 // pred_check_branch
      %123 = sbr.rel (0) target = $region57
    $region56: #{lpips_distance_sampler_forward.9} parent=1 // pred_region
      _
    $region57: #{lpips_distance_sampler_forward.9} parent=1 // pred_fallthru
      _
    // Predicated region
    $region58: #{lpips_distance_sampler_forward.9} parent=1 // pred_check
      _
    $region59: #{lpips_distance_sampler_forward.9} parent=1 // pred_check_branch
      %125 = sbr.rel (0) target = $region61
    $region60: #{lpips_distance_sampler_forward.9} parent=1 // pred_region
      %s127 = ssub.s32 16, 16
      %128 = vsyncadd [#allocation14], %s127
      %s130 = sshll.u32 [#allocation15], 4
      %s131 = int_to_ptr.vmem [resolvable:$true] %s130
      %133 = dma.hbm_to_vmem [thread:$0]  %s14, 16, %s131, [#allocation14]
    $region61: #{lpips_distance_sampler_forward.9} parent=1 // pred_fallthru
      _
    // Predicated region
    $region62: #{lpips_distance_sampler_forward.9} parent=1 // pred_check
      _
    $region63: #{lpips_distance_sampler_forward.9} parent=1 // pred_check_branch
      %135 = sbr.rel (0) target = $region65
    $region64: #{lpips_distance_sampler_forward.9} parent=1 // pred_region
      %136 = dma.done [#allocation3], 64
    $region65: #{lpips_distance_sampler_forward.9} parent=1 // pred_fallthru
      _
    // Predicated region
    $region66: #{lpips_distance_sampler_forward.9} parent=1 // pred_check
      _
    $region67: #{lpips_distance_sampler_forward.9} parent=1 // pred_check_branch
      %138 = sbr.rel (0) target = $region69
    $region68: #{lpips_distance_sampler_forward.9} parent=1 // pred_region
      %139 = dma.done [#allocation5], 16
    $region69: #{lpips_distance_sampler_forward.9} parent=1 // pred_fallthru
      _
    // Predicated region
    $region70: #{lpips_distance_sampler_forward.9} parent=1 // pred_check
      _
    $region71: #{lpips_distance_sampler_forward.9} parent=1 // pred_check_branch
      %141 = sbr.rel (0) target = $region73
    $region72: #{lpips_distance_sampler_forward.9} parent=1 // pred_region
      %142 = dma.done [#allocation5], 16
    $region73: #{lpips_distance_sampler_forward.9} parent=1 // pred_fallthru
      _
    // Predicated region
    $region74: #{lpips_distance_sampler_forward.9} parent=1 // pred_check
      _
    $region75: #{lpips_distance_sampler_forward.9} parent=1 // pred_check_branch
      %144 = sbr.rel (0) target = $region77
    $region76: #{lpips_distance_sampler_forward.9} parent=1 // pred_region
      %145 = dma.done [#allocation8], 512
    $region77: #{lpips_distance_sampler_forward.9} parent=1 // pred_fallthru
      _
    // Predicated region
    $region78: #{lpips_distance_sampler_forward.9} parent=1 // pred_check
      _
    $region79: #{lpips_distance_sampler_forward.9} parent=1 // pred_check_branch
      %147 = sbr.rel (0) target = $region81
    $region80: #{lpips_distance_sampler_forward.9} parent=1 // pred_region
      %148 = dma.done [#allocation8], 16
    $region81: #{lpips_distance_sampler_forward.9} parent=1 // pred_fallthru
      _
    // Predicated region
    $region82: #{lpips_distance_sampler_forward.9} parent=1 // pred_check
      _
    $region83: #{lpips_distance_sampler_forward.9} parent=1 // pred_check_branch
      %150 = sbr.rel (0) target = $region85
    $region84: #{lpips_distance_sampler_forward.9} parent=1 // pred_region
      %151 = dma.done [#allocation11], 512
    $region85: #{lpips_distance_sampler_forward.9} parent=1 // pred_fallthru
      _
    // Predicated region
    $region86: #{lpips_distance_sampler_forward.9} parent=1 // pred_check
      _
    $region87: #{lpips_distance_sampler_forward.9} parent=1 // pred_check_branch
      %153 = sbr.rel (0) target = $region89
    $region88: #{lpips_distance_sampler_forward.9} parent=1 // pred_region
      %154 = dma.done [#allocation11], 16
    $region89: #{lpips_distance_sampler_forward.9} parent=1 // pred_fallthru
      _
    // Predicated region
    $region90: #{lpips_distance_sampler_forward.9} parent=1 // pred_check
      _
    $region91: #{lpips_distance_sampler_forward.9} parent=1 // pred_check_branch
      %156 = sbr.rel (0) target = $region93
    $region92: #{lpips_distance_sampler_forward.9} parent=1 // pred_region
      %157 = dma.done [#allocation14], 16
    $region93: #{lpips_distance_sampler_forward.9} parent=1 // pred_fallthru
      _
    // Predicated region
    $region94: #{lpips_distance_sampler_forward.9} parent=1 // pred_check
      _
    $region95: #{lpips_distance_sampler_forward.9} parent=1 // pred_check_branch
      %159 = sbr.rel (0) target = $region97
    $region96: #{lpips_distance_sampler_forward.9} parent=1 // pred_region
      %160 = dma.done [#allocation14], 16
    $region97: #{lpips_distance_sampler_forward.9} parent=1 // pred_fallthru
      _
    %v161 = vld [vmem:[%s0] sm:$0xf]
    %v162 = vmul.f32 %v161, %v161
    %vm163 = vcmask 257024
    %v164 = vsel %vm163, %v162, 0.0
    %165 = vadd.xlane.f32.xlu0 %v164
    %v166 = vpop.xlane.xlu0 %165
    %v167 = vrcp.pop 32.0
    %v168 = vmul.f32 %v166, %v167
    %v169 = vadd.f32 %v168, 1e-08
    %v170 = vrsqrt.pop %v169
    %v171 = vmul.f32 %v161, %v170
    %v172 = vld [vmem:[%s1] sm:$0xf]
    %v173 = vld [vmem:[#allocation2] sm:$0xf]
    %v174 = vld [vmem:[#allocation4] sm:$0x1]
    %v176 = vlaneseq
    %v177 = vshrl.u32 %v176, 7
    %v178 = vsub.s32 0, %v177
    %v179 = vrot.slane %v174, %v178
    %vm181 = vcmask 31744
    %v183 = vsel %vm181, %v172, 0
    %vm185 = vcmask 1043456
    %v187 = vsel %vm185, %v173, 0
    %189 = vmatprep.subr.mxu0 0.0
    %190 = vmatpush1.msra.mxu0 %v187
    %191 = vmatprep.subr.mxu0 0.0
    %192 = vmatpush1.msra.mxu0 0.0
    %193 = vmatprep.subr.mxu0 0.0
    %194 = vmatpush1.msra.mxu0 0.0
    %195 = vmatprep.subr.mxu0 0.0
    %196 = vmatpush1.msra.mxu0 0.0
    %197 = vmatprep.subr.mxu0 0.0
    %198 = vmatpush1.msra.mxu0 0.0
    %199 = vmatprep.subr.mxu0 0.0
    %200 = vmatpush1.msra.mxu0 0.0
    %201 = vmatprep.subr.mxu0 0.0
    %202 = vmatpush1.msra.mxu0 0.0
    %203 = vmatprep.subr.mxu0 0.0
    %204 = vmatpush1.msra.mxu0 0.0
    %205 = vmatprep.subr.mxu0 0.0
    %206 = vmatpush1.msra.mxu0 0.0
    %207 = vmatprep.subr.mxu0 0.0
    %208 = vmatpush1.msra.mxu0 0.0
    %209 = vmatprep.subr.mxu0 0.0
    %210 = vmatpush1.msra.mxu0 0.0
    %211 = vmatprep.subr.mxu0 0.0
    %212 = vmatpush1.msra.mxu0 0.0
    %213 = vmatprep.subr.mxu0 0.0
    %214 = vmatpush1.msra.mxu0 0.0
    %215 = vmatprep.subr.mxu0 0.0
    %216 = vmatpush1.msra.mxu0 0.0
    %217 = vmatprep.subr.mxu0 0.0
    %218 = vmatpush1.msra.mxu0 0.0
    %219 = vmatprep.subr.mxu0 0.0
    %220 = vmatpush1.msra.mxu0 0.0
    %221 = vmatprep.subr.mxu0 0.0
    %222 = vmatpush1.msra.mxu0 0.0
    %223 = vmatprep.subr.mxu0 0.0
    %224 = vmatpush1.msra.mxu0 0.0
    %225 = vmatprep.subr.mxu0 0.0
    %226 = vmatpush1.msra.mxu0 0.0
    %227 = vmatprep.subr.mxu0 0.0
    %228 = vmatpush1.msra.mxu0 0.0
    %229 = vmatprep.subr.mxu0 0.0
    %230 = vmatpush1.msra.mxu0 0.0
    %231 = vmatprep.subr.mxu0 0.0
    %232 = vmatpush1.msra.mxu0 0.0
    %233 = vmatprep.subr.mxu0 0.0
    %234 = vmatpush1.msra.mxu0 0.0
    %235 = vmatprep.subr.mxu0 0.0
    %236 = vmatpush1.msra.mxu0 0.0
    %237 = vmatprep.subr.mxu0 0.0
    %238 = vmatpush1.msra.mxu0 0.0
    %239 = vmatprep.subr.mxu0 0.0
    %240 = vmatpush1.msra.mxu0 0.0
    %241 = vmatprep.subr.mxu0 0.0
    %242 = vmatpush1.msra.mxu0 0.0
    %243 = vmatprep.subr.mxu0 0.0
    %244 = vmatpush1.msra.mxu0 0.0
    %245 = vmatprep.subr.mxu0 0.0
    %246 = vmatpush1.msra.mxu0 0.0
    %247 = vmatprep.subr.mxu0 0.0
    %248 = vmatpush1.msra.mxu0 0.0
    %249 = vmatprep.subr.mxu0 0.0
    %250 = vmatpush1.msra.mxu0 0.0
    %251 = vmatprep.subr.mxu0 0.0
    %252 = vmatpush1.msra.mxu0 0.0
    %253 = vmatprep.mubr.f32.mxu0 0.0
    %254 = vmatmul.mubr.f32.gmra.mrb[0].mxu0 %v183
    %v255 = vpop.f32.mrb[0].mxu0
    %v256 = vadd.f32 %v179, %v255
    %v257 = vpop.f32.mrb[0].mxu0
    %258 = vdwg.mxu0
    %v259 = vmul.f32 %v256, %v256
    %v260 = vsel %vm163, %v259, 0.0
    %261 = vadd.xlane.f32.xlu0 %v260
    %v262 = vpop.xlane.xlu0 %261
    %v263 = vmul.f32 %v262, %v167
    %v264 = vadd.f32 %v263, 1e-08
    %v265 = vrsqrt.pop %v264
    %v266 = vmul.f32 %v256, %v265
    %v267 = vld [vmem:[%s4] sm:$0xff]
    %v268 = vld [vmem:[%s4 + $0x8] sm:$0xff]
    %v269 = vld [vmem:[%s4 + $0x10] sm:$0xff]
    %v270 = vld [vmem:[%s4 + $0x18] sm:$0xff]
    %v271 = vld [vmem:[%s5] sm:$0xff]
    %v272 = vld [vmem:[%s5 + $0x8] sm:$0xff]
    %v273 = vld [vmem:[%s5 + $0x10] sm:$0xff]
    %v274 = vld [vmem:[%s5 + $0x18] sm:$0xff]
    %vm275 = vcmask 261120
    %v277 = vsel %vm275, %v266, 0
    %279 = vmatprep.subr.mxu0 0.0
    %280 = vmatpush1.msra.mxu0 %v271
    %281 = vmatprep.subr.mxu0 0.0
    %282 = vmatpush1.msra.mxu0 %v272
    %283 = vmatprep.subr.mxu0 0.0
    %284 = vmatpush1.msra.mxu0 %v273
    %285 = vmatprep.subr.mxu0 0.0
    %286 = vmatpush1.msra.mxu0 %v274
    %287 = vmatprep.subr.mxu0 0.0
    %288 = vmatpush1.msra.mxu0 0.0
    %289 = vmatprep.subr.mxu0 0.0
    %290 = vmatpush1.msra.mxu0 0.0
    %291 = vmatprep.subr.mxu0 0.0
    %292 = vmatpush1.msra.mxu0 0.0
    %293 = vmatprep.subr.mxu0 0.0
    %294 = vmatpush1.msra.mxu0 0.0
    %295 = vmatprep.subr.mxu0 0.0
    %296 = vmatpush1.msra.mxu0 0.0
    %297 = vmatprep.subr.mxu0 0.0
    %298 = vmatpush1.msra.mxu0 0.0
    %299 = vmatprep.subr.mxu0 0.0
    %300 = vmatpush1.msra.mxu0 0.0
    %301 = vmatprep.subr.mxu0 0.0
    %302 = vmatpush1.msra.mxu0 0.0
    %303 = vmatprep.subr.mxu0 0.0
    %304 = vmatpush1.msra.mxu0 0.0
    %305 = vmatprep.subr.mxu0 0.0
    %306 = vmatpush1.msra.mxu0 0.0
    %307 = vmatprep.subr.mxu0 0.0
    %308 = vmatpush1.msra.mxu0 0.0
    %309 = vmatprep.subr.mxu0 0.0
    %310 = vmatpush1.msra.mxu0 0.0
    %311 = vmatprep.subr.mxu0 0.0
    %312 = vmatpush1.msra.mxu0 0.0
    %313 = vmatprep.subr.mxu0 0.0
    %314 = vmatpush1.msra.mxu0 0.0
    %315 = vmatprep.subr.mxu0 0.0
    %316 = vmatpush1.msra.mxu0 0.0
    %317 = vmatprep.subr.mxu0 0.0
    %318 = vmatpush1.msra.mxu0 0.0
    %319 = vmatprep.subr.mxu0 0.0
    %320 = vmatpush1.msra.mxu0 0.0
    %321 = vmatprep.subr.mxu0 0.0
    %322 = vmatpush1.msra.mxu0 0.0
    %323 = vmatprep.subr.mxu0 0.0
    %324 = vmatpush1.msra.mxu0 0.0
    %325 = vmatprep.subr.mxu0 0.0
    %326 = vmatpush1.msra.mxu0 0.0
    %327 = vmatprep.subr.mxu0 0.0
    %328 = vmatpush1.msra.mxu0 0.0
    %329 = vmatprep.subr.mxu0 0.0
    %330 = vmatpush1.msra.mxu0 0.0
    %331 = vmatprep.subr.mxu0 0.0
    %332 = vmatpush1.msra.mxu0 0.0
    %333 = vmatprep.subr.mxu0 0.0
    %334 = vmatpush1.msra.mxu0 0.0
    %335 = vmatprep.subr.mxu0 0.0
    %336 = vmatpush1.msra.mxu0 0.0
    %337 = vmatprep.subr.mxu0 0.0
    %338 = vmatpush1.msra.mxu0 0.0
    %339 = vmatprep.subr.mxu0 0.0
    %340 = vmatpush1.msra.mxu0 0.0
    %341 = vmatprep.subr.mxu0 0.0
    %342 = vmatpush1.msra.mxu0 0.0
    %343 = vmatprep.mubr.f32.mxu0 0.0
    %344 = vmatmul.mubr.f32.gmra.mrb[0].mxu0 %v277
    %v345 = vpop.f32.mrb[0].mxu0
    %v346 = vadd.f32 0.0, %v345
    %v347 = vpop.f32.mrb[0].mxu0
    %348 = vdwg.mxu0
    %v350 = vsel %vm275, %v171, 0
    %352 = vmatprep.subr.mxu0 0.0
    %353 = vmatpush1.msra.mxu0 %v267
    %354 = vmatprep.subr.mxu0 0.0
    %355 = vmatpush1.msra.mxu0 %v268
    %356 = vmatprep.subr.mxu0 0.0
    %357 = vmatpush1.msra.mxu0 %v269
    %358 = vmatprep.subr.mxu0 0.0
    %359 = vmatpush1.msra.mxu0 %v270
    %360 = vmatprep.subr.mxu0 0.0
    %361 = vmatpush1.msra.mxu0 0.0
    %362 = vmatprep.subr.mxu0 0.0
    %363 = vmatpush1.msra.mxu0 0.0
    %364 = vmatprep.subr.mxu0 0.0
    %365 = vmatpush1.msra.mxu0 0.0
    %366 = vmatprep.subr.mxu0 0.0
    %367 = vmatpush1.msra.mxu0 0.0
    %368 = vmatprep.subr.mxu0 0.0
    %369 = vmatpush1.msra.mxu0 0.0
    %370 = vmatprep.subr.mxu0 0.0
    %371 = vmatpush1.msra.mxu0 0.0
    %372 = vmatprep.subr.mxu0 0.0
    %373 = vmatpush1.msra.mxu0 0.0
    %374 = vmatprep.subr.mxu0 0.0
    %375 = vmatpush1.msra.mxu0 0.0
    %376 = vmatprep.subr.mxu0 0.0
    %377 = vmatpush1.msra.mxu0 0.0
    %378 = vmatprep.subr.mxu0 0.0
    %379 = vmatpush1.msra.mxu0 0.0
    %380 = vmatprep.subr.mxu0 0.0
    %381 = vmatpush1.msra.mxu0 0.0
    %382 = vmatprep.subr.mxu0 0.0
    %383 = vmatpush1.msra.mxu0 0.0
    %384 = vmatprep.subr.mxu0 0.0
    %385 = vmatpush1.msra.mxu0 0.0
    %386 = vmatprep.subr.mxu0 0.0
    %387 = vmatpush1.msra.mxu0 0.0
    %388 = vmatprep.subr.mxu0 0.0
    %389 = vmatpush1.msra.mxu0 0.0
    %390 = vmatprep.subr.mxu0 0.0
    %391 = vmatpush1.msra.mxu0 0.0
    %392 = vmatprep.subr.mxu0 0.0
    %393 = vmatpush1.msra.mxu0 0.0
    %394 = vmatprep.subr.mxu0 0.0
    %395 = vmatpush1.msra.mxu0 0.0
    %396 = vmatprep.subr.mxu0 0.0
    %397 = vmatpush1.msra.mxu0 0.0
    %398 = vmatprep.subr.mxu0 0.0
    %399 = vmatpush1.msra.mxu0 0.0
    %400 = vmatprep.subr.mxu0 0.0
    %401 = vmatpush1.msra.mxu0 0.0
    %402 = vmatprep.subr.mxu0 0.0
    %403 = vmatpush1.msra.mxu0 0.0
    %404 = vmatprep.subr.mxu0 0.0
    %405 = vmatpush1.msra.mxu0 0.0
    %406 = vmatprep.subr.mxu0 0.0
    %407 = vmatpush1.msra.mxu0 0.0
    %408 = vmatprep.subr.mxu0 0.0
    %409 = vmatpush1.msra.mxu0 0.0
    %410 = vmatprep.subr.mxu0 0.0
    %411 = vmatpush1.msra.mxu0 0.0
    %412 = vmatprep.subr.mxu0 0.0
    %413 = vmatpush1.msra.mxu0 0.0
    %414 = vmatprep.subr.mxu0 0.0
    %415 = vmatpush1.msra.mxu0 0.0
    %416 = vmatprep.mubr.f32.mxu0 0.0
    %417 = vmatmul.mubr.f32.gmra.mrb[0].mxu0 %v350
    %v418 = vpop.f32.mrb[0].mxu0
    %v419 = vadd.f32 %v346, %v418
    %v420 = vpop.f32.mrb[0].mxu0
    %421 = vdwg.mxu0
    %v422 = vld [vmem:[#allocation6] sm:$0x1]
    %v424 = vlaneseq
    %v425 = vshrl.u32 %v424, 7
    %v426 = vsub.s32 0, %v425
    %v427 = vrot.slane %v422, %v426
    %v429 = vadd.f32 %v419, %v427
    %vm430 = vcmp.ge.f32.partialorder %v429, 0.0
    %v431 = vmul.f32 %v429, 0.2
    %v432 = vsel %vm430, %v429, %v431
    %v433 = vmul.f32 %v432, 1.4142135
    %v434 = vld [vmem:[#allocation7] sm:$0xff]
    %v435 = vld [vmem:[#allocation7 + $0x8] sm:$0xff]
    %v436 = vld [vmem:[#allocation7 + $0x10] sm:$0xff]
    %v437 = vld [vmem:[#allocation7 + $0x18] sm:$0xff]
    %v438 = vld [vmem:[#allocation9] sm:$0x1]
    %v440 = vlaneseq
    %v441 = vshrl.u32 %v440, 7
    %v442 = vsub.s32 0, %v441
    %v443 = vrot.slane %v438, %v442
    %v446 = vsel %vm275, %v433, 0
    %448 = vmatprep.subr.mxu0 0.0
    %449 = vmatpush1.msra.mxu0 %v434
    %450 = vmatprep.subr.mxu0 0.0
    %451 = vmatpush1.msra.mxu0 %v435
    %452 = vmatprep.subr.mxu0 0.0
    %453 = vmatpush1.msra.mxu0 %v436
    %454 = vmatprep.subr.mxu0 0.0
    %455 = vmatpush1.msra.mxu0 %v437
    %456 = vmatprep.subr.mxu0 0.0
    %457 = vmatpush1.msra.mxu0 0.0
    %458 = vmatprep.subr.mxu0 0.0
    %459 = vmatpush1.msra.mxu0 0.0
    %460 = vmatprep.subr.mxu0 0.0
    %461 = vmatpush1.msra.mxu0 0.0
    %462 = vmatprep.subr.mxu0 0.0
    %463 = vmatpush1.msra.mxu0 0.0
    %464 = vmatprep.subr.mxu0 0.0
    %465 = vmatpush1.msra.mxu0 0.0
    %466 = vmatprep.subr.mxu0 0.0
    %467 = vmatpush1.msra.mxu0 0.0
    %468 = vmatprep.subr.mxu0 0.0
    %469 = vmatpush1.msra.mxu0 0.0
    %470 = vmatprep.subr.mxu0 0.0
    %471 = vmatpush1.msra.mxu0 0.0
    %472 = vmatprep.subr.mxu0 0.0
    %473 = vmatpush1.msra.mxu0 0.0
    %474 = vmatprep.subr.mxu0 0.0
    %475 = vmatpush1.msra.mxu0 0.0
    %476 = vmatprep.subr.mxu0 0.0
    %477 = vmatpush1.msra.mxu0 0.0
    %478 = vmatprep.subr.mxu0 0.0
    %479 = vmatpush1.msra.mxu0 0.0
    %480 = vmatprep.subr.mxu0 0.0
    %481 = vmatpush1.msra.mxu0 0.0
    %482 = vmatprep.subr.mxu0 0.0
    %483 = vmatpush1.msra.mxu0 0.0
    %484 = vmatprep.subr.mxu0 0.0
    %485 = vmatpush1.msra.mxu0 0.0
    %486 = vmatprep.subr.mxu0 0.0
    %487 = vmatpush1.msra.mxu0 0.0
    %488 = vmatprep.subr.mxu0 0.0
    %489 = vmatpush1.msra.mxu0 0.0
    %490 = vmatprep.subr.mxu0 0.0
    %491 = vmatpush1.msra.mxu0 0.0
    %492 = vmatprep.subr.mxu0 0.0
    %493 = vmatpush1.msra.mxu0 0.0
    %494 = vmatprep.subr.mxu0 0.0
    %495 = vmatpush1.msra.mxu0 0.0
    %496 = vmatprep.subr.mxu0 0.0
    %497 = vmatpush1.msra.mxu0 0.0
    %498 = vmatprep.subr.mxu0 0.0
    %499 = vmatpush1.msra.mxu0 0.0
    %500 = vmatprep.subr.mxu0 0.0
    %501 = vmatpush1.msra.mxu0 0.0
    %502 = vmatprep.subr.mxu0 0.0
    %503 = vmatpush1.msra.mxu0 0.0
    %504 = vmatprep.subr.mxu0 0.0
    %505 = vmatpush1.msra.mxu0 0.0
    %506 = vmatprep.subr.mxu0 0.0
    %507 = vmatpush1.msra.mxu0 0.0
    %508 = vmatprep.subr.mxu0 0.0
    %509 = vmatpush1.msra.mxu0 0.0
    %510 = vmatprep.subr.mxu0 0.0
    %511 = vmatpush1.msra.mxu0 0.0
    %512 = vmatprep.mubr.f32.mxu0 0.0
    %513 = vmatmul.mubr.f32.gmra.mrb[0].mxu0 %v446
    %v514 = vpop.f32.mrb[0].mxu0
    %v515 = vadd.f32 %v443, %v514
    %v516 = vpop.f32.mrb[0].mxu0
    %517 = vdwg.mxu0
    %vm518 = vcmp.ge.f32.partialorder %v515, 0.0
    %v519 = vmul.f32 %v515, 0.2
    %v520 = vsel %vm518, %v515, %v519
    %v521 = vmul.f32 %v520, 1.4142135
    %v522 = vld [vmem:[#allocation10] sm:$0xff]
    %v523 = vld [vmem:[#allocation10 + $0x8] sm:$0xff]
    %v524 = vld [vmem:[#allocation10 + $0x10] sm:$0xff]
    %v525 = vld [vmem:[#allocation10 + $0x18] sm:$0xff]
    %v526 = vld [vmem:[#allocation12] sm:$0x1]
    %v528 = vlaneseq
    %v529 = vshrl.u32 %v528, 7
    %v530 = vsub.s32 0, %v529
    %v531 = vrot.slane %v526, %v530
    %v534 = vsel %vm275, %v521, 0
    %536 = vmatprep.subr.mxu0 0.0
    %537 = vmatpush1.msra.mxu0 %v522
    %538 = vmatprep.subr.mxu0 0.0
    %539 = vmatpush1.msra.mxu0 %v523
    %540 = vmatprep.subr.mxu0 0.0
    %541 = vmatpush1.msra.mxu0 %v524
    %542 = vmatprep.subr.mxu0 0.0
    %543 = vmatpush1.msra.mxu0 %v525
    %544 = vmatprep.subr.mxu0 0.0
    %545 = vmatpush1.msra.mxu0 0.0
    %546 = vmatprep.subr.mxu0 0.0
    %547 = vmatpush1.msra.mxu0 0.0
    %548 = vmatprep.subr.mxu0 0.0
    %549 = vmatpush1.msra.mxu0 0.0
    %550 = vmatprep.subr.mxu0 0.0
    %551 = vmatpush1.msra.mxu0 0.0
    %552 = vmatprep.subr.mxu0 0.0
    %553 = vmatpush1.msra.mxu0 0.0
    %554 = vmatprep.subr.mxu0 0.0
    %555 = vmatpush1.msra.mxu0 0.0
    %556 = vmatprep.subr.mxu0 0.0
    %557 = vmatpush1.msra.mxu0 0.0
    %558 = vmatprep.subr.mxu0 0.0
    %559 = vmatpush1.msra.mxu0 0.0
    %560 = vmatprep.subr.mxu0 0.0
    %561 = vmatpush1.msra.mxu0 0.0
    %562 = vmatprep.subr.mxu0 0.0
    %563 = vmatpush1.msra.mxu0 0.0
    %564 = vmatprep.subr.mxu0 0.0
    %565 = vmatpush1.msra.mxu0 0.0
    %566 = vmatprep.subr.mxu0 0.0
    %567 = vmatpush1.msra.mxu0 0.0
    %568 = vmatprep.subr.mxu0 0.0
    %569 = vmatpush1.msra.mxu0 0.0
    %570 = vmatprep.subr.mxu0 0.0
    %571 = vmatpush1.msra.mxu0 0.0
    %572 = vmatprep.subr.mxu0 0.0
    %573 = vmatpush1.msra.mxu0 0.0
    %574 = vmatprep.subr.mxu0 0.0
    %575 = vmatpush1.msra.mxu0 0.0
    %576 = vmatprep.subr.mxu0 0.0
    %577 = vmatpush1.msra.mxu0 0.0
    %578 = vmatprep.subr.mxu0 0.0
    %579 = vmatpush1.msra.mxu0 0.0
    %580 = vmatprep.subr.mxu0 0.0
    %581 = vmatpush1.msra.mxu0 0.0
    %582 = vmatprep.subr.mxu0 0.0
    %583 = vmatpush1.msra.mxu0 0.0
    %584 = vmatprep.subr.mxu0 0.0
    %585 = vmatpush1.msra.mxu0 0.0
    %586 = vmatprep.subr.mxu0 0.0
    %587 = vmatpush1.msra.mxu0 0.0
    %588 = vmatprep.subr.mxu0 0.0
    %589 = vmatpush1.msra.mxu0 0.0
    %590 = vmatprep.subr.mxu0 0.0
    %591 = vmatpush1.msra.mxu0 0.0
    %592 = vmatprep.subr.mxu0 0.0
    %593 = vmatpush1.msra.mxu0 0.0
    %594 = vmatprep.subr.mxu0 0.0
    %595 = vmatpush1.msra.mxu0 0.0
    %596 = vmatprep.subr.mxu0 0.0
    %597 = vmatpush1.msra.mxu0 0.0
    %598 = vmatprep.subr.mxu0 0.0
    %599 = vmatpush1.msra.mxu0 0.0
    %600 = vmatprep.mubr.f32.mxu0 0.0
    %601 = vmatmul.mubr.f32.gmra.mrb[0].mxu0 %v534
    %v602 = vpop.f32.mrb[0].mxu0
    %v603 = vadd.f32 %v531, %v602
    %v604 = vpop.f32.mrb[0].mxu0
    %605 = vdwg.mxu0
    %vm606 = vcmp.ge.f32.partialorder %v603, 0.0
    %v607 = vmul.f32 %v603, 0.2
    %v608 = vsel %vm606, %v603, %v607
    %v609 = vmul.f32 %v608, 1.4142135
    %610 = vst [vmem:[%s15] sm:$0xf] %v609
    %v611 = vld [vmem:[%s11] sm:$0xff]
    %v612 = vld [vmem:[%s11 + $0x8] sm:$0xff]
    %v613 = vld [vmem:[%s11 + $0x10] sm:$0xff]
    %v614 = vld [vmem:[%s11 + $0x18] sm:$0xff]
    %v615 = vld [vmem:[#allocation13] sm:$0x1]
    %v617 = vlaneseq
    %v618 = vshrl.u32 %v617, 7
    %v619 = vsub.s32 0, %v618
    %v620 = vrot.slane %v615, %v619
    %622 = vmatprep.subr.mxu0 0.0
    %623 = vmatpush1.msra.mxu0 %v611
    %624 = vmatprep.subr.mxu0 0.0
    %625 = vmatpush1.msra.mxu0 %v612
    %626 = vmatprep.subr.mxu0 0.0
    %627 = vmatpush1.msra.mxu0 %v613
    %628 = vmatprep.subr.mxu0 0.0
    %629 = vmatpush1.msra.mxu0 %v614
    %630 = vmatprep.subr.mxu0 0.0
    %631 = vmatpush1.msra.mxu0 0.0
    %632 = vmatprep.subr.mxu0 0.0
    %633 = vmatpush1.msra.mxu0 0.0
    %634 = vmatprep.subr.mxu0 0.0
    %635 = vmatpush1.msra.mxu0 0.0
    %636 = vmatprep.subr.mxu0 0.0
    %637 = vmatpush1.msra.mxu0 0.0
    %638 = vmatprep.subr.mxu0 0.0
    %639 = vmatpush1.msra.mxu0 0.0
    %640 = vmatprep.subr.mxu0 0.0
    %641 = vmatpush1.msra.mxu0 0.0
    %642 = vmatprep.subr.mxu0 0.0
    %643 = vmatpush1.msra.mxu0 0.0
    %644 = vmatprep.subr.mxu0 0.0
    %645 = vmatpush1.msra.mxu0 0.0
    %646 = vmatprep.subr.mxu0 0.0
    %647 = vmatpush1.msra.mxu0 0.0
    %648 = vmatprep.subr.mxu0 0.0
    %649 = vmatpush1.msra.mxu0 0.0
    %650 = vmatprep.subr.mxu0 0.0
    %651 = vmatpush1.msra.mxu0 0.0
    %652 = vmatprep.subr.mxu0 0.0
    %653 = vmatpush1.msra.mxu0 0.0
    %654 = vmatprep.subr.mxu0 0.0
    %655 = vmatpush1.msra.mxu0 0.0
    %656 = vmatprep.subr.mxu0 0.0
    %657 = vmatpush1.msra.mxu0 0.0
    %658 = vmatprep.subr.mxu0 0.0
    %659 = vmatpush1.msra.mxu0 0.0
    %660 = vmatprep.subr.mxu0 0.0
    %661 = vmatpush1.msra.mxu0 0.0
    %662 = vmatprep.subr.mxu0 0.0
    %663 = vmatpush1.msra.mxu0 0.0
    %664 = vmatprep.subr.mxu0 0.0
    %665 = vmatpush1.msra.mxu0 0.0
    %666 = vmatprep.subr.mxu0 0.0
    %667 = vmatpush1.msra.mxu0 0.0
    %668 = vmatprep.subr.mxu0 0.0
    %669 = vmatpush1.msra.mxu0 0.0
    %670 = vmatprep.subr.mxu0 0.0
    %671 = vmatpush1.msra.mxu0 0.0
    %672 = vmatprep.subr.mxu0 0.0
    %673 = vmatpush1.msra.mxu0 0.0
    %674 = vmatprep.subr.mxu0 0.0
    %675 = vmatpush1.msra.mxu0 0.0
    %676 = vmatprep.subr.mxu0 0.0
    %677 = vmatpush1.msra.mxu0 0.0
    %678 = vmatprep.subr.mxu0 0.0
    %679 = vmatpush1.msra.mxu0 0.0
    %680 = vmatprep.subr.mxu0 0.0
    %681 = vmatpush1.msra.mxu0 0.0
    %682 = vmatprep.subr.mxu0 0.0
    %683 = vmatpush1.msra.mxu0 0.0
    %684 = vmatprep.subr.mxu0 0.0
    %685 = vmatpush1.msra.mxu0 0.0
    %686 = vmatprep.mubr.f32.mxu0 0.0
    %687 = vmatmul.mubr.f32.gmra.mrb[0].mxu0 %v534
    %v688 = vpop.f32.mrb[0].mxu0
    %v689 = vadd.f32 %v620, %v688
    %v690 = vpop.f32.mrb[0].mxu0
    %691 = vdwg.mxu0
    %v692 = vadd.f32 %v689, 1.0
    %vm693 = vcmask 60416
    %694 = vst.msk [vmem:[%s16] sm:$0xf] %vm693, %v692
    %v695 = vld [vmem:[%s13] sm:$0xff]
    %v696 = vld [vmem:[%s13 + $0x8] sm:$0xff]
    %v697 = vld [vmem:[%s13 + $0x10] sm:$0xff]
    %v698 = vld [vmem:[%s13 + $0x18] sm:$0xff]
    %v699 = vld [vmem:[#allocation15] sm:$0x1]
    %v701 = vlaneseq
    %v702 = vshrl.u32 %v701, 7
    %v703 = vsub.s32 0, %v702
    %v704 = vrot.slane %v699, %v703
    %706 = vmatprep.subr.mxu0 0.0
    %707 = vmatpush1.msra.mxu0 %v695
    %708 = vmatprep.subr.mxu0 0.0
    %709 = vmatpush1.msra.mxu0 %v696
    %710 = vmatprep.subr.mxu0 0.0
    %711 = vmatpush1.msra.mxu0 %v697
    %712 = vmatprep.subr.mxu0 0.0
    %713 = vmatpush1.msra.mxu0 %v698
    %714 = vmatprep.subr.mxu0 0.0
    %715 = vmatpush1.msra.mxu0 0.0
    %716 = vmatprep.subr.mxu0 0.0
    %717 = vmatpush1.msra.mxu0 0.0
    %718 = vmatprep.subr.mxu0 0.0
    %719 = vmatpush1.msra.mxu0 0.0
    %720 = vmatprep.subr.mxu0 0.0
    %721 = vmatpush1.msra.mxu0 0.0
    %722 = vmatprep.subr.mxu0 0.0
    %723 = vmatpush1.msra.mxu0 0.0
    %724 = vmatprep.subr.mxu0 0.0
    %725 = vmatpush1.msra.mxu0 0.0
    %726 = vmatprep.subr.mxu0 0.0
    %727 = vmatpush1.msra.mxu0 0.0
    %728 = vmatprep.subr.mxu0 0.0
    %729 = vmatpush1.msra.mxu0 0.0
    %730 = vmatprep.subr.mxu0 0.0
    %731 = vmatpush1.msra.mxu0 0.0
    %732 = vmatprep.subr.mxu0 0.0
    %733 = vmatpush1.msra.mxu0 0.0
    %734 = vmatprep.subr.mxu0 0.0
    %735 = vmatpush1.msra.mxu0 0.0
    %736 = vmatprep.subr.mxu0 0.0
    %737 = vmatpush1.msra.mxu0 0.0
    %738 = vmatprep.subr.mxu0 0.0
    %739 = vmatpush1.msra.mxu0 0.0
    %740 = vmatprep.subr.mxu0 0.0
    %741 = vmatpush1.msra.mxu0 0.0
    %742 = vmatprep.subr.mxu0 0.0
    %743 = vmatpush1.msra.mxu0 0.0
    %744 = vmatprep.subr.mxu0 0.0
    %745 = vmatpush1.msra.mxu0 0.0
    %746 = vmatprep.subr.mxu0 0.0
    %747 = vmatpush1.msra.mxu0 0.0
    %748 = vmatprep.subr.mxu0 0.0
    %749 = vmatpush1.msra.mxu0 0.0
    %750 = vmatprep.subr.mxu0 0.0
    %751 = vmatpush1.msra.mxu0 0.0
    %752 = vmatprep.subr.mxu0 0.0
    %753 = vmatpush1.msra.mxu0 0.0
    %754 = vmatprep.subr.mxu0 0.0
    %755 = vmatpush1.msra.mxu0 0.0
    %756 = vmatprep.subr.mxu0 0.0
    %757 = vmatpush1.msra.mxu0 0.0
    %758 = vmatprep.subr.mxu0 0.0
    %759 = vmatpush1.msra.mxu0 0.0
    %760 = vmatprep.subr.mxu0 0.0
    %761 = vmatpush1.msra.mxu0 0.0
    %762 = vmatprep.subr.mxu0 0.0
    %763 = vmatpush1.msra.mxu0 0.0
    %764 = vmatprep.subr.mxu0 0.0
    %765 = vmatpush1.msra.mxu0 0.0
    %766 = vmatprep.subr.mxu0 0.0
    %767 = vmatpush1.msra.mxu0 0.0
    %768 = vmatprep.subr.mxu0 0.0
    %769 = vmatpush1.msra.mxu0 0.0
    %770 = vmatprep.mubr.f32.mxu0 0.0
    %771 = vmatmul.mubr.f32.gmra.mrb[0].mxu0 %v534
    %v772 = vpop.f32.mrb[0].mxu0
    %v773 = vadd.f32 %v704, %v772
    %v774 = vpop.f32.mrb[0].mxu0
    %775 = vdwg.mxu0
    %v776 = vadd.f32 %v773, 1.0
    %777 = vst.msk [vmem:[%s17] sm:$0xf] %vm693, %v776
    // Predicated region
    $region98: #{lpips_distance_sampler_forward.9} parent=1 // pred_check
      _
    $region99: #{lpips_distance_sampler_forward.9} parent=1 // pred_check_branch
      %779 = sbr.rel (0) target = $region101
    $region100: #{lpips_distance_sampler_forward.9} parent=1 // pred_region
      _
    $region101: #{lpips_distance_sampler_forward.9} parent=1 // pred_fallthru
      _
    // Predicated region
    $region102: #{lpips_distance_sampler_forward.9} parent=1 // pred_check
      _
    $region103: #{lpips_distance_sampler_forward.9} parent=1 // pred_check_branch
      %781 = sbr.rel (0) target = $region105
    $region104: #{lpips_distance_sampler_forward.9} parent=1 // pred_region
      _
    $region105: #{lpips_distance_sampler_forward.9} parent=1 // pred_fallthru
      _
    // Predicated region
    $region106: #{lpips_distance_sampler_forward.9} parent=1 // pred_check
      _
    $region107: #{lpips_distance_sampler_forward.9} parent=1 // pred_check_branch
      %783 = sbr.rel (0) target = $region109
    $region108: #{lpips_distance_sampler_forward.9} parent=1 // pred_region
      _
    $region109: #{lpips_distance_sampler_forward.9} parent=1 // pred_fallthru
      _
    // Predicated region
    $region110: #{lpips_distance_sampler_forward.9} parent=1 // pred_check
      _
    $region111: #{lpips_distance_sampler_forward.9} parent=1 // pred_check_branch
      %785 = sbr.rel (0) target = $region113
    $region112: #{lpips_distance_sampler_forward.9} parent=1 // pred_region
      _
    $region113: #{lpips_distance_sampler_forward.9} parent=1 // pred_fallthru
      _
    // Predicated region
    $region114: #{lpips_distance_sampler_forward.9} parent=1 // pred_check
      _
    $region115: #{lpips_distance_sampler_forward.9} parent=1 // pred_check_branch
      %787 = sbr.rel (0) target = $region117
    $region116: #{lpips_distance_sampler_forward.9} parent=1 // pred_region
      _
    $region117: #{lpips_distance_sampler_forward.9} parent=1 // pred_fallthru
      _
    // Predicated region
    $region118: #{lpips_distance_sampler_forward.9} parent=1 // pred_check
      _
    $region119: #{lpips_distance_sampler_forward.9} parent=1 // pred_check_branch
      %789 = sbr.rel (0) target = $region121
    $region120: #{lpips_distance_sampler_forward.9} parent=1 // pred_region
      _
    $region121: #{lpips_distance_sampler_forward.9} parent=1 // pred_fallthru
      _
    %790 = vsyncpa [#allocation3], 1
    %791 = vsyncpa [#allocation5], 1
    %792 = vsyncpa [#allocation8], 1
    %793 = vsyncpa [#allocation11], 1
    %794 = vsyncpa [#allocation14], 1

// kernel: lpips_distance_sampler_forward.10
$region0: #{lpips_distance_sampler_forward.10}
  #allocation0 [shape = 'u32[]', space=smem, size = 0x4, offset = 0x4, fixed_abs, tag = 'smem constant byte address 0x4 - core index']
  #allocation1 [shape = 'u32[144,128]{1,0:T(1,128)}', space=vmem, size = 0x12000, scoped, tag = 'internal scratch']
  %s0 = inlined_call_operand.vmem [shape: bf16[72,256], index: 0, kind: input, shape index: {}]
  %s1 = inlined_call_operand.vmem [shape: bf16[8,72], index: 1, kind: input, shape index: {}]
  %s2 = inlined_call_operand.vmem [shape: f32[8,1], index: 2, kind: input, shape index: {}]
  %s3 = inlined_call_operand.vmem [shape: f32[1,256], index: 3, kind: input, shape index: {}]
  %s4 = inlined_call_operand.vmem [shape: f32[8,256], index: 4, kind: output, shape index: {}]
  %s5 = sld [smem:[#allocation0]]
  $region90: #{lpips_distance_sampler_forward.10} parent=0
    _
  %s7 = ssub.s32 1, %s5
  %s8 = scalar_select 0, %s7, %s5
  $region1: #{lpips_distance_sampler_forward.10} parent=0
    #allocation2 [shape = 'u8[36864]{0}', space=vmem, size = 0x9000, scoped, tag = 'input window, operand 0']
    loop: start=0, step=1, limit=4
    $region2: #{lpips_distance_sampler_forward.10} parent=1 // loop_pre_header
      _
    $region3: #{lpips_distance_sampler_forward.10} parent=1 // loop_header
      %s10 = sphi 0, %s14
      %p11 = scmp.ge.s32.totalorder %s10, 4
      %s20 = sphi 0, %s22
      %s23 = sphi 0, %s20
      %s24 = sphi 0, %s23
      %s40 = sphi 0, %s24
      %s44 = sphi 0, %s44
      %s46 = sphi 0, %s44
      %s47 = sphi 0, %s46
      %s61 = sphi 0, %s47
      %s65 = sphi 0, %s65
      %s67 = sphi 0, %s65
      %s68 = sphi 0, %s67
      %s82 = sphi 0, %s68
      %s88 = sphi 0, %s90
      %s91 = sphi 0, %s88
      %s92 = sphi 0, %s91
      %s108 = sphi 0, %s92
      %s114 = sphi 0, %s116
      %s117 = sphi 0, %s114
      %s118 = sphi 0, %s117
      %s134 = sphi 0, %s118
    $region4: #{lpips_distance_sampler_forward.10} parent=1 // loop_header_branch
      %13 = sbr.rel (%p11) target = $region8
    $region5: #{lpips_distance_sampler_forward.10} parent=1 // loop_body
      %s15 = ssub.s32 %s10, 1
      %s16 = ssub.s32 %s10, 2
      %s17 = sadd.s32 %s10, 1
      %s18 = ssub.s32 %s10, %s17
      %p19 = scmp.eq.s32.totalorder %s18, 0
      %s21 = sadd.s32 %s20, 1
      %s22 = scalar_select %p19, %s20, %s21
      %p25 = pneg %p19
      %p26 = scmp.eq.s32.totalorder %s10, 1
      %p27 = por %p25, %p26
      %p28 = scmp.ne.s32.totalorder %s20, %s23
      %p29 = scmp.eq.s32.totalorder %s10, 0
      %p30 = por %p28, %p29
      %p31 = scmp.ne.s32.totalorder %s20, %s23
      %p32 = scmp.eq.s32.totalorder %s15, 1
      %p33 = por %p31, %p32
      %p34 = scmp.ne.s32.totalorder %s23, %s24
      %p35 = scmp.eq.s32.totalorder %s15, 0
      %p36 = por %p34, %p35
      %p37 = scmp.ne.s32.totalorder %s23, %s24
      %p38 = scmp.eq.s32.totalorder %s16, 1
      %p39 = por %p37, %p38
      %p41 = scmp.ne.s32.totalorder %s24, %s40
      %p42 = scmp.eq.s32.totalorder %s16, 0
      %p43 = por %p41, %p42
      %s45 = sadd.s32 %s44, 1
      %p48 = scmp.eq.s32.totalorder %s10, 1
      %p49 = scmp.ne.s32.totalorder %s44, %s46
      %p50 = scmp.eq.s32.totalorder %s10, 0
      %p51 = por %p49, %p50
      %p52 = scmp.ne.s32.totalorder %s44, %s46
      %p53 = scmp.eq.s32.totalorder %s15, 1
      %p54 = por %p52, %p53
      %p55 = scmp.ne.s32.totalorder %s46, %s47
      %p56 = scmp.eq.s32.totalorder %s15, 0
      %p57 = por %p55, %p56
      %p58 = scmp.ne.s32.totalorder %s46, %s47
      %p59 = scmp.eq.s32.totalorder %s16, 1
      %p60 = por %p58, %p59
      %p62 = scmp.ne.s32.totalorder %s47, %s61
      %p63 = scmp.eq.s32.totalorder %s16, 0
      %p64 = por %p62, %p63
      %s66 = sadd.s32 %s65, 1
      %p69 = scmp.eq.s32.totalorder %s10, 1
      %p70 = scmp.ne.s32.totalorder %s65, %s67
      %p71 = scmp.eq.s32.totalorder %s10, 0
      %p72 = por %p70, %p71
      %p73 = scmp.ne.s32.totalorder %s65, %s67
      %p74 = scmp.eq.s32.totalorder %s15, 1
      %p75 = por %p73, %p74
      %p76 = scmp.ne.s32.totalorder %s67, %s68
      %p77 = scmp.eq.s32.totalorder %s15, 0
      %p78 = por %p76, %p77
      %p79 = scmp.ne.s32.totalorder %s67, %s68
      %p80 = scmp.eq.s32.totalorder %s16, 1
      %p81 = por %p79, %p80
      %p83 = scmp.ne.s32.totalorder %s68, %s82
      %p84 = scmp.eq.s32.totalorder %s16, 0
      %p85 = por %p83, %p84
      %s86 = ssub.s32 %s10, %s17
      %p87 = scmp.eq.s32.totalorder %s86, 0
      %s89 = sadd.s32 %s88, 1
      %s90 = scalar_select %p87, %s88, %s89
      %p93 = pneg %p87
      %p94 = scmp.eq.s32.totalorder %s10, 1
      %p95 = por %p93, %p94
      %p96 = scmp.ne.s32.totalorder %s88, %s91
      %p97 = scmp.eq.s32.totalorder %s10, 0
      %p98 = por %p96, %p97
      %p99 = scmp.ne.s32.totalorder %s88, %s91
      %p100 = scmp.eq.s32.totalorder %s15, 1
      %p101 = por %p99, %p100
      %p102 = scmp.ne.s32.totalorder %s91, %s92
      %p103 = scmp.eq.s32.totalorder %s15, 0
      %p104 = por %p102, %p103
      %p105 = scmp.ne.s32.totalorder %s91, %s92
      %p106 = scmp.eq.s32.totalorder %s16, 1
      %p107 = por %p105, %p106
      %p109 = scmp.ne.s32.totalorder %s92, %s108
      %p110 = scmp.eq.s32.totalorder %s16, 0
      %p111 = por %p109, %p110
      %s112 = ssub.s32 %s10, %s17
      %p113 = scmp.eq.s32.totalorder %s112, 0
      %s115 = sadd.s32 %s114, 1
      %s116 = scalar_select %p113, %s114, %s115
      %p119 = pneg %p113
      %p120 = scmp.eq.s32.totalorder %s10, 1
      %p121 = por %p119, %p120
      %p122 = scmp.ne.s32.totalorder %s114, %s117
      %p123 = scmp.eq.s32.totalorder %s10, 0
      %p124 = por %p122, %p123
      %p125 = scmp.ne.s32.totalorder %s114, %s117
      %p126 = scmp.eq.s32.totalorder %s15, 1
      %p127 = por %p125, %p126
      %p128 = scmp.ne.s32.totalorder %s117, %s118
      %p129 = scmp.eq.s32.totalorder %s15, 0
      %p130 = por %p128, %p129
      %p131 = scmp.ne.s32.totalorder %s117, %s118
      %p132 = scmp.eq.s32.totalorder %s16, 1
      %p133 = por %p131, %p132
      %p135 = scmp.ne.s32.totalorder %s118, %s134
      %p136 = scmp.eq.s32.totalorder %s16, 0
      %p137 = por %p135, %p136
      %p138 = scmp.le.s32.totalorder 1, %s10
      %p139 = scmp.lt.s32.totalorder %s10, 3
      %p140 = pnand %p138, %p139
      %p141 = pneg %p140
      // Predicated region
      $region9: #{lpips_distance_sampler_forward.10} parent=5 // pred_check
        _
      $region10: #{lpips_distance_sampler_forward.10} parent=5 // pred_check_branch
        %143 = sbr.rel (%p140) target = $region12
      $region11: #{lpips_distance_sampler_forward.10} parent=5 // pred_region
        %s144 = ssub.s32 %s10, 1
        // Predicated region
        $region13: #{lpips_distance_sampler_forward.10} parent=11 // pred_check
          %p145 = pneg %p57
        $region14: #{lpips_distance_sampler_forward.10} parent=11 // pred_check_branch
          %147 = sbr.rel (%p145) target = $region16
        $region15: #{lpips_distance_sampler_forward.10} parent=11 // pred_region
          _
        $region16: #{lpips_distance_sampler_forward.10} parent=11 // pred_fallthru
          _
        // Predicated region
        $region17: #{lpips_distance_sampler_forward.10} parent=11 // pred_check
          %p148 = pneg %p78
        $region18: #{lpips_distance_sampler_forward.10} parent=11 // pred_check_branch
          %150 = sbr.rel (%p148) target = $region20
        $region19: #{lpips_distance_sampler_forward.10} parent=11 // pred_region
          _
        $region20: #{lpips_distance_sampler_forward.10} parent=11 // pred_fallthru
          _
      $region12: #{lpips_distance_sampler_forward.10} parent=5 // pred_fallthru
        _
      %p151 = scmp.lt.s32.totalorder %s10, 2
      // Predicated region
      $region21: #{lpips_distance_sampler_forward.10} parent=5 // pred_check
        %p152 = pneg %p151
      $region22: #{lpips_distance_sampler_forward.10} parent=5 // pred_check_branch
        %154 = sbr.rel (%p152) target = $region24
      $region23: #{lpips_distance_sampler_forward.10} parent=5 // pred_region
        // Predicated region
        $region25: #{lpips_distance_sampler_forward.10} parent=23 // pred_check
          %p155 = pneg %p30
        $region26: #{lpips_distance_sampler_forward.10} parent=23 // pred_check_branch
          %157 = sbr.rel (%p155) target = $region28
        $region27: #{lpips_distance_sampler_forward.10} parent=23 // pred_region
          %s158 = sand.u32 %s20, 1
          %s159 = sand.u32 %s20, 1
          %s160 = smul.addr %s159, 36
          %s161 = scalar_lea.vmem [#allocation2], %s160
          %s162 = smul.addr %s10, 4
          %s163 = scalar_lea.vmem %s0, %s162
          // Predicated region
          $region29: #{lpips_distance_sampler_forward.10} parent=27 // pred_check
            _
          $region30: #{lpips_distance_sampler_forward.10} parent=27 // pred_check_branch
            %165 = sbr.rel (0) target = $region32
          $region31: #{lpips_distance_sampler_forward.10} parent=27 // pred_region
            // Predicated region
            $region33: #{lpips_distance_sampler_forward.10} parent=31 // pred_check
              _
            $region34: #{lpips_distance_sampler_forward.10} parent=31 // pred_check_branch
              %167 = sbr.rel target = $region36
            $region35: #{lpips_distance_sampler_forward.10} parent=31 // pred_region
              // Predicated region
              $region48: #{lpips_distance_sampler_forward.10} parent=35 // pred_check
                _
              $region49: #{lpips_distance_sampler_forward.10} parent=35 // pred_check_branch
                %198 = sbr.rel (0) target = $region51
              $region50: #{lpips_distance_sampler_forward.10} parent=35 // pred_region
                loop: start=0, step=1, limit=1
                $region52: #{lpips_distance_sampler_forward.10} parent=50 // loop_pre_header
                  _
                $region53: #{lpips_distance_sampler_forward.10} parent=50 // loop_header
                  %s200 = sphi 0, %s204
                  %p201 = scmp.ge.s32.totalorder %s200, 1
                  %s205 = sphi %s163, %s163
                  %s206 = sphi %s161, %s161
                $region54: #{lpips_distance_sampler_forward.10} parent=50 // loop_header_branch
                  %203 = sbr.rel (%p201) target = $region58
                $region55: #{lpips_distance_sampler_forward.10} parent=50 // loop_body
                  _
                $region56: #{lpips_distance_sampler_forward.10} parent=50 // loop_footer
                  %s204 = sadd.s32 1, %s200
                $region57: #{lpips_distance_sampler_forward.10} parent=50 // loop_footer_branch
                  %199 = sbr.rel target = $region53
                $region58: #{lpips_distance_sampler_forward.10} parent=50 // loop_exit
                  _
                loop: start=0, step=1, limit=1
                $region59: #{lpips_distance_sampler_forward.10} parent=50 // loop_pre_header
                  _
                $region60: #{lpips_distance_sampler_forward.10} parent=50 // loop_header
                  %s209 = sphi 0, %s213
                  %p210 = scmp.ge.s32.totalorder %s209, 1
                  %s214 = sphi %s163, %s163
                  %s215 = sphi %s161, %s161
                $region61: #{lpips_distance_sampler_forward.10} parent=50 // loop_header_branch
                  %212 = sbr.rel (%p210) target = $region65
                $region62: #{lpips_distance_sampler_forward.10} parent=50 // loop_body
                  %v216 = vld [vmem:[%s214] sm:$0xf]
                  %217 = vst [vmem:[%s215] sm:$0xf] %v216
                  %v218 = vld [vmem:[%s214 + $0x8] sm:$0xf]
                  %219 = vst [vmem:[%s215 + $0x4] sm:$0xf] %v218
                  %v220 = vld [vmem:[%s214 + $0x10] sm:$0xf]
                  %221 = vst [vmem:[%s215 + $0x8] sm:$0xf] %v220
                  %v222 = vld [vmem:[%s214 + $0x18] sm:$0xf]
                  %223 = vst [vmem:[%s215 + $0xc] sm:$0xf] %v222
                  %v224 = vld [vmem:[%s214 + $0x20] sm:$0xf]
                  %225 = vst [vmem:[%s215 + $0x10] sm:$0xf] %v224
                  %v226 = vld [vmem:[%s214 + $0x28] sm:$0xf]
                  %227 = vst [vmem:[%s215 + $0x14] sm:$0xf] %v226
                  %v228 = vld [vmem:[%s214 + $0x30] sm:$0xf]
                  %229 = vst [vmem:[%s215 + $0x18] sm:$0xf] %v228
                  %v230 = vld [vmem:[%s214 + $0x38] sm:$0xf]
                  %231 = vst [vmem:[%s215 + $0x1c] sm:$0xf] %v230
                  %v232 = vld [vmem:[%s214 + $0x40] sm:$0xf]
                  %233 = vst [vmem:[%s215 + $0x20] sm:$0xf] %v232
                $region63: #{lpips_distance_sampler_forward.10} parent=50 // loop_footer
                  %s213 = sadd.s32 1, %s209
                $region64: #{lpips_distance_sampler_forward.10} parent=50 // loop_footer_branch
                  %208 = sbr.rel target = $region60
                $region65: #{lpips_distance_sampler_forward.10} parent=50 // loop_exit
                  _
              $region51: #{lpips_distance_sampler_forward.10} parent=35 // pred_fallthru
                _
            $region36: #{lpips_distance_sampler_forward.10} parent=31 // pred_fallthru
              _
            // Predicated region
            $region37: #{lpips_distance_sampler_forward.10} parent=31 // pred_check
              _
            $region38: #{lpips_distance_sampler_forward.10} parent=31 // pred_check_branch
              %169 = sbr.rel (0) target = $region40
            $region39: #{lpips_distance_sampler_forward.10} parent=31 // pred_region
              loop: start=0, step=1, limit=1
              $region41: #{lpips_distance_sampler_forward.10} parent=39 // loop_pre_header
                _
              $region42: #{lpips_distance_sampler_forward.10} parent=39 // loop_header
                %s172 = sphi 0, %s176
                %p173 = scmp.ge.s32.totalorder %s172, 1
                %s177 = sphi %s163, %s163
                %s178 = sphi %s161, %s161
              $region43: #{lpips_distance_sampler_forward.10} parent=39 // loop_header_branch
                %175 = sbr.rel (%p173) target = $region47
              $region44: #{lpips_distance_sampler_forward.10} parent=39 // loop_body
                %v179 = vld [vmem:[%s177] sm:$0xf]
                %180 = vst [vmem:[%s178] sm:$0xf] %v179
                %v181 = vld [vmem:[%s177 + $0x8] sm:$0xf]
                %182 = vst [vmem:[%s178 + $0x4] sm:$0xf] %v181
                %v183 = vld [vmem:[%s177 + $0x10] sm:$0xf]
                %184 = vst [vmem:[%s178 + $0x8] sm:$0xf] %v183
                %v185 = vld [vmem:[%s177 + $0x18] sm:$0xf]
                %186 = vst [vmem:[%s178 + $0xc] sm:$0xf] %v185
                %v187 = vld [vmem:[%s177 + $0x20] sm:$0xf]
                %188 = vst [vmem:[%s178 + $0x10] sm:$0xf] %v187
                %v189 = vld [vmem:[%s177 + $0x28] sm:$0xf]
                %190 = vst [vmem:[%s178 + $0x14] sm:$0xf] %v189
                %v191 = vld [vmem:[%s177 + $0x30] sm:$0xf]
                %192 = vst [vmem:[%s178 + $0x18] sm:$0xf] %v191
                %v193 = vld [vmem:[%s177 + $0x38] sm:$0xf]
                %194 = vst [vmem:[%s178 + $0x1c] sm:$0xf] %v193
                %v195 = vld [vmem:[%s177 + $0x40] sm:$0xf]
                %196 = vst [vmem:[%s178 + $0x20] sm:$0xf] %v195
              $region45: #{lpips_distance_sampler_forward.10} parent=39 // loop_footer
                %s176 = sadd.s32 1, %s172
              $region46: #{lpips_distance_sampler_forward.10} parent=39 // loop_footer_branch
                %171 = sbr.rel target = $region42
              $region47: #{lpips_distance_sampler_forward.10} parent=39 // loop_exit
                _
            $region40: #{lpips_distance_sampler_forward.10} parent=31 // pred_fallthru
              _
          $region32: #{lpips_distance_sampler_forward.10} parent=27 // pred_fallthru
            _
          %234 = vnop
        $region28: #{lpips_distance_sampler_forward.10} parent=23 // pred_fallthru
          _
        // Predicated region
        $region66: #{lpips_distance_sampler_forward.10} parent=23 // pred_check
          %p235 = pneg %p98
        $region67: #{lpips_distance_sampler_forward.10} parent=23 // pred_check_branch
          %237 = sbr.rel (%p235) target = $region69
        $region68: #{lpips_distance_sampler_forward.10} parent=23 // pred_region
          %p238 = scmp.lt.s32.totalorder %s10, 1
          %s239 = scalar_select %p238, %s10, 1
          %s240 = scalar_lea.vmem %s3, %s239
        $region69: #{lpips_distance_sampler_forward.10} parent=23 // pred_fallthru
          _
      $region24: #{lpips_distance_sampler_forward.10} parent=5 // pred_fallthru
        _
      %p241 = scmp.le.s32.totalorder 1, %s10
      %p242 = scmp.lt.s32.totalorder %s10, 3
      %p243 = pnand %p241, %p242
      %p244 = pneg %p243
      // Predicated region
      $region70: #{lpips_distance_sampler_forward.10} parent=5 // pred_check
        _
      $region71: #{lpips_distance_sampler_forward.10} parent=5 // pred_check_branch
        %246 = sbr.rel (%p243) target = $region73
      $region72: #{lpips_distance_sampler_forward.10} parent=5 // pred_region
        %s247 = ssub.s32 %s10, 1
        %s248 = sand.u32 %s23, 1
        %s249 = sand.u32 %s23, 1
        %s250 = smul.addr %s249, 36
        %s251 = scalar_lea.vmem [#allocation2], %s250
        // Predicated region
        $region74: #{lpips_distance_sampler_forward.10} parent=72 // pred_check
          %p252 = pneg %p36
        $region75: #{lpips_distance_sampler_forward.10} parent=72 // pred_check_branch
          %254 = sbr.rel (%p252) target = $region77
        $region76: #{lpips_distance_sampler_forward.10} parent=72 // pred_region
          _
        $region77: #{lpips_distance_sampler_forward.10} parent=72 // pred_fallthru
          _
        %s255 = sand.u32 %s23, 1
        %s256 = sand.u32 %s23, 1
        %s257 = smul.addr %s256, 36
        %s258 = scalar_lea.vmem [#allocation2], %s257
        %p259 = pneg %p36
        %p260 = pneg %p33
        %p261 = pneg %p57
        %p262 = pneg %p54
        %p263 = pneg %p78
        %p264 = pneg %p75
        %p265 = scmp.lt.s32.totalorder %s15, 1
        %s266 = scalar_select %p265, %s15, 1
        %s267 = scalar_lea.vmem %s3, %s266
        %p268 = pneg %p104
        %p269 = pneg %p101
        %p270 = pneg %p130
        %p271 = pneg %p127
        %p272 = scmp.lt.s32.totalorder %s15, 1
        %s273 = scalar_select %p272, %s15, 1
        %s274 = smul.addr %s273, 8
        %s275 = scalar_lea.vmem %s4, %s274
        %p276 = scmp.lt.s32.totalorder %s15, 1
        %s277 = scalar_select %p276, %s15, 1
        %s278 = scalar_lea.vmem %s3, %s277
        %p279 = scmp.lt.s32.totalorder %s15, 1
        %s280 = scalar_select %p279, %s15, 1
        %s281 = smul.addr %s280, 8
        %s282 = scalar_lea.vmem %s4, %s281
        %v284 = vld [vmem:[%s1] sm:$0xf]
        %v285 = vld [vmem:[%s251] sm:$0xf]
        %v286 = vld [vmem:[%s251 + $0x4] sm:$0xf]
        %v287 = vld [vmem:[%s251 + $0x8] sm:$0xf]
        %v288 = vld [vmem:[%s251 + $0xc] sm:$0xf]
        %v289 = vld [vmem:[%s251 + $0x10] sm:$0xf]
        %v290 = vld [vmem:[%s251 + $0x14] sm:$0xf]
        %v291 = vld [vmem:[%s251 + $0x18] sm:$0xf]
        %v292 = vld [vmem:[%s251 + $0x1c] sm:$0xf]
        %v293 = vld [vmem:[%s251 + $0x20] sm:$0xf]
        %v294 = vld [vmem:[%s2] sm:$0xff]
        %296 = vset.pattern.permute.xlu0 0
        %297 = vperm.xlu0 %296, %v294
        %v298 = vpop.permute.xlu0 %297
        %v309 = vunpack.c.l.b16 %v285
        %v310 = vunpack.c.l.b16 %v286
        %v311 = vunpack.c.l.b16 %v287
        %v312 = vunpack.c.l.b16 %v288
        %v313 = vunpack.c.l.b16 %v289
        %v314 = vunpack.c.l.b16 %v290
        %v315 = vunpack.c.l.b16 %v291
        %v316 = vunpack.c.l.b16 %v292
        %v317 = vunpack.c.l.b16 %v293
        %v318 = vpack.c.b16 %v310, %v309
        %v319 = vpack.c.b16 %v312, %v311
        %v320 = vpack.c.b16 %v314, %v313
        %v321 = vpack.c.b16 %v316, %v315
        %v322 = vpack.c.b16 %v317, %v317
        %vm327 = vcmask 588800
        %v329 = vsel %vm327, %v284, 0
        %vm331 = vcmask 1043456
        %v333 = vsel %vm331, %v322, 0
        %335 = vmatprep.subr.bf16.mxu0 0
        %336 = vmatpush1.bf16.msra.mxu0 %v318
        %337 = vmatprep.subr.bf16.mxu0 0
        %338 = vmatpush1.bf16.msra.mxu0 %v319
        %339 = vmatprep.subr.bf16.mxu0 0
        %340 = vmatpush1.bf16.msra.mxu0 %v320
        %341 = vmatprep.subr.bf16.mxu0 0
        %342 = vmatpush1.bf16.msra.mxu0 %v321
        %343 = vmatprep.subr.bf16.mxu0 0
        %344 = vmatpush1.bf16.msra.mxu0 %v333
        %345 = vmatprep.subr.bf16.mxu0 0
        %346 = vmatpush1.bf16.msra.mxu0 0
        %347 = vmatprep.subr.bf16.mxu0 0
        %348 = vmatpush1.bf16.msra.mxu0 0
        %349 = vmatprep.subr.bf16.mxu0 0
        %350 = vmatpush1.bf16.msra.mxu0 0
        %351 = vmatprep.subr.bf16.mxu0 0
        %352 = vmatpush1.bf16.msra.mxu0 0
        %353 = vmatprep.subr.bf16.mxu0 0
        %354 = vmatpush1.bf16.msra.mxu0 0
        %355 = vmatprep.subr.bf16.mxu0 0
        %356 = vmatpush1.bf16.msra.mxu0 0
        %357 = vmatprep.subr.bf16.mxu0 0
        %358 = vmatpush1.bf16.msra.mxu0 0
        %359 = vmatprep.subr.bf16.mxu0 0
        %360 = vmatpush1.bf16.msra.mxu0 0
        %361 = vmatprep.subr.bf16.mxu0 0
        %362 = vmatpush1.bf16.msra.mxu0 0
        %363 = vmatprep.subr.bf16.mxu0 0
        %364 = vmatpush1.bf16.msra.mxu0 0
        %365 = vmatprep.subr.bf16.mxu0 0
        %366 = vmatpush1.bf16.msra.mxu0 0
        %367 = vmatprep.mubr.bf16.mxu0 0
        %368 = vmatmul.mubr.bf16.gmra.mrb[0].mxu0 %v329
        %v369 = vpop.f32.mrb[0].mxu0
        %v370 = vadd.f32 %v298, %v369
        %v371 = vpop.f32.mrb[0].mxu0
        %v372 = vpop.f32.mrb[0].mxu0
        %v373 = vpop.f32.mrb[0].mxu0
        %374 = vdwg.mxu0
        %v375 = vld [vmem:[%s278] sm:$0x1]
        %v377 = vlaneseq
        %v378 = vshrl.u32 %v377, 7
        %v379 = vsub.s32 0, %v378
        %v380 = vrot.slane %v375, %v379
        %v382 = vadd.f32 %v370, %v380
        %vm383 = vcmp.ge.f32.partialorder %v382, 0.0
        %v384 = vmul.f32 %v382, 0.2
        %v385 = vsel %vm383, %v382, %v384
        %v386 = vmul.f32 %v385, 1.4142135
        %387 = vst [vmem:[%s282] sm:$0xff] %v386
        %p388 = scmp.lt.s32.totalorder %s15, 1
        %s389 = scalar_select %p388, %s15, 1
        %s390 = smul.addr %s389, 8
        %s391 = scalar_lea.vmem %s4, %s390
        // Predicated region
        $region78: #{lpips_distance_sampler_forward.10} parent=72 // pred_check
          %p392 = pneg %p127
        $region79: #{lpips_distance_sampler_forward.10} parent=72 // pred_check_branch
          %394 = sbr.rel (%p392) target = $region81
        $region80: #{lpips_distance_sampler_forward.10} parent=72 // pred_region
          _
        $region81: #{lpips_distance_sampler_forward.10} parent=72 // pred_fallthru
          _
      $region73: #{lpips_distance_sampler_forward.10} parent=5 // pred_fallthru
        _
      %p395 = scmp.le.s32.totalorder 2, %s10
      // Predicated region
      $region82: #{lpips_distance_sampler_forward.10} parent=5 // pred_check
        %p396 = pneg %p395
      $region83: #{lpips_distance_sampler_forward.10} parent=5 // pred_check_branch
        %398 = sbr.rel (%p396) target = $region85
      $region84: #{lpips_distance_sampler_forward.10} parent=5 // pred_region
        %s399 = ssub.s32 %s10, 2
        // Predicated region
        $region86: #{lpips_distance_sampler_forward.10} parent=84 // pred_check
          %p400 = pneg %p133
        $region87: #{lpips_distance_sampler_forward.10} parent=84 // pred_check_branch
          %402 = sbr.rel (%p400) target = $region89
        $region88: #{lpips_distance_sampler_forward.10} parent=84 // pred_region
          %p403 = scmp.lt.s32.totalorder %s16, 1
          %s404 = scalar_select %p403, %s16, 1
          %s405 = smul.addr %s404, 8
          %s406 = scalar_lea.vmem %s4, %s405
        $region89: #{lpips_distance_sampler_forward.10} parent=84 // pred_fallthru
          _
      $region85: #{lpips_distance_sampler_forward.10} parent=5 // pred_fallthru
        _
    $region6: #{lpips_distance_sampler_forward.10} parent=1 // loop_footer
      %s14 = sadd.s32 1, %s10
    $region7: #{lpips_distance_sampler_forward.10} parent=1 // loop_footer_branch
      %9 = sbr.rel target = $region3
    $region8: #{lpips_distance_sampler_forward.10} parent=1 // loop_exit
      _

// kernel: lpips_distance_sampler_forward.11
$region0: #{lpips_distance_sampler_forward.11}
  #allocation0 [shape = 'u32[]', space=smem, size = 0x4, offset = 0x4, fixed_abs, tag = 'smem constant byte address 0x4 - core index']
  #allocation1 [shape = 'u32[144,128]{1,0:T(1,128)}', space=vmem, size = 0x12000, scoped, tag = 'internal scratch']
  %s0 = inlined_call_operand.vmem [shape: bf16[72,1024], index: 0, kind: input, shape index: {}]
  %s1 = inlined_call_operand.vmem [shape: bf16[8,72], index: 1, kind: input, shape index: {}]
  %s2 = inlined_call_operand.vmem [shape: f32[8,1], index: 2, kind: input, shape index: {}]
  %s3 = inlined_call_operand.vmem [shape: f32[1,1024], index: 3, kind: input, shape index: {}]
  %s4 = inlined_call_operand.vmem [shape: f32[8,1024], index: 4, kind: output, shape index: {}]
  %s5 = sld [smem:[#allocation0]]
  $region72: #{lpips_distance_sampler_forward.11} parent=0
    _
  %s7 = ssub.s32 1, %s5
  %s8 = scalar_select 0, %s7, %s5
  $region1: #{lpips_distance_sampler_forward.11} parent=0
    #allocation2 [shape = 'u8[147456]{0}', space=vmem, size = 0x24000, scoped, tag = 'input window, operand 0']
    loop: start=0, step=1, limit=4
    $region2: #{lpips_distance_sampler_forward.11} parent=1 // loop_pre_header
      _
    $region3: #{lpips_distance_sampler_forward.11} parent=1 // loop_header
      %s10 = sphi 0, %s14
      %p11 = scmp.ge.s32.totalorder %s10, 4
      %s20 = sphi 0, %s22
      %s23 = sphi 0, %s20
      %s24 = sphi 0, %s23
      %s40 = sphi 0, %s24
      %s44 = sphi 0, %s44
      %s46 = sphi 0, %s44
      %s47 = sphi 0, %s46
      %s61 = sphi 0, %s47
      %s65 = sphi 0, %s65
      %s67 = sphi 0, %s65
      %s68 = sphi 0, %s67
      %s82 = sphi 0, %s68
      %s88 = sphi 0, %s90
      %s91 = sphi 0, %s88
      %s92 = sphi 0, %s91
      %s108 = sphi 0, %s92
      %s114 = sphi 0, %s116
      %s117 = sphi 0, %s114
      %s118 = sphi 0, %s117
      %s134 = sphi 0, %s118
    $region4: #{lpips_distance_sampler_forward.11} parent=1 // loop_header_branch
      %13 = sbr.rel (%p11) target = $region8
    $region5: #{lpips_distance_sampler_forward.11} parent=1 // loop_body
      %s15 = ssub.s32 %s10, 1
      %s16 = ssub.s32 %s10, 2
      %s17 = sadd.s32 %s10, 1
      %s18 = ssub.s32 %s10, %s17
      %p19 = scmp.eq.s32.totalorder %s18, 0
      %s21 = sadd.s32 %s20, 1
      %s22 = scalar_select %p19, %s20, %s21
      %p25 = pneg %p19
      %p26 = scmp.eq.s32.totalorder %s10, 1
      %p27 = por %p25, %p26
      %p28 = scmp.ne.s32.totalorder %s20, %s23
      %p29 = scmp.eq.s32.totalorder %s10, 0
      %p30 = por %p28, %p29
      %p31 = scmp.ne.s32.totalorder %s20, %s23
      %p32 = scmp.eq.s32.totalorder %s15, 1
      %p33 = por %p31, %p32
      %p34 = scmp.ne.s32.totalorder %s23, %s24
      %p35 = scmp.eq.s32.totalorder %s15, 0
      %p36 = por %p34, %p35
      %p37 = scmp.ne.s32.totalorder %s23, %s24
      %p38 = scmp.eq.s32.totalorder %s16, 1
      %p39 = por %p37, %p38
      %p41 = scmp.ne.s32.totalorder %s24, %s40
      %p42 = scmp.eq.s32.totalorder %s16, 0
      %p43 = por %p41, %p42
      %s45 = sadd.s32 %s44, 1
      %p48 = scmp.eq.s32.totalorder %s10, 1
      %p49 = scmp.ne.s32.totalorder %s44, %s46
      %p50 = scmp.eq.s32.totalorder %s10, 0
      %p51 = por %p49, %p50
      %p52 = scmp.ne.s32.totalorder %s44, %s46
      %p53 = scmp.eq.s32.totalorder %s15, 1
      %p54 = por %p52, %p53
      %p55 = scmp.ne.s32.totalorder %s46, %s47
      %p56 = scmp.eq.s32.totalorder %s15, 0
      %p57 = por %p55, %p56
      %p58 = scmp.ne.s32.totalorder %s46, %s47
      %p59 = scmp.eq.s32.totalorder %s16, 1
      %p60 = por %p58, %p59
      %p62 = scmp.ne.s32.totalorder %s47, %s61
      %p63 = scmp.eq.s32.totalorder %s16, 0
      %p64 = por %p62, %p63
      %s66 = sadd.s32 %s65, 1
      %p69 = scmp.eq.s32.totalorder %s10, 1
      %p70 = scmp.ne.s32.totalorder %s65, %s67
      %p71 = scmp.eq.s32.totalorder %s10, 0
      %p72 = por %p70, %p71
      %p73 = scmp.ne.s32.totalorder %s65, %s67
      %p74 = scmp.eq.s32.totalorder %s15, 1
      %p75 = por %p73, %p74
      %p76 = scmp.ne.s32.totalorder %s67, %s68
      %p77 = scmp.eq.s32.totalorder %s15, 0
      %p78 = por %p76, %p77
      %p79 = scmp.ne.s32.totalorder %s67, %s68
      %p80 = scmp.eq.s32.totalorder %s16, 1
      %p81 = por %p79, %p80
      %p83 = scmp.ne.s32.totalorder %s68, %s82
      %p84 = scmp.eq.s32.totalorder %s16, 0
      %p85 = por %p83, %p84
      %s86 = ssub.s32 %s10, %s17
      %p87 = scmp.eq.s32.totalorder %s86, 0
      %s89 = sadd.s32 %s88, 1
      %s90 = scalar_select %p87, %s88, %s89
      %p93 = pneg %p87
      %p94 = scmp.eq.s32.totalorder %s10, 1
      %p95 = por %p93, %p94
      %p96 = scmp.ne.s32.totalorder %s88, %s91
      %p97 = scmp.eq.s32.totalorder %s10, 0
      %p98 = por %p96, %p97
      %p99 = scmp.ne.s32.totalorder %s88, %s91
      %p100 = scmp.eq.s32.totalorder %s15, 1
      %p101 = por %p99, %p100
      %p102 = scmp.ne.s32.totalorder %s91, %s92
      %p103 = scmp.eq.s32.totalorder %s15, 0
      %p104 = por %p102, %p103
      %p105 = scmp.ne.s32.totalorder %s91, %s92
      %p106 = scmp.eq.s32.totalorder %s16, 1
      %p107 = por %p105, %p106
      %p109 = scmp.ne.s32.totalorder %s92, %s108
      %p110 = scmp.eq.s32.totalorder %s16, 0
      %p111 = por %p109, %p110
      %s112 = ssub.s32 %s10, %s17
      %p113 = scmp.eq.s32.totalorder %s112, 0
      %s115 = sadd.s32 %s114, 1
      %s116 = scalar_select %p113, %s114, %s115
      %p119 = pneg %p113
      %p120 = scmp.eq.s32.totalorder %s10, 1
      %p121 = por %p119, %p120
      %p122 = scmp.ne.s32.totalorder %s114, %s117
      %p123 = scmp.eq.s32.totalorder %s10, 0
      %p124 = por %p122, %p123
      %p125 = scmp.ne.s32.totalorder %s114, %s117
      %p126 = scmp.eq.s32.totalorder %s15, 1
      %p127 = por %p125, %p126
      %p128 = scmp.ne.s32.totalorder %s117, %s118
      %p129 = scmp.eq.s32.totalorder %s15, 0
      %p130 = por %p128, %p129
      %p131 = scmp.ne.s32.totalorder %s117, %s118
      %p132 = scmp.eq.s32.totalorder %s16, 1
      %p133 = por %p131, %p132
      %p135 = scmp.ne.s32.totalorder %s118, %s134
      %p136 = scmp.eq.s32.totalorder %s16, 0
      %p137 = por %p135, %p136
      %p138 = scmp.le.s32.totalorder 1, %s10
      %p139 = scmp.lt.s32.totalorder %s10, 3
      %p140 = pnand %p138, %p139
      %p141 = pneg %p140
      // Predicated region
      $region9: #{lpips_distance_sampler_forward.11} parent=5 // pred_check
        _
      $region10: #{lpips_distance_sampler_forward.11} parent=5 // pred_check_branch
        %143 = sbr.rel (%p140) target = $region12
      $region11: #{lpips_distance_sampler_forward.11} parent=5 // pred_region
        %s144 = ssub.s32 %s10, 1
        // Predicated region
        $region13: #{lpips_distance_sampler_forward.11} parent=11 // pred_check
          %p145 = pneg %p57
        $region14: #{lpips_distance_sampler_forward.11} parent=11 // pred_check_branch
          %147 = sbr.rel (%p145) target = $region16
        $region15: #{lpips_distance_sampler_forward.11} parent=11 // pred_region
          _
        $region16: #{lpips_distance_sampler_forward.11} parent=11 // pred_fallthru
          _
        // Predicated region
        $region17: #{lpips_distance_sampler_forward.11} parent=11 // pred_check
          %p148 = pneg %p78
        $region18: #{lpips_distance_sampler_forward.11} parent=11 // pred_check_branch
          %150 = sbr.rel (%p148) target = $region20
        $region19: #{lpips_distance_sampler_forward.11} parent=11 // pred_region
          _
        $region20: #{lpips_distance_sampler_forward.11} parent=11 // pred_fallthru
          _
      $region12: #{lpips_distance_sampler_forward.11} parent=5 // pred_fallthru
        _
      %p151 = scmp.lt.s32.totalorder %s10, 2
      // Predicated region
      $region21: #{lpips_distance_sampler_forward.11} parent=5 // pred_check
        %p152 = pneg %p151
      $region22: #{lpips_distance_sampler_forward.11} parent=5 // pred_check_branch
        %154 = sbr.rel (%p152) target = $region24
      $region23: #{lpips_distance_sampler_forward.11} parent=5 // pred_region
        // Predicated region
        $region25: #{lpips_distance_sampler_forward.11} parent=23 // pred_check
          %p155 = pneg %p30
        $region26: #{lpips_distance_sampler_forward.11} parent=23 // pred_check_branch
          %157 = sbr.rel (%p155) target = $region28
        $region27: #{lpips_distance_sampler_forward.11} parent=23 // pred_region
          %s158 = sand.u32 %s20, 1
          %s159 = sand.u32 %s20, 1
          %s160 = smul.addr %s159, 144
          %s161 = scalar_lea.vmem [#allocation2], %s160
          %s162 = smul.u32 4, %s10
          %s163 = smul.addr %s162, 4
          %s164 = scalar_lea.vmem %s0, %s163
          // Predicated region
          $region29: #{lpips_distance_sampler_forward.11} parent=27 // pred_check
            _
          $region30: #{lpips_distance_sampler_forward.11} parent=27 // pred_check_branch
            %166 = sbr.rel (0) target = $region32
          $region31: #{lpips_distance_sampler_forward.11} parent=27 // pred_region
            // Predicated region
            $region33: #{lpips_distance_sampler_forward.11} parent=31 // pred_check
              _
            $region34: #{lpips_distance_sampler_forward.11} parent=31 // pred_check_branch
              %168 = sbr.rel (0) target = $region36
            $region35: #{lpips_distance_sampler_forward.11} parent=31 // pred_region
              loop: start=0, step=1, limit=1
              $region37: #{lpips_distance_sampler_forward.11} parent=35 // loop_pre_header
                _
              $region38: #{lpips_distance_sampler_forward.11} parent=35 // loop_header
                %s170 = sphi 0, %s174
                %p171 = scmp.ge.s32.totalorder %s170, 1
                %s175 = sphi %s164, %s164
                %s176 = sphi %s161, %s161
              $region39: #{lpips_distance_sampler_forward.11} parent=35 // loop_header_branch
                %173 = sbr.rel (%p171) target = $region43
              $region40: #{lpips_distance_sampler_forward.11} parent=35 // loop_body
                %v177 = vld [vmem:[%s175] sm:$0xff]
                %178 = vst [vmem:[%s176] sm:$0xff] %v177
                %v179 = vld [vmem:[%s175 + $0x8] sm:$0xff]
                %180 = vst [vmem:[%s176 + $0x8] sm:$0xff] %v179
                %v181 = vld [vmem:[%s175 + $0x20] sm:$0xff]
                %182 = vst [vmem:[%s176 + $0x10] sm:$0xff] %v181
                %v183 = vld [vmem:[%s175 + $0x28] sm:$0xff]
                %184 = vst [vmem:[%s176 + $0x18] sm:$0xff] %v183
                %v185 = vld [vmem:[%s175 + $0x40] sm:$0xff]
                %186 = vst [vmem:[%s176 + $0x20] sm:$0xff] %v185
                %v187 = vld [vmem:[%s175 + $0x48] sm:$0xff]
                %188 = vst [vmem:[%s176 + $0x28] sm:$0xff] %v187
                %v189 = vld [vmem:[%s175 + $0x60] sm:$0xff]
                %190 = vst [vmem:[%s176 + $0x30] sm:$0xff] %v189
                %v191 = vld [vmem:[%s175 + $0x68] sm:$0xff]
                %192 = vst [vmem:[%s176 + $0x38] sm:$0xff] %v191
                %v193 = vld [vmem:[%s175 + $0x80] sm:$0xff]
                %194 = vst [vmem:[%s176 + $0x40] sm:$0xff] %v193
                %v195 = vld [vmem:[%s175 + $0x88] sm:$0xff]
                %196 = vst [vmem:[%s176 + $0x48] sm:$0xff] %v195
                %v197 = vld [vmem:[%s175 + $0xa0] sm:$0xff]
                %198 = vst [vmem:[%s176 + $0x50] sm:$0xff] %v197
                %v199 = vld [vmem:[%s175 + $0xa8] sm:$0xff]
                %200 = vst [vmem:[%s176 + $0x58] sm:$0xff] %v199
                %v201 = vld [vmem:[%s175 + $0xc0] sm:$0xff]
                %202 = vst [vmem:[%s176 + $0x60] sm:$0xff] %v201
                %v203 = vld [vmem:[%s175 + $0xc8] sm:$0xff]
                %204 = vst [vmem:[%s176 + $0x68] sm:$0xff] %v203
                %v205 = vld [vmem:[%s175 + $0xe0] sm:$0xff]
                %206 = vst [vmem:[%s176 + $0x70] sm:$0xff] %v205
                %v207 = vld [vmem:[%s175 + $0xe8] sm:$0xff]
                %208 = vst [vmem:[%s176 + $0x78] sm:$0xff] %v207
                %v209 = vld [vmem:[%s175 + $0x100] sm:$0xff]
                %210 = vst [vmem:[%s176 + $0x80] sm:$0xff] %v209
                %v211 = vld [vmem:[%s175 + $0x108] sm:$0xff]
                %212 = vst [vmem:[%s176 + $0x88] sm:$0xff] %v211
              $region41: #{lpips_distance_sampler_forward.11} parent=35 // loop_footer
                %s174 = sadd.s32 1, %s170
              $region42: #{lpips_distance_sampler_forward.11} parent=35 // loop_footer_branch
                %169 = sbr.rel target = $region38
              $region43: #{lpips_distance_sampler_forward.11} parent=35 // loop_exit
                _
            $region36: #{lpips_distance_sampler_forward.11} parent=31 // pred_fallthru
              _
            // Predicated region
            $region44: #{lpips_distance_sampler_forward.11} parent=31 // pred_check
              _
            $region45: #{lpips_distance_sampler_forward.11} parent=31 // pred_check_branch
              %214 = sbr.rel target = $region47
            $region46: #{lpips_distance_sampler_forward.11} parent=31 // pred_region
              _
            $region47: #{lpips_distance_sampler_forward.11} parent=31 // pred_fallthru
              _
          $region32: #{lpips_distance_sampler_forward.11} parent=27 // pred_fallthru
            _
          %215 = vnop
        $region28: #{lpips_distance_sampler_forward.11} parent=23 // pred_fallthru
          _
        // Predicated region
        $region48: #{lpips_distance_sampler_forward.11} parent=23 // pred_check
          %p216 = pneg %p98
        $region49: #{lpips_distance_sampler_forward.11} parent=23 // pred_check_branch
          %218 = sbr.rel (%p216) target = $region51
        $region50: #{lpips_distance_sampler_forward.11} parent=23 // pred_region
          %s219 = smul.u32 4, %s10
          %p220 = scmp.lt.s32.totalorder %s219, 7
          %s221 = scalar_select %p220, %s219, 7
          %s222 = scalar_lea.vmem %s3, %s221
          %s223 = smul.u32 4, %s10
        $region51: #{lpips_distance_sampler_forward.11} parent=23 // pred_fallthru
          _
      $region24: #{lpips_distance_sampler_forward.11} parent=5 // pred_fallthru
        _
      %p224 = scmp.le.s32.totalorder 1, %s10
      %p225 = scmp.lt.s32.totalorder %s10, 3
      %p226 = pnand %p224, %p225
      %p227 = pneg %p226
      // Predicated region
      $region52: #{lpips_distance_sampler_forward.11} parent=5 // pred_check
        _
      $region53: #{lpips_distance_sampler_forward.11} parent=5 // pred_check_branch
        %229 = sbr.rel (%p226) target = $region55
      $region54: #{lpips_distance_sampler_forward.11} parent=5 // pred_region
        %s230 = ssub.s32 %s10, 1
        %s231 = sand.u32 %s23, 1
        %s232 = sand.u32 %s23, 1
        %s233 = smul.addr %s232, 144
        %s234 = scalar_lea.vmem [#allocation2], %s233
        // Predicated region
        $region56: #{lpips_distance_sampler_forward.11} parent=54 // pred_check
          %p235 = pneg %p36
        $region57: #{lpips_distance_sampler_forward.11} parent=54 // pred_check_branch
          %237 = sbr.rel (%p235) target = $region59
        $region58: #{lpips_distance_sampler_forward.11} parent=54 // pred_region
          _
        $region59: #{lpips_distance_sampler_forward.11} parent=54 // pred_fallthru
          _
        %s238 = sand.u32 %s23, 1
        %s239 = sand.u32 %s23, 1
        %s240 = smul.addr %s239, 144
        %s241 = scalar_lea.vmem [#allocation2], %s240
        %p242 = pneg %p36
        %p243 = pneg %p33
        %p244 = pneg %p57
        %p245 = pneg %p54
        %p246 = pneg %p78
        %p247 = pneg %p75
        %s248 = smul.u32 4, %s15
        %p249 = scmp.lt.s32.totalorder %s248, 7
        %s250 = scalar_select %p249, %s248, 7
        %s251 = scalar_lea.vmem %s3, %s250
        %p252 = pneg %p104
        %p253 = pneg %p101
        %p254 = pneg %p130
        %p255 = pneg %p127
        %s256 = smul.u32 4, %s15
        %p257 = scmp.lt.s32.totalorder %s256, 7
        %s258 = scalar_select %p257, %s256, 7
        %s259 = smul.addr %s258, 8
        %s260 = scalar_lea.vmem %s4, %s259
        %s261 = smul.u32 4, %s15
        %s262 = smul.u32 4, %s15
        %p263 = scmp.lt.s32.totalorder %s262, 7
        %s264 = scalar_select %p263, %s262, 7
        %s265 = scalar_lea.vmem %s3, %s264
        %s266 = smul.u32 4, %s15
        %s267 = smul.u32 4, %s15
        %p268 = scmp.lt.s32.totalorder %s267, 7
        %s269 = scalar_select %p268, %s267, 7
        %s270 = smul.addr %s269, 8
        %s271 = scalar_lea.vmem %s4, %s270
        %s272 = smul.u32 4, %s15
        %v274 = vld [vmem:[%s1] sm:$0xf]
        %v275 = vld [vmem:[%s234] sm:$0xff]
        %v276 = vld [vmem:[%s234 + $0x8] sm:$0xff]
        %v277 = vld [vmem:[%s234 + $0x10] sm:$0xff]
        %v278 = vld [vmem:[%s234 + $0x18] sm:$0xff]
        %v279 = vld [vmem:[%s234 + $0x20] sm:$0xff]
        %v280 = vld [vmem:[%s234 + $0x28] sm:$0xff]
        %v281 = vld [vmem:[%s234 + $0x30] sm:$0xff]
        %v282 = vld [vmem:[%s234 + $0x38] sm:$0xff]
        %v283 = vld [vmem:[%s234 + $0x40] sm:$0xff]
        %v284 = vld [vmem:[%s234 + $0x48] sm:$0xff]
        %v285 = vld [vmem:[%s234 + $0x50] sm:$0xff]
        %v286 = vld [vmem:[%s234 + $0x58] sm:$0xff]
        %v287 = vld [vmem:[%s234 + $0x60] sm:$0xff]
        %v288 = vld [vmem:[%s234 + $0x68] sm:$0xff]
        %v289 = vld [vmem:[%s234 + $0x70] sm:$0xff]
        %v290 = vld [vmem:[%s234 + $0x78] sm:$0xff]
        %v291 = vld [vmem:[%s234 + $0x80] sm:$0xff]
        %v292 = vld [vmem:[%s234 + $0x88] sm:$0xff]
        %v293 = vld [vmem:[%s2] sm:$0xff]
        %295 = vset.pattern.permute.xlu0 0
        %296 = vperm.xlu0 %295, %v293
        %v297 = vpop.permute.xlu0 %296
        %v317 = vunpack.c.l.b16 %v275
        %v318 = vunpack.c.h.b16 %v275
        %v319 = vunpack.c.l.b16 %v276
        %v320 = vunpack.c.h.b16 %v276
        %v321 = vunpack.c.l.b16 %v277
        %v322 = vunpack.c.h.b16 %v277
        %v323 = vunpack.c.l.b16 %v278
        %v324 = vunpack.c.h.b16 %v278
        %v325 = vunpack.c.l.b16 %v279
        %v326 = vunpack.c.h.b16 %v279
        %v327 = vunpack.c.l.b16 %v280
        %v328 = vunpack.c.h.b16 %v280
        %v329 = vunpack.c.l.b16 %v281
        %v330 = vunpack.c.h.b16 %v281
        %v331 = vunpack.c.l.b16 %v282
        %v332 = vunpack.c.h.b16 %v282
        %v333 = vunpack.c.l.b16 %v283
        %v334 = vunpack.c.h.b16 %v283
        %v335 = vunpack.c.l.b16 %v284
        %v336 = vunpack.c.h.b16 %v284
        %v337 = vunpack.c.l.b16 %v285
        %v338 = vunpack.c.h.b16 %v285
        %v339 = vunpack.c.l.b16 %v286
        %v340 = vunpack.c.h.b16 %v286
        %v341 = vunpack.c.l.b16 %v287
        %v342 = vunpack.c.h.b16 %v287
        %v343 = vunpack.c.l.b16 %v288
        %v344 = vunpack.c.h.b16 %v288
        %v345 = vunpack.c.l.b16 %v289
        %v346 = vunpack.c.h.b16 %v289
        %v347 = vunpack.c.l.b16 %v290
        %v348 = vunpack.c.h.b16 %v290
        %v349 = vunpack.c.l.b16 %v291
        %v350 = vunpack.c.h.b16 %v291
        %v351 = vunpack.c.l.b16 %v292
        %v352 = vunpack.c.h.b16 %v292
        %v353 = vpack.c.b16 %v321, %v317
        %v354 = vpack.c.b16 %v322, %v318
        %v355 = vpack.c.b16 %v323, %v319
        %v356 = vpack.c.b16 %v324, %v320
        %v357 = vpack.c.b16 %v329, %v325
        %v358 = vpack.c.b16 %v330, %v326
        %v359 = vpack.c.b16 %v331, %v327
        %v360 = vpack.c.b16 %v332, %v328
        %v361 = vpack.c.b16 %v337, %v333
        %v362 = vpack.c.b16 %v338, %v334
        %v363 = vpack.c.b16 %v339, %v335
        %v364 = vpack.c.b16 %v340, %v336
        %v365 = vpack.c.b16 %v345, %v341
        %v366 = vpack.c.b16 %v346, %v342
        %v367 = vpack.c.b16 %v347, %v343
        %v368 = vpack.c.b16 %v348, %v344
        %v369 = vpack.c.b16 %v349, %v349
        %v370 = vpack.c.b16 %v350, %v350
        %v371 = vpack.c.b16 %v351, %v351
        %v372 = vpack.c.b16 %v352, %v352
        %vm389 = vcmask 588800
        %v391 = vsel %vm389, %v274, 0
        %vm393 = vcmask 1043456
        %v395 = vsel %vm393, %v369, 0
        %v398 = vsel %vm393, %v370, 0
        %v401 = vsel %vm393, %v371, 0
        %v404 = vsel %vm393, %v372, 0
        %406 = vmatprep.subr.bf16.mxu0 %v354
        %407 = vmatpush1.bf16.msra.mxu0 %v353
        %408 = vmatprep.subr.bf16.mxu0 %v358
        %409 = vmatpush1.bf16.msra.mxu0 %v357
        %410 = vmatprep.subr.bf16.mxu0 %v362
        %411 = vmatpush1.bf16.msra.mxu0 %v361
        %412 = vmatprep.subr.bf16.mxu0 %v366
        %413 = vmatpush1.bf16.msra.mxu0 %v365
        %414 = vmatprep.subr.bf16.mxu0 %v398
        %415 = vmatpush1.bf16.msra.mxu0 %v395
        %416 = vmatprep.subr.bf16.mxu0 0
        %417 = vmatpush1.bf16.msra.mxu0 0
        %418 = vmatprep.subr.bf16.mxu0 0
        %419 = vmatpush1.bf16.msra.mxu0 0
        %420 = vmatprep.subr.bf16.mxu0 0
        %421 = vmatpush1.bf16.msra.mxu0 0
        %422 = vmatprep.subr.bf16.mxu0 0
        %423 = vmatpush1.bf16.msra.mxu0 0
        %424 = vmatprep.subr.bf16.mxu0 0
        %425 = vmatpush1.bf16.msra.mxu0 0
        %426 = vmatprep.subr.bf16.mxu0 0
        %427 = vmatpush1.bf16.msra.mxu0 0
        %428 = vmatprep.subr.bf16.mxu0 0
        %429 = vmatpush1.bf16.msra.mxu0 0
        %430 = vmatprep.subr.bf16.mxu0 0
        %431 = vmatpush1.bf16.msra.mxu0 0
        %432 = vmatprep.subr.bf16.mxu0 0
        %433 = vmatpush1.bf16.msra.mxu0 0
        %434 = vmatprep.subr.bf16.mxu0 0
        %435 = vmatpush1.bf16.msra.mxu0 0
        %436 = vmatprep.subr.bf16.mxu0 0
        %437 = vmatpush1.bf16.msra.mxu0 0
        %438 = vmatprep.mubr.bf16.mxu0 0
        %439 = vmatmul.mubr.bf16.gmra.mrb[0].mxu0 %v391
        %v440 = vpop.f32.mrb[0].mxu0
        %v441 = vadd.f32 %v297, %v440
        %v442 = vpop.f32.mrb[0].mxu0
        %v443 = vadd.f32 %v297, %v442
        %v444 = vpop.f32.mrb[0].mxu0
        %v445 = vpop.f32.mrb[0].mxu0
        %446 = vdwg.mxu0
        %447 = vmatprep.subr.bf16.mxu0 %v356
        %448 = vmatpush1.bf16.msra.mxu0 %v355
        %449 = vmatprep.subr.bf16.mxu0 %v360
        %450 = vmatpush1.bf16.msra.mxu0 %v359
        %451 = vmatprep.subr.bf16.mxu0 %v364
        %452 = vmatpush1.bf16.msra.mxu0 %v363
        %453 = vmatprep.subr.bf16.mxu0 %v368
        %454 = vmatpush1.bf16.msra.mxu0 %v367
        %455 = vmatprep.subr.bf16.mxu0 %v404
        %456 = vmatpush1.bf16.msra.mxu0 %v401
        %457 = vmatprep.subr.bf16.mxu0 0
        %458 = vmatpush1.bf16.msra.mxu0 0
        %459 = vmatprep.subr.bf16.mxu0 0
        %460 = vmatpush1.bf16.msra.mxu0 0
        %461 = vmatprep.subr.bf16.mxu0 0
        %462 = vmatpush1.bf16.msra.mxu0 0
        %463 = vmatprep.subr.bf16.mxu0 0
        %464 = vmatpush1.bf16.msra.mxu0 0
        %465 = vmatprep.subr.bf16.mxu0 0
        %466 = vmatpush1.bf16.msra.mxu0 0
        %467 = vmatprep.subr.bf16.mxu0 0
        %468 = vmatpush1.bf16.msra.mxu0 0
        %469 = vmatprep.subr.bf16.mxu0 0
        %470 = vmatpush1.bf16.msra.mxu0 0
        %471 = vmatprep.subr.bf16.mxu0 0
        %472 = vmatpush1.bf16.msra.mxu0 0
        %473 = vmatprep.subr.bf16.mxu0 0
        %474 = vmatpush1.bf16.msra.mxu0 0
        %475 = vmatprep.subr.bf16.mxu0 0
        %476 = vmatpush1.bf16.msra.mxu0 0
        %477 = vmatprep.subr.bf16.mxu0 0
        %478 = vmatpush1.bf16.msra.mxu0 0
        %479 = vmatprep.mubr.bf16.mxu0 0
        %480 = vmatmul.mubr.bf16.gmra.mrb[0].mxu0 %v391
        %v481 = vpop.f32.mrb[0].mxu0
        %v482 = vadd.f32 %v297, %v481
        %v483 = vpop.f32.mrb[0].mxu0
        %v484 = vadd.f32 %v297, %v483
        %v485 = vpop.f32.mrb[0].mxu0
        %v486 = vpop.f32.mrb[0].mxu0
        %487 = vdwg.mxu0
        %v488 = vld [vmem:[%s265] sm:$0xf]
        %v490 = vlaneseq
        %v491 = vshrl.u32 %v490, 7
        %v492 = vsub.s32 0, %v491
        %v493 = vrot.slane %v488, %v492
        %v494 = vlaneseq
        %v495 = vshrl.u32 %v494, 7
        %v496 = vsub.s32 1, %v495
        %v497 = vrot.slane %v488, %v496
        %v498 = vlaneseq
        %v499 = vshrl.u32 %v498, 7
        %v500 = vsub.s32 2, %v499
        %v501 = vrot.slane %v488, %v500
        %v502 = vlaneseq
        %v503 = vshrl.u32 %v502, 7
        %v504 = vsub.s32 3, %v503
        %v505 = vrot.slane %v488, %v504
        %v510 = vadd.f32 %v441, %v493
        %v511 = vadd.f32 %v443, %v497
        %v512 = vadd.f32 %v482, %v501
        %v513 = vadd.f32 %v484, %v505
        %vm514 = vcmp.ge.f32.partialorder %v510, 0.0
        %vm515 = vcmp.ge.f32.partialorder %v511, 0.0
        %vm516 = vcmp.ge.f32.partialorder %v512, 0.0
        %vm517 = vcmp.ge.f32.partialorder %v513, 0.0
        %v518 = vmul.f32 %v510, 0.2
        %v519 = vmul.f32 %v511, 0.2
        %v520 = vmul.f32 %v512, 0.2
        %v521 = vmul.f32 %v513, 0.2
        %v522 = vsel %vm514, %v510, %v518
        %v523 = vsel %vm515, %v511, %v519
        %v524 = vsel %vm516, %v512, %v520
        %v525 = vsel %vm517, %v513, %v521
        %v526 = vmul.f32 %v522, 1.4142135
        %v527 = vmul.f32 %v523, 1.4142135
        %v528 = vmul.f32 %v524, 1.4142135
        %v529 = vmul.f32 %v525, 1.4142135
        %530 = vst [vmem:[%s271] sm:$0xff] %v526
        %531 = vst [vmem:[%s271 + $0x8] sm:$0xff] %v527
        %532 = vst [vmem:[%s271 + $0x10] sm:$0xff] %v528
        %533 = vst [vmem:[%s271 + $0x18] sm:$0xff] %v529
        %s534 = smul.u32 4, %s15
        %p535 = scmp.lt.s32.totalorder %s534, 7
        %s536 = scalar_select %p535, %s534, 7
        %s537 = smul.addr %s536, 8
        %s538 = scalar_lea.vmem %s4, %s537
        // Predicated region
        $region60: #{lpips_distance_sampler_forward.11} parent=54 // pred_check
          %p539 = pneg %p127
        $region61: #{lpips_distance_sampler_forward.11} parent=54 // pred_check_branch
          %541 = sbr.rel (%p539) target = $region63
        $region62: #{lpips_distance_sampler_forward.11} parent=54 // pred_region
          %s542 = smul.u32 4, %s15
        $region63: #{lpips_distance_sampler_forward.11} parent=54 // pred_fallthru
          _
      $region55: #{lpips_distance_sampler_forward.11} parent=5 // pred_fallthru
        _
      %p543 = scmp.le.s32.totalorder 2, %s10
      // Predicated region
      $region64: #{lpips_distance_sampler_forward.11} parent=5 // pred_check
        %p544 = pneg %p543
      $region65: #{lpips_distance_sampler_forward.11} parent=5 // pred_check_branch
        %546 = sbr.rel (%p544) target = $region67
      $region66: #{lpips_distance_sampler_forward.11} parent=5 // pred_region
        %s547 = ssub.s32 %s10, 2
        // Predicated region
        $region68: #{lpips_distance_sampler_forward.11} parent=66 // pred_check
          %p548 = pneg %p133
        $region69: #{lpips_distance_sampler_forward.11} parent=66 // pred_check_branch
          %550 = sbr.rel (%p548) target = $region71
        $region70: #{lpips_distance_sampler_forward.11} parent=66 // pred_region
          %s551 = smul.u32 4, %s16
          %p552 = scmp.lt.s32.totalorder %s551, 7
          %s553 = scalar_select %p552, %s551, 7
          %s554 = smul.addr %s553, 8
          %s555 = scalar_lea.vmem %s4, %s554
        $region71: #{lpips_distance_sampler_forward.11} parent=66 // pred_fallthru
          _
      $region67: #{lpips_distance_sampler_forward.11} parent=5 // pred_fallthru
        _
    $region6: #{lpips_distance_sampler_forward.11} parent=1 // loop_footer
      %s14 = sadd.s32 1, %s10
    $region7: #{lpips_distance_sampler_forward.11} parent=1 // loop_footer_branch
      %9 = sbr.rel target = $region3
    $region8: #{lpips_distance_sampler_forward.11} parent=1 // loop_exit
      _

// kernel: lpips_distance_sampler_forward.12
$region0: #{lpips_distance_sampler_forward.12}
  #allocation0 [shape = 'u32[]', space=smem, size = 0x4, offset = 0x4, fixed_abs, tag = 'smem constant byte address 0x4 - core index']
  #allocation1 [shape = 'u32[144,128]{1,0:T(1,128)}', space=vmem, size = 0x12000, scoped, tag = 'internal scratch']
  #allocation2 [shape = 'f32[1,1]{1,0:T(1,128)S(1)}', space=vmem, size = 0x200, scoped, tag = 'scoped memory for lpips_distance_sampler_forward.12']
  %s0 = inlined_call_operand.vmem [shape: bf16[8,256], index: 0, kind: input, shape index: {}]
  %s1 = inlined_call_operand.vmem [shape: bf16[1,8], index: 1, kind: input, shape index: {}]
  %s2 = inlined_call_operand.<no memory space> [shape: f32[1,1], index: 2, kind: input, shape index: {}]
  %s3 = inlined_call_operand.vmem [shape: f32[3,1], index: 3, kind: input, shape index: {}]
  %s4 = inlined_call_operand.vmem [shape: f32[3,1], index: 4, kind: input, shape index: {}]
  %s5 = inlined_call_operand.vmem [shape: f32[3,256], index: 5, kind: output, shape index: {}]
  %s6 = sld [smem:[#allocation0]]
  $region53: #{lpips_distance_sampler_forward.12} parent=0
    _
  %s8 = ssub.s32 1, %s6
  %s9 = scalar_select 0, %s8, %s6
  %v10 = vstv %s2
  %11 = vst [vmem:[#allocation2] sm:$0x1] %v10
  loop: start=0, step=1, limit=4
  $region2: #{lpips_distance_sampler_forward.12} parent=0 // loop_pre_header
    _
  $region3: #{lpips_distance_sampler_forward.12} parent=0 // loop_header
    %s13 = sphi 0, %s17
    %p14 = scmp.ge.s32.totalorder %s13, 4
    %s23 = sphi 0, %s25
    %s26 = sphi 0, %s23
    %s27 = sphi 0, %s26
    %s43 = sphi 0, %s27
    %s47 = sphi 0, %s47
    %s49 = sphi 0, %s47
    %s50 = sphi 0, %s49
    %s64 = sphi 0, %s50
    %s68 = sphi 0, %s68
    %s70 = sphi 0, %s68
    %s71 = sphi 0, %s70
    %s85 = sphi 0, %s71
    %s89 = sphi 0, %s89
    %s91 = sphi 0, %s89
    %s92 = sphi 0, %s91
    %s106 = sphi 0, %s92
    %s110 = sphi 0, %s110
    %s112 = sphi 0, %s110
    %s113 = sphi 0, %s112
    %s127 = sphi 0, %s113
    %s133 = sphi 0, %s135
    %s136 = sphi 0, %s133
    %s137 = sphi 0, %s136
    %s153 = sphi 0, %s137
  $region4: #{lpips_distance_sampler_forward.12} parent=0 // loop_header_branch
    %16 = sbr.rel (%p14) target = $region8
  $region5: #{lpips_distance_sampler_forward.12} parent=0 // loop_body
    %s18 = ssub.s32 %s13, 1
    %s19 = ssub.s32 %s13, 2
    %s20 = sadd.s32 %s13, 1
    %s21 = ssub.s32 %s13, %s20
    %p22 = scmp.eq.s32.totalorder %s21, 0
    %s24 = sadd.s32 %s23, 1
    %s25 = scalar_select %p22, %s23, %s24
    %p28 = pneg %p22
    %p29 = scmp.eq.s32.totalorder %s13, 1
    %p30 = por %p28, %p29
    %p31 = scmp.ne.s32.totalorder %s23, %s26
    %p32 = scmp.eq.s32.totalorder %s13, 0
    %p33 = por %p31, %p32
    %p34 = scmp.ne.s32.totalorder %s23, %s26
    %p35 = scmp.eq.s32.totalorder %s18, 1
    %p36 = por %p34, %p35
    %p37 = scmp.ne.s32.totalorder %s26, %s27
    %p38 = scmp.eq.s32.totalorder %s18, 0
    %p39 = por %p37, %p38
    %p40 = scmp.ne.s32.totalorder %s26, %s27
    %p41 = scmp.eq.s32.totalorder %s19, 1
    %p42 = por %p40, %p41
    %p44 = scmp.ne.s32.totalorder %s27, %s43
    %p45 = scmp.eq.s32.totalorder %s19, 0
    %p46 = por %p44, %p45
    %s48 = sadd.s32 %s47, 1
    %p51 = scmp.eq.s32.totalorder %s13, 1
    %p52 = scmp.ne.s32.totalorder %s47, %s49
    %p53 = scmp.eq.s32.totalorder %s13, 0
    %p54 = por %p52, %p53
    %p55 = scmp.ne.s32.totalorder %s47, %s49
    %p56 = scmp.eq.s32.totalorder %s18, 1
    %p57 = por %p55, %p56
    %p58 = scmp.ne.s32.totalorder %s49, %s50
    %p59 = scmp.eq.s32.totalorder %s18, 0
    %p60 = por %p58, %p59
    %p61 = scmp.ne.s32.totalorder %s49, %s50
    %p62 = scmp.eq.s32.totalorder %s19, 1
    %p63 = por %p61, %p62
    %p65 = scmp.ne.s32.totalorder %s50, %s64
    %p66 = scmp.eq.s32.totalorder %s19, 0
    %p67 = por %p65, %p66
    %s69 = sadd.s32 %s68, 1
    %p72 = scmp.eq.s32.totalorder %s13, 1
    %p73 = scmp.ne.s32.totalorder %s68, %s70
    %p74 = scmp.eq.s32.totalorder %s13, 0
    %p75 = por %p73, %p74
    %p76 = scmp.ne.s32.totalorder %s68, %s70
    %p77 = scmp.eq.s32.totalorder %s18, 1
    %p78 = por %p76, %p77
    %p79 = scmp.ne.s32.totalorder %s70, %s71
    %p80 = scmp.eq.s32.totalorder %s18, 0
    %p81 = por %p79, %p80
    %p82 = scmp.ne.s32.totalorder %s70, %s71
    %p83 = scmp.eq.s32.totalorder %s19, 1
    %p84 = por %p82, %p83
    %p86 = scmp.ne.s32.totalorder %s71, %s85
    %p87 = scmp.eq.s32.totalorder %s19, 0
    %p88 = por %p86, %p87
    %s90 = sadd.s32 %s89, 1
    %p93 = scmp.eq.s32.totalorder %s13, 1
    %p94 = scmp.ne.s32.totalorder %s89, %s91
    %p95 = scmp.eq.s32.totalorder %s13, 0
    %p96 = por %p94, %p95
    %p97 = scmp.ne.s32.totalorder %s89, %s91
    %p98 = scmp.eq.s32.totalorder %s18, 1
    %p99 = por %p97, %p98
    %p100 = scmp.ne.s32.totalorder %s91, %s92
    %p101 = scmp.eq.s32.totalorder %s18, 0
    %p102 = por %p100, %p101
    %p103 = scmp.ne.s32.totalorder %s91, %s92
    %p104 = scmp.eq.s32.totalorder %s19, 1
    %p105 = por %p103, %p104
    %p107 = scmp.ne.s32.totalorder %s92, %s106
    %p108 = scmp.eq.s32.totalorder %s19, 0
    %p109 = por %p107, %p108
    %s111 = sadd.s32 %s110, 1
    %p114 = scmp.eq.s32.totalorder %s13, 1
    %p115 = scmp.ne.s32.totalorder %s110, %s112
    %p116 = scmp.eq.s32.totalorder %s13, 0
    %p117 = por %p115, %p116
    %p118 = scmp.ne.s32.totalorder %s110, %s112
    %p119 = scmp.eq.s32.totalorder %s18, 1
    %p120 = por %p118, %p119
    %p121 = scmp.ne.s32.totalorder %s112, %s113
    %p122 = scmp.eq.s32.totalorder %s18, 0
    %p123 = por %p121, %p122
    %p124 = scmp.ne.s32.totalorder %s112, %s113
    %p125 = scmp.eq.s32.totalorder %s19, 1
    %p126 = por %p124, %p125
    %p128 = scmp.ne.s32.totalorder %s113, %s127
    %p129 = scmp.eq.s32.totalorder %s19, 0
    %p130 = por %p128, %p129
    %s131 = ssub.s32 %s13, %s20
    %p132 = scmp.eq.s32.totalorder %s131, 0
    %s134 = sadd.s32 %s133, 1
    %s135 = scalar_select %p132, %s133, %s134
    %p138 = pneg %p132
    %p139 = scmp.eq.s32.totalorder %s13, 1
    %p140 = por %p138, %p139
    %p141 = scmp.ne.s32.totalorder %s133, %s136
    %p142 = scmp.eq.s32.totalorder %s13, 0
    %p143 = por %p141, %p142
    %p144 = scmp.ne.s32.totalorder %s133, %s136
    %p145 = scmp.eq.s32.totalorder %s18, 1
    %p146 = por %p144, %p145
    %p147 = scmp.ne.s32.totalorder %s136, %s137
    %p148 = scmp.eq.s32.totalorder %s18, 0
    %p149 = por %p147, %p148
    %p150 = scmp.ne.s32.totalorder %s136, %s137
    %p151 = scmp.eq.s32.totalorder %s19, 1
    %p152 = por %p150, %p151
    %p154 = scmp.ne.s32.totalorder %s137, %s153
    %p155 = scmp.eq.s32.totalorder %s19, 0
    %p156 = por %p154, %p155
    %p157 = scmp.le.s32.totalorder 1, %s13
    %p158 = scmp.lt.s32.totalorder %s13, 3
    %p159 = pnand %p157, %p158
    %p160 = pneg %p159
    // Predicated region
    $region9: #{lpips_distance_sampler_forward.12} parent=5 // pred_check
      _
    $region10: #{lpips_distance_sampler_forward.12} parent=5 // pred_check_branch
      %162 = sbr.rel (%p159) target = $region12
    $region11: #{lpips_distance_sampler_forward.12} parent=5 // pred_region
      %s163 = ssub.s32 %s13, 1
      // Predicated region
      $region13: #{lpips_distance_sampler_forward.12} parent=11 // pred_check
        %p164 = pneg %p60
      $region14: #{lpips_distance_sampler_forward.12} parent=11 // pred_check_branch
        %166 = sbr.rel (%p164) target = $region16
      $region15: #{lpips_distance_sampler_forward.12} parent=11 // pred_region
        _
      $region16: #{lpips_distance_sampler_forward.12} parent=11 // pred_fallthru
        _
      // Predicated region
      $region17: #{lpips_distance_sampler_forward.12} parent=11 // pred_check
        %p167 = pneg %p81
      $region18: #{lpips_distance_sampler_forward.12} parent=11 // pred_check_branch
        %169 = sbr.rel (%p167) target = $region20
      $region19: #{lpips_distance_sampler_forward.12} parent=11 // pred_region
        _
      $region20: #{lpips_distance_sampler_forward.12} parent=11 // pred_fallthru
        _
      // Predicated region
      $region21: #{lpips_distance_sampler_forward.12} parent=11 // pred_check
        %p170 = pneg %p102
      $region22: #{lpips_distance_sampler_forward.12} parent=11 // pred_check_branch
        %172 = sbr.rel (%p170) target = $region24
      $region23: #{lpips_distance_sampler_forward.12} parent=11 // pred_region
        _
      $region24: #{lpips_distance_sampler_forward.12} parent=11 // pred_fallthru
        _
      // Predicated region
      $region25: #{lpips_distance_sampler_forward.12} parent=11 // pred_check
        %p173 = pneg %p123
      $region26: #{lpips_distance_sampler_forward.12} parent=11 // pred_check_branch
        %175 = sbr.rel (%p173) target = $region28
      $region27: #{lpips_distance_sampler_forward.12} parent=11 // pred_region
        _
      $region28: #{lpips_distance_sampler_forward.12} parent=11 // pred_fallthru
        _
    $region12: #{lpips_distance_sampler_forward.12} parent=5 // pred_fallthru
      _
    %p176 = scmp.lt.s32.totalorder %s13, 2
    // Predicated region
    $region29: #{lpips_distance_sampler_forward.12} parent=5 // pred_check
      %p177 = pneg %p176
    $region30: #{lpips_distance_sampler_forward.12} parent=5 // pred_check_branch
      %179 = sbr.rel (%p177) target = $region32
    $region31: #{lpips_distance_sampler_forward.12} parent=5 // pred_region
      // Predicated region
      $region33: #{lpips_distance_sampler_forward.12} parent=31 // pred_check
        %p180 = pneg %p33
      $region34: #{lpips_distance_sampler_forward.12} parent=31 // pred_check_branch
        %182 = sbr.rel (%p180) target = $region36
      $region35: #{lpips_distance_sampler_forward.12} parent=31 // pred_region
        %p183 = scmp.lt.s32.totalorder %s13, 1
        %s184 = scalar_select %p183, %s13, 1
        %s185 = smul.addr %s184, 4
        %s186 = scalar_lea.vmem %s0, %s185
      $region36: #{lpips_distance_sampler_forward.12} parent=31 // pred_fallthru
        _
    $region32: #{lpips_distance_sampler_forward.12} parent=5 // pred_fallthru
      _
    %p187 = scmp.le.s32.totalorder 1, %s13
    %p188 = scmp.lt.s32.totalorder %s13, 3
    %p189 = pnand %p187, %p188
    %p190 = pneg %p189
    // Predicated region
    $region37: #{lpips_distance_sampler_forward.12} parent=5 // pred_check
      _
    $region38: #{lpips_distance_sampler_forward.12} parent=5 // pred_check_branch
      %192 = sbr.rel (%p189) target = $region40
    $region39: #{lpips_distance_sampler_forward.12} parent=5 // pred_region
      %s193 = ssub.s32 %s13, 1
      %p194 = scmp.lt.s32.totalorder %s18, 1
      %s195 = scalar_select %p194, %s18, 1
      %s196 = smul.addr %s195, 4
      %s197 = scalar_lea.vmem %s0, %s196
      %p198 = pneg %p39
      %p199 = pneg %p36
      %p200 = pneg %p60
      %p201 = pneg %p57
      %p202 = pneg %p81
      %p203 = pneg %p78
      %p204 = pneg %p102
      %p205 = pneg %p99
      %p206 = pneg %p123
      %p207 = pneg %p120
      %p208 = pneg %p149
      %p209 = pneg %p146
      %p210 = scmp.lt.s32.totalorder %s18, 1
      %s211 = scalar_select %p210, %s18, 1
      %s212 = smul.addr %s211, 4
      %s213 = scalar_lea.vmem %s5, %s212
      %p214 = scmp.lt.s32.totalorder %s18, 1
      %s215 = scalar_select %p214, %s18, 1
      %s216 = smul.addr %s215, 4
      %s217 = scalar_lea.vmem %s0, %s216
      %p218 = scmp.lt.s32.totalorder %s18, 1
      %s219 = scalar_select %p218, %s18, 1
      %s220 = smul.addr %s219, 4
      %s221 = scalar_lea.vmem %s5, %s220
      %v223 = vld [vmem:[%s1] sm:$0x1]
      %v224 = vld [vmem:[%s217] sm:$0xf]
      %v225 = vld [vmem:[#allocation2] sm:$0x1]
      %227 = vset.pattern.permute.xlu0 0
      %228 = vperm.xlu0 %227, %v225
      %v229 = vpop.permute.xlu0 %228
      %v231 = vlaneseq
      %v232 = vshrl.u32 %v231, 7
      %v233 = vsub.s32 0, %v232
      %v234 = vrot.slane %v229, %v233
      %vm235 = vcmask 64512
      %v237 = vsel %vm235, %v223, 0
      %vm239 = vcmask 1043456
      %v241 = vsel %vm239, %v224, 0
      %243 = vmatprep.subr.bf16.mxu0 0
      %244 = vmatpush1.bf16.msra.mxu0 %v241
      %245 = vmatprep.subr.bf16.mxu0 0
      %246 = vmatpush1.bf16.msra.mxu0 0
      %247 = vmatprep.subr.bf16.mxu0 0
      %248 = vmatpush1.bf16.msra.mxu0 0
      %249 = vmatprep.subr.bf16.mxu0 0
      %250 = vmatpush1.bf16.msra.mxu0 0
      %251 = vmatprep.subr.bf16.mxu0 0
      %252 = vmatpush1.bf16.msra.mxu0 0
      %253 = vmatprep.subr.bf16.mxu0 0
      %254 = vmatpush1.bf16.msra.mxu0 0
      %255 = vmatprep.subr.bf16.mxu0 0
      %256 = vmatpush1.bf16.msra.mxu0 0
      %257 = vmatprep.subr.bf16.mxu0 0
      %258 = vmatpush1.bf16.msra.mxu0 0
      %259 = vmatprep.subr.bf16.mxu0 0
      %260 = vmatpush1.bf16.msra.mxu0 0
      %261 = vmatprep.subr.bf16.mxu0 0
      %262 = vmatpush1.bf16.msra.mxu0 0
      %263 = vmatprep.subr.bf16.mxu0 0
      %264 = vmatpush1.bf16.msra.mxu0 0
      %265 = vmatprep.subr.bf16.mxu0 0
      %266 = vmatpush1.bf16.msra.mxu0 0
      %267 = vmatprep.subr.bf16.mxu0 0
      %268 = vmatpush1.bf16.msra.mxu0 0
      %269 = vmatprep.subr.bf16.mxu0 0
      %270 = vmatpush1.bf16.msra.mxu0 0
      %271 = vmatprep.subr.bf16.mxu0 0
      %272 = vmatpush1.bf16.msra.mxu0 0
      %273 = vmatprep.subr.bf16.mxu0 0
      %274 = vmatpush1.bf16.msra.mxu0 0
      %275 = vmatprep.mubr.bf16.mxu0 0
      %276 = vmatmul.mubr.bf16.gmra.mrb[0].mxu0 %v237
      %v277 = vpop.f32.mrb[0].mxu0
      %v278 = vadd.f32 %v234, %v277
      %v279 = vpop.f32.mrb[0].mxu0
      %v280 = vpop.f32.mrb[0].mxu0
      %v281 = vpop.f32.mrb[0].mxu0
      %282 = vdwg.mxu0
      %v283 = vadd.f32 %v278, 1.0
      %v284 = vmul.f32 %v283, 127.5
      %v285 = vmax.f32 %v284, 0.0
      %v286 = vmin.f32 %v285, 255.0
      %v287 = vld [vmem:[%s3] sm:$0x7]
      %v288 = vlaneseq
      %v289 = vshrl.u32 %v288, 7
      %v290 = vsub.s32 0, %v289
      %v291 = vrot.slane %v286, %v290
      %293 = vset.pattern.permute.xlu0 0
      %294 = vperm.xlu0 %293, %v287
      %v295 = vpop.permute.xlu0 %294
      %v297 = vsub.f32 %v291, %v295
      %v298 = vld [vmem:[%s4] sm:$0x7]
      %300 = vset.pattern.permute.xlu0 0
      %301 = vperm.xlu0 %300, %v298
      %v302 = vpop.permute.xlu0 %301
      %v304 = vmul.f32 %v297, %v302
      %305 = vst [vmem:[%s221] sm:$0x7] %v304
      %p306 = scmp.lt.s32.totalorder %s18, 1
      %s307 = scalar_select %p306, %s18, 1
      %s308 = smul.addr %s307, 4
      %s309 = scalar_lea.vmem %s5, %s308
      // Predicated region
      $region41: #{lpips_distance_sampler_forward.12} parent=39 // pred_check
        %p310 = pneg %p146
      $region42: #{lpips_distance_sampler_forward.12} parent=39 // pred_check_branch
        %312 = sbr.rel (%p310) target = $region44
      $region43: #{lpips_distance_sampler_forward.12} parent=39 // pred_region
        _
      $region44: #{lpips_distance_sampler_forward.12} parent=39 // pred_fallthru
        _
    $region40: #{lpips_distance_sampler_forward.12} parent=5 // pred_fallthru
      _
    %p313 = scmp.le.s32.totalorder 2, %s13
    // Predicated region
    $region45: #{lpips_distance_sampler_forward.12} parent=5 // pred_check
      %p314 = pneg %p313
    $region46: #{lpips_distance_sampler_forward.12} parent=5 // pred_check_branch
      %316 = sbr.rel (%p314) target = $region48
    $region47: #{lpips_distance_sampler_forward.12} parent=5 // pred_region
      %s317 = ssub.s32 %s13, 2
      // Predicated region
      $region49: #{lpips_distance_sampler_forward.12} parent=47 // pred_check
        %p318 = pneg %p152
      $region50: #{lpips_distance_sampler_forward.12} parent=47 // pred_check_branch
        %320 = sbr.rel (%p318) target = $region52
      $region51: #{lpips_distance_sampler_forward.12} parent=47 // pred_region
        %p321 = scmp.lt.s32.totalorder %s19, 1
        %s322 = scalar_select %p321, %s19, 1
        %s323 = smul.addr %s322, 4
        %s324 = scalar_lea.vmem %s5, %s323
      $region52: #{lpips_distance_sampler_forward.12} parent=47 // pred_fallthru
        _
    $region48: #{lpips_distance_sampler_forward.12} parent=5 // pred_fallthru
      _
  $region6: #{lpips_distance_sampler_forward.12} parent=0 // loop_footer
    %s17 = sadd.s32 1, %s13
  $region7: #{lpips_distance_sampler_forward.12} parent=0 // loop_footer_branch
    %12 = sbr.rel target = $region3
  $region8: #{lpips_distance_sampler_forward.12} parent=0 // loop_exit
    _

// kernel: lpips_distance_sampler_forward.13
$region0: #{lpips_distance_sampler_forward.13}
  #allocation0 [shape = 'u32[]', space=smem, size = 0x4, offset = 0x4, fixed_abs, tag = 'smem constant byte address 0x4 - core index']
  #allocation1 [shape = 'u32[144,128]{1,0:T(1,128)}', space=vmem, size = 0x12000, scoped, tag = 'internal scratch']
  %s0 = inlined_call_operand.vmem [shape: bf16[27,256], index: 0, kind: input, shape index: {}]
  %s1 = inlined_call_operand.vmem [shape: bf16[8,27], index: 1, kind: input, shape index: {}]
  %s2 = inlined_call_operand.vmem [shape: f32[8,1], index: 2, kind: input, shape index: {}]
  %s3 = inlined_call_operand.vmem [shape: f32[8,256], index: 3, kind: output, shape index: {}]
  %s4 = sld [smem:[#allocation0]]
  $region86: #{lpips_distance_sampler_forward.13} parent=0
    _
  %s6 = ssub.s32 1, %s4
  %s7 = scalar_select 0, %s6, %s4
  $region1: #{lpips_distance_sampler_forward.13} parent=0
    #allocation2 [shape = 'u8[16384]{0}', space=vmem, size = 0x4000, scoped, tag = 'input window, operand 0']
    loop: start=0, step=1, limit=4
    $region2: #{lpips_distance_sampler_forward.13} parent=1 // loop_pre_header
      _
    $region3: #{lpips_distance_sampler_forward.13} parent=1 // loop_header
      %s9 = sphi 0, %s13
      %p10 = scmp.ge.s32.totalorder %s9, 4
      %s19 = sphi 0, %s21
      %s22 = sphi 0, %s19
      %s23 = sphi 0, %s22
      %s39 = sphi 0, %s23
      %s43 = sphi 0, %s43
      %s45 = sphi 0, %s43
      %s46 = sphi 0, %s45
      %s60 = sphi 0, %s46
      %s64 = sphi 0, %s64
      %s66 = sphi 0, %s64
      %s67 = sphi 0, %s66
      %s81 = sphi 0, %s67
      %s87 = sphi 0, %s89
      %s90 = sphi 0, %s87
      %s91 = sphi 0, %s90
      %s107 = sphi 0, %s91
    $region4: #{lpips_distance_sampler_forward.13} parent=1 // loop_header_branch
      %12 = sbr.rel (%p10) target = $region8
    $region5: #{lpips_distance_sampler_forward.13} parent=1 // loop_body
      %s14 = ssub.s32 %s9, 1
      %s15 = ssub.s32 %s9, 2
      %s16 = sadd.s32 %s9, 1
      %s17 = ssub.s32 %s9, %s16
      %p18 = scmp.eq.s32.totalorder %s17, 0
      %s20 = sadd.s32 %s19, 1
      %s21 = scalar_select %p18, %s19, %s20
      %p24 = pneg %p18
      %p25 = scmp.eq.s32.totalorder %s9, 1
      %p26 = por %p24, %p25
      %p27 = scmp.ne.s32.totalorder %s19, %s22
      %p28 = scmp.eq.s32.totalorder %s9, 0
      %p29 = por %p27, %p28
      %p30 = scmp.ne.s32.totalorder %s19, %s22
      %p31 = scmp.eq.s32.totalorder %s14, 1
      %p32 = por %p30, %p31
      %p33 = scmp.ne.s32.totalorder %s22, %s23
      %p34 = scmp.eq.s32.totalorder %s14, 0
      %p35 = por %p33, %p34
      %p36 = scmp.ne.s32.totalorder %s22, %s23
      %p37 = scmp.eq.s32.totalorder %s15, 1
      %p38 = por %p36, %p37
      %p40 = scmp.ne.s32.totalorder %s23, %s39
      %p41 = scmp.eq.s32.totalorder %s15, 0
      %p42 = por %p40, %p41
      %s44 = sadd.s32 %s43, 1
      %p47 = scmp.eq.s32.totalorder %s9, 1
      %p48 = scmp.ne.s32.totalorder %s43, %s45
      %p49 = scmp.eq.s32.totalorder %s9, 0
      %p50 = por %p48, %p49
      %p51 = scmp.ne.s32.totalorder %s43, %s45
      %p52 = scmp.eq.s32.totalorder %s14, 1
      %p53 = por %p51, %p52
      %p54 = scmp.ne.s32.totalorder %s45, %s46
      %p55 = scmp.eq.s32.totalorder %s14, 0
      %p56 = por %p54, %p55
      %p57 = scmp.ne.s32.totalorder %s45, %s46
      %p58 = scmp.eq.s32.totalorder %s15, 1
      %p59 = por %p57, %p58
      %p61 = scmp.ne.s32.totalorder %s46, %s60
      %p62 = scmp.eq.s32.totalorder %s15, 0
      %p63 = por %p61, %p62
      %s65 = sadd.s32 %s64, 1
      %p68 = scmp.eq.s32.totalorder %s9, 1
      %p69 = scmp.ne.s32.totalorder %s64, %s66
      %p70 = scmp.eq.s32.totalorder %s9, 0
      %p71 = por %p69, %p70
      %p72 = scmp.ne.s32.totalorder %s64, %s66
      %p73 = scmp.eq.s32.totalorder %s14, 1
      %p74 = por %p72, %p73
      %p75 = scmp.ne.s32.totalorder %s66, %s67
      %p76 = scmp.eq.s32.totalorder %s14, 0
      %p77 = por %p75, %p76
      %p78 = scmp.ne.s32.totalorder %s66, %s67
      %p79 = scmp.eq.s32.totalorder %s15, 1
      %p80 = por %p78, %p79
      %p82 = scmp.ne.s32.totalorder %s67, %s81
      %p83 = scmp.eq.s32.totalorder %s15, 0
      %p84 = por %p82, %p83
      %s85 = ssub.s32 %s9, %s16
      %p86 = scmp.eq.s32.totalorder %s85, 0
      %s88 = sadd.s32 %s87, 1
      %s89 = scalar_select %p86, %s87, %s88
      %p92 = pneg %p86
      %p93 = scmp.eq.s32.totalorder %s9, 1
      %p94 = por %p92, %p93
      %p95 = scmp.ne.s32.totalorder %s87, %s90
      %p96 = scmp.eq.s32.totalorder %s9, 0
      %p97 = por %p95, %p96
      %p98 = scmp.ne.s32.totalorder %s87, %s90
      %p99 = scmp.eq.s32.totalorder %s14, 1
      %p100 = por %p98, %p99
      %p101 = scmp.ne.s32.totalorder %s90, %s91
      %p102 = scmp.eq.s32.totalorder %s14, 0
      %p103 = por %p101, %p102
      %p104 = scmp.ne.s32.totalorder %s90, %s91
      %p105 = scmp.eq.s32.totalorder %s15, 1
      %p106 = por %p104, %p105
      %p108 = scmp.ne.s32.totalorder %s91, %s107
      %p109 = scmp.eq.s32.totalorder %s15, 0
      %p110 = por %p108, %p109
      %p111 = scmp.le.s32.totalorder 1, %s9
      %p112 = scmp.lt.s32.totalorder %s9, 3
      %p113 = pnand %p111, %p112
      %p114 = pneg %p113
      // Predicated region
      $region9: #{lpips_distance_sampler_forward.13} parent=5 // pred_check
        _
      $region10: #{lpips_distance_sampler_forward.13} parent=5 // pred_check_branch
        %116 = sbr.rel (%p113) target = $region12
      $region11: #{lpips_distance_sampler_forward.13} parent=5 // pred_region
        %s117 = ssub.s32 %s9, 1
        // Predicated region
        $region13: #{lpips_distance_sampler_forward.13} parent=11 // pred_check
          %p118 = pneg %p56
        $region14: #{lpips_distance_sampler_forward.13} parent=11 // pred_check_branch
          %120 = sbr.rel (%p118) target = $region16
        $region15: #{lpips_distance_sampler_forward.13} parent=11 // pred_region
          _
        $region16: #{lpips_distance_sampler_forward.13} parent=11 // pred_fallthru
          _
        // Predicated region
        $region17: #{lpips_distance_sampler_forward.13} parent=11 // pred_check
          %p121 = pneg %p77
        $region18: #{lpips_distance_sampler_forward.13} parent=11 // pred_check_branch
          %123 = sbr.rel (%p121) target = $region20
        $region19: #{lpips_distance_sampler_forward.13} parent=11 // pred_region
          _
        $region20: #{lpips_distance_sampler_forward.13} parent=11 // pred_fallthru
          _
      $region12: #{lpips_distance_sampler_forward.13} parent=5 // pred_fallthru
        _
      %p124 = scmp.lt.s32.totalorder %s9, 2
      // Predicated region
      $region21: #{lpips_distance_sampler_forward.13} parent=5 // pred_check
        %p125 = pneg %p124
      $region22: #{lpips_distance_sampler_forward.13} parent=5 // pred_check_branch
        %127 = sbr.rel (%p125) target = $region24
      $region23: #{lpips_distance_sampler_forward.13} parent=5 // pred_region
        // Predicated region
        $region25: #{lpips_distance_sampler_forward.13} parent=23 // pred_check
          %p128 = pneg %p29
        $region26: #{lpips_distance_sampler_forward.13} parent=23 // pred_check_branch
          %130 = sbr.rel (%p128) target = $region28
        $region27: #{lpips_distance_sampler_forward.13} parent=23 // pred_region
          %s131 = sand.u32 %s19, 1
          %s132 = sand.u32 %s19, 1
          %s133 = smul.addr %s132, 16
          %s134 = scalar_lea.vmem [#allocation2], %s133
          %s135 = smul.addr %s9, 4
          %s136 = scalar_lea.vmem %s0, %s135
          // Predicated region
          $region29: #{lpips_distance_sampler_forward.13} parent=27 // pred_check
            _
          $region30: #{lpips_distance_sampler_forward.13} parent=27 // pred_check_branch
            %138 = sbr.rel (0) target = $region32
          $region31: #{lpips_distance_sampler_forward.13} parent=27 // pred_region
            // Predicated region
            $region33: #{lpips_distance_sampler_forward.13} parent=31 // pred_check
              _
            $region34: #{lpips_distance_sampler_forward.13} parent=31 // pred_check_branch
              %140 = sbr.rel target = $region36
            $region35: #{lpips_distance_sampler_forward.13} parent=31 // pred_region
              // Predicated region
              $region48: #{lpips_distance_sampler_forward.13} parent=35 // pred_check
                _
              $region49: #{lpips_distance_sampler_forward.13} parent=35 // pred_check_branch
                %161 = sbr.rel (0) target = $region51
              $region50: #{lpips_distance_sampler_forward.13} parent=35 // pred_region
                loop: start=0, step=1, limit=1
                $region52: #{lpips_distance_sampler_forward.13} parent=50 // loop_pre_header
                  _
                $region53: #{lpips_distance_sampler_forward.13} parent=50 // loop_header
                  %s163 = sphi 0, %s167
                  %p164 = scmp.ge.s32.totalorder %s163, 1
                  %s168 = sphi %s136, %s136
                  %s169 = sphi %s134, %s134
                $region54: #{lpips_distance_sampler_forward.13} parent=50 // loop_header_branch
                  %166 = sbr.rel (%p164) target = $region58
                $region55: #{lpips_distance_sampler_forward.13} parent=50 // loop_body
                  _
                $region56: #{lpips_distance_sampler_forward.13} parent=50 // loop_footer
                  %s167 = sadd.s32 1, %s163
                $region57: #{lpips_distance_sampler_forward.13} parent=50 // loop_footer_branch
                  %162 = sbr.rel target = $region53
                $region58: #{lpips_distance_sampler_forward.13} parent=50 // loop_exit
                  _
                loop: start=0, step=1, limit=1
                $region59: #{lpips_distance_sampler_forward.13} parent=50 // loop_pre_header
                  _
                $region60: #{lpips_distance_sampler_forward.13} parent=50 // loop_header
                  %s172 = sphi 0, %s176
                  %p173 = scmp.ge.s32.totalorder %s172, 1
                  %s177 = sphi %s136, %s136
                  %s178 = sphi %s134, %s134
                $region61: #{lpips_distance_sampler_forward.13} parent=50 // loop_header_branch
                  %175 = sbr.rel (%p173) target = $region65
                $region62: #{lpips_distance_sampler_forward.13} parent=50 // loop_body
                  %v179 = vld [vmem:[%s177] sm:$0xf]
                  %180 = vst [vmem:[%s178] sm:$0xf] %v179
                  %v181 = vld [vmem:[%s177 + $0x8] sm:$0xf]
                  %182 = vst [vmem:[%s178 + $0x4] sm:$0xf] %v181
                  %v183 = vld [vmem:[%s177 + $0x10] sm:$0xf]
                  %184 = vst [vmem:[%s178 + $0x8] sm:$0xf] %v183
                  %v185 = vld [vmem:[%s177 + $0x18] sm:$0xf]
                  %186 = vst [vmem:[%s178 + $0xc] sm:$0xf] %v185
                $region63: #{lpips_distance_sampler_forward.13} parent=50 // loop_footer
                  %s176 = sadd.s32 1, %s172
                $region64: #{lpips_distance_sampler_forward.13} parent=50 // loop_footer_branch
                  %171 = sbr.rel target = $region60
                $region65: #{lpips_distance_sampler_forward.13} parent=50 // loop_exit
                  _
              $region51: #{lpips_distance_sampler_forward.13} parent=35 // pred_fallthru
                _
            $region36: #{lpips_distance_sampler_forward.13} parent=31 // pred_fallthru
              _
            // Predicated region
            $region37: #{lpips_distance_sampler_forward.13} parent=31 // pred_check
              _
            $region38: #{lpips_distance_sampler_forward.13} parent=31 // pred_check_branch
              %142 = sbr.rel (0) target = $region40
            $region39: #{lpips_distance_sampler_forward.13} parent=31 // pred_region
              loop: start=0, step=1, limit=1
              $region41: #{lpips_distance_sampler_forward.13} parent=39 // loop_pre_header
                _
              $region42: #{lpips_distance_sampler_forward.13} parent=39 // loop_header
                %s145 = sphi 0, %s149
                %p146 = scmp.ge.s32.totalorder %s145, 1
                %s150 = sphi %s136, %s136
                %s151 = sphi %s134, %s134
              $region43: #{lpips_distance_sampler_forward.13} parent=39 // loop_header_branch
                %148 = sbr.rel (%p146) target = $region47
              $region44: #{lpips_distance_sampler_forward.13} parent=39 // loop_body
                %v152 = vld [vmem:[%s150] sm:$0xf]
                %153 = vst [vmem:[%s151] sm:$0xf] %v152
                %v154 = vld [vmem:[%s150 + $0x8] sm:$0xf]
                %155 = vst [vmem:[%s151 + $0x4] sm:$0xf] %v154
                %v156 = vld [vmem:[%s150 + $0x10] sm:$0xf]
                %157 = vst [vmem:[%s151 + $0x8] sm:$0xf] %v156
                %v158 = vld [vmem:[%s150 + $0x18] sm:$0xf]
                %159 = vst [vmem:[%s151 + $0xc] sm:$0xf] %v158
              $region45: #{lpips_distance_sampler_forward.13} parent=39 // loop_footer
                %s149 = sadd.s32 1, %s145
              $region46: #{lpips_distance_sampler_forward.13} parent=39 // loop_footer_branch
                %144 = sbr.rel target = $region42
              $region47: #{lpips_distance_sampler_forward.13} parent=39 // loop_exit
                _
            $region40: #{lpips_distance_sampler_forward.13} parent=31 // pred_fallthru
              _
          $region32: #{lpips_distance_sampler_forward.13} parent=27 // pred_fallthru
            _
          %187 = vnop
        $region28: #{lpips_distance_sampler_forward.13} parent=23 // pred_fallthru
          _
      $region24: #{lpips_distance_sampler_forward.13} parent=5 // pred_fallthru
        _
      %p188 = scmp.le.s32.totalorder 1, %s9
      %p189 = scmp.lt.s32.totalorder %s9, 3
      %p190 = pnand %p188, %p189
      %p191 = pneg %p190
      // Predicated region
      $region66: #{lpips_distance_sampler_forward.13} parent=5 // pred_check
        _
      $region67: #{lpips_distance_sampler_forward.13} parent=5 // pred_check_branch
        %193 = sbr.rel (%p190) target = $region69
      $region68: #{lpips_distance_sampler_forward.13} parent=5 // pred_region
        %s194 = ssub.s32 %s9, 1
        %s195 = sand.u32 %s22, 1
        %s196 = sand.u32 %s22, 1
        %s197 = smul.addr %s196, 16
        %s198 = scalar_lea.vmem [#allocation2], %s197
        // Predicated region
        $region70: #{lpips_distance_sampler_forward.13} parent=68 // pred_check
          %p199 = pneg %p35
        $region71: #{lpips_distance_sampler_forward.13} parent=68 // pred_check_branch
          %201 = sbr.rel (%p199) target = $region73
        $region72: #{lpips_distance_sampler_forward.13} parent=68 // pred_region
          _
        $region73: #{lpips_distance_sampler_forward.13} parent=68 // pred_fallthru
          _
        %s202 = sand.u32 %s22, 1
        %s203 = sand.u32 %s22, 1
        %s204 = smul.addr %s203, 16
        %s205 = scalar_lea.vmem [#allocation2], %s204
        %p206 = pneg %p35
        %p207 = pneg %p32
        %p208 = pneg %p56
        %p209 = pneg %p53
        %p210 = pneg %p77
        %p211 = pneg %p74
        %p212 = pneg %p103
        %p213 = pneg %p100
        %p214 = scmp.lt.s32.totalorder %s14, 1
        %s215 = scalar_select %p214, %s14, 1
        %s216 = smul.addr %s215, 8
        %s217 = scalar_lea.vmem %s3, %s216
        %p218 = scmp.lt.s32.totalorder %s14, 1
        %s219 = scalar_select %p218, %s14, 1
        %s220 = smul.addr %s219, 8
        %s221 = scalar_lea.vmem %s3, %s220
        %v223 = vld [vmem:[%s1] sm:$0xf]
        %v224 = vld [vmem:[%s198] sm:$0xf]
        %v225 = vld [vmem:[%s198 + $0x4] sm:$0xf]
        %v226 = vld [vmem:[%s198 + $0x8] sm:$0xf]
        %v227 = vld [vmem:[%s198 + $0xc] sm:$0x3]
        %v228 = vld [vmem:[%s2] sm:$0xff]
        %230 = vset.pattern.permute.xlu0 0
        %231 = vperm.xlu0 %230, %v228
        %v232 = vpop.permute.xlu0 %231
        %v238 = vunpack.c.l.b16 %v224
        %v239 = vunpack.c.l.b16 %v225
        %v240 = vunpack.c.l.b16 %v226
        %v241 = vunpack.c.l.b16 %v227
        %v242 = vpack.c.b16 %v239, %v238
        %v243 = vpack.c.b16 %v241, %v240
        %vm245 = vcmask 220160
        %v247 = vsel %vm245, %v223, 0
        %vm249 = vcmask 1044480
        %vm250 = vcmask 1045504
        %v251 = vsel %vm249, 4294967295, 65535
        %v252 = vsel %vm250, %v251, 0
        %v254 = vand.u32 %v243, %v252
        %256 = vmatprep.subr.bf16.mxu0 0
        %257 = vmatpush1.bf16.msra.mxu0 %v242
        %258 = vmatprep.subr.bf16.mxu0 0
        %259 = vmatpush1.bf16.msra.mxu0 %v254
        %260 = vmatprep.subr.bf16.mxu0 0
        %261 = vmatpush1.bf16.msra.mxu0 0
        %262 = vmatprep.subr.bf16.mxu0 0
        %263 = vmatpush1.bf16.msra.mxu0 0
        %264 = vmatprep.subr.bf16.mxu0 0
        %265 = vmatpush1.bf16.msra.mxu0 0
        %266 = vmatprep.subr.bf16.mxu0 0
        %267 = vmatpush1.bf16.msra.mxu0 0
        %268 = vmatprep.subr.bf16.mxu0 0
        %269 = vmatpush1.bf16.msra.mxu0 0
        %270 = vmatprep.subr.bf16.mxu0 0
        %271 = vmatpush1.bf16.msra.mxu0 0
        %272 = vmatprep.subr.bf16.mxu0 0
        %273 = vmatpush1.bf16.msra.mxu0 0
        %274 = vmatprep.subr.bf16.mxu0 0
        %275 = vmatpush1.bf16.msra.mxu0 0
        %276 = vmatprep.subr.bf16.mxu0 0
        %277 = vmatpush1.bf16.msra.mxu0 0
        %278 = vmatprep.subr.bf16.mxu0 0
        %279 = vmatpush1.bf16.msra.mxu0 0
        %280 = vmatprep.subr.bf16.mxu0 0
        %281 = vmatpush1.bf16.msra.mxu0 0
        %282 = vmatprep.subr.bf16.mxu0 0
        %283 = vmatpush1.bf16.msra.mxu0 0
        %284 = vmatprep.subr.bf16.mxu0 0
        %285 = vmatpush1.bf16.msra.mxu0 0
        %286 = vmatprep.subr.bf16.mxu0 0
        %287 = vmatpush1.bf16.msra.mxu0 0
        %288 = vmatprep.mubr.bf16.mxu0 0
        %289 = vmatmul.mubr.bf16.gmra.mrb[0].mxu0 %v247
        %v290 = vpop.f32.mrb[0].mxu0
        %v291 = vadd.f32 %v232, %v290
        %v292 = vpop.f32.mrb[0].mxu0
        %v293 = vpop.f32.mrb[0].mxu0
        %v294 = vpop.f32.mrb[0].mxu0
        %295 = vdwg.mxu0
        %v296 = vmax.f32 %v291, 0.0
        %297 = vst [vmem:[%s221] sm:$0xff] %v296
        %p298 = scmp.lt.s32.totalorder %s14, 1
        %s299 = scalar_select %p298, %s14, 1
        %s300 = smul.addr %s299, 8
        %s301 = scalar_lea.vmem %s3, %s300
        // Predicated region
        $region74: #{lpips_distance_sampler_forward.13} parent=68 // pred_check
          %p302 = pneg %p100
        $region75: #{lpips_distance_sampler_forward.13} parent=68 // pred_check_branch
          %304 = sbr.rel (%p302) target = $region77
        $region76: #{lpips_distance_sampler_forward.13} parent=68 // pred_region
          _
        $region77: #{lpips_distance_sampler_forward.13} parent=68 // pred_fallthru
          _
      $region69: #{lpips_distance_sampler_forward.13} parent=5 // pred_fallthru
        _
      %p305 = scmp.le.s32.totalorder 2, %s9
      // Predicated region
      $region78: #{lpips_distance_sampler_forward.13} parent=5 // pred_check
        %p306 = pneg %p305
      $region79: #{lpips_distance_sampler_forward.13} parent=5 // pred_check_branch
        %308 = sbr.rel (%p306) target = $region81
      $region80: #{lpips_distance_sampler_forward.13} parent=5 // pred_region
        %s309 = ssub.s32 %s9, 2
        // Predicated region
        $region82: #{lpips_distance_sampler_forward.13} parent=80 // pred_check
          %p310 = pneg %p106
        $region83: #{lpips_distance_sampler_forward.13} parent=80 // pred_check_branch
          %312 = sbr.rel (%p310) target = $region85
        $region84: #{lpips_distance_sampler_forward.13} parent=80 // pred_region
          %p313 = scmp.lt.s32.totalorder %s15, 1
          %s314 = scalar_select %p313, %s15, 1
          %s315 = smul.addr %s314, 8
          %s316 = scalar_lea.vmem %s3, %s315
        $region85: #{lpips_distance_sampler_forward.13} parent=80 // pred_fallthru
          _
      $region81: #{lpips_distance_sampler_forward.13} parent=5 // pred_fallthru
        _
    $region6: #{lpips_distance_sampler_forward.13} parent=1 // loop_footer
      %s13 = sadd.s32 1, %s9
    $region7: #{lpips_distance_sampler_forward.13} parent=1 // loop_footer_branch
      %8 = sbr.rel target = $region3
    $region8: #{lpips_distance_sampler_forward.13} parent=1 // loop_exit
      _

// kernel: lpips_distance_sampler_forward.14
$region0: #{lpips_distance_sampler_forward.14}
  #allocation0 [shape = 'u32[]', space=smem, size = 0x4, offset = 0x4, fixed_abs, tag = 'smem constant byte address 0x4 - core index']
  #allocation1 [shape = 'u32[144,128]{1,0:T(1,128)}', space=vmem, size = 0x12000, scoped, tag = 'internal scratch']
  %s0 = inlined_call_operand.vmem [shape: bf16[72,64], index: 0, kind: input, shape index: {}]
  %s1 = inlined_call_operand.vmem [shape: bf16[16,72], index: 1, kind: input, shape index: {}]
  %s2 = inlined_call_operand.vmem [shape: f32[16,1], index: 2, kind: input, shape index: {}]
  %s3 = inlined_call_operand.vmem [shape: f32[16,64], index: 3, kind: output, shape index: {}]
  %s4 = sld [smem:[#allocation0]]
  $region22: #{lpips_distance_sampler_forward.14} parent=0
    _
  %s6 = ssub.s32 1, %s4
  %s7 = scalar_select 0, %s6, %s4
  // Predicated region
  $region2: #{lpips_distance_sampler_forward.14} parent=0 // pred_check
    _
  $region3: #{lpips_distance_sampler_forward.14} parent=0 // pred_check_branch
    %9 = sbr.rel (0) target = $region5
  $region4: #{lpips_distance_sampler_forward.14} parent=0 // pred_region
    _
  $region5: #{lpips_distance_sampler_forward.14} parent=0 // pred_fallthru
    _
  // Predicated region
  $region6: #{lpips_distance_sampler_forward.14} parent=0 // pred_check
    _
  $region7: #{lpips_distance_sampler_forward.14} parent=0 // pred_check_branch
    %11 = sbr.rel (0) target = $region9
  $region8: #{lpips_distance_sampler_forward.14} parent=0 // pred_region
    _
  $region9: #{lpips_distance_sampler_forward.14} parent=0 // pred_fallthru
    _
  // Predicated region
  $region10: #{lpips_distance_sampler_forward.14} parent=0 // pred_check
    _
  $region11: #{lpips_distance_sampler_forward.14} parent=0 // pred_check_branch
    %13 = sbr.rel (0) target = $region13
  $region12: #{lpips_distance_sampler_forward.14} parent=0 // pred_region
    _
  $region13: #{lpips_distance_sampler_forward.14} parent=0 // pred_fallthru
    _
  %v15 = vld [vmem:[%s1] sm:$0xf]
  %v16 = vld [vmem:[%s1 + $0x4] sm:$0xf]
  %v17 = vld [vmem:[%s0] sm:$0xf]
  %v18 = vld [vmem:[%s0 + $0x4] sm:$0xf]
  %v19 = vld [vmem:[%s0 + $0x8] sm:$0xf]
  %v20 = vld [vmem:[%s0 + $0xc] sm:$0xf]
  %v21 = vld [vmem:[%s0 + $0x10] sm:$0xf]
  %v22 = vld [vmem:[%s0 + $0x14] sm:$0xf]
  %v23 = vld [vmem:[%s0 + $0x18] sm:$0xf]
  %v24 = vld [vmem:[%s0 + $0x1c] sm:$0xf]
  %v25 = vld [vmem:[%s0 + $0x20] sm:$0xf]
  %v26 = vld [vmem:[%s2] sm:$0xff]
  %v27 = vld [vmem:[%s2 + $0x8] sm:$0xff]
  %29 = vset.pattern.permute.xlu0 0
  %30 = vperm.xlu0 %29, %v26
  %v31 = vpop.permute.xlu0 %30
  %34 = vset.pattern.permute.xlu0 0
  %35 = vperm.xlu0 %34, %v27
  %v36 = vpop.permute.xlu0 %35
  %v40 = vunpack.c.l.b16 %v15
  %v41 = vunpack.c.l.b16 %v16
  %v42 = vpack.c.b16 %v41, %v40
  %v52 = vunpack.c.l.b16 %v17
  %v53 = vunpack.c.l.b16 %v18
  %v54 = vunpack.c.l.b16 %v19
  %v55 = vunpack.c.l.b16 %v20
  %v56 = vunpack.c.l.b16 %v21
  %v57 = vunpack.c.l.b16 %v22
  %v58 = vunpack.c.l.b16 %v23
  %v59 = vunpack.c.l.b16 %v24
  %v60 = vunpack.c.l.b16 %v25
  %v61 = vpack.c.b16 %v53, %v52
  %v62 = vpack.c.b16 %v55, %v54
  %v63 = vpack.c.b16 %v57, %v56
  %v64 = vpack.c.b16 %v59, %v58
  %v65 = vpack.c.b16 %v60, %v60
  %vm70 = vcmask 588800
  %v72 = vsel %vm70, %v42, 0
  %vm74 = vcmask 1043456
  %v76 = vsel %vm74, %v65, 0
  %78 = vmatprep.subr.bf16.mxu0 0
  %79 = vmatpush1.bf16.msra.mxu0 %v61
  %80 = vmatprep.subr.bf16.mxu0 0
  %81 = vmatpush1.bf16.msra.mxu0 %v62
  %82 = vmatprep.subr.bf16.mxu0 0
  %83 = vmatpush1.bf16.msra.mxu0 %v63
  %84 = vmatprep.subr.bf16.mxu0 0
  %85 = vmatpush1.bf16.msra.mxu0 %v64
  %86 = vmatprep.subr.bf16.mxu0 0
  %87 = vmatpush1.bf16.msra.mxu0 %v76
  %88 = vmatprep.subr.bf16.mxu0 0
  %89 = vmatpush1.bf16.msra.mxu0 0
  %90 = vmatprep.subr.bf16.mxu0 0
  %91 = vmatpush1.bf16.msra.mxu0 0
  %92 = vmatprep.subr.bf16.mxu0 0
  %93 = vmatpush1.bf16.msra.mxu0 0
  %94 = vmatprep.subr.bf16.mxu0 0
  %95 = vmatpush1.bf16.msra.mxu0 0
  %96 = vmatprep.subr.bf16.mxu0 0
  %97 = vmatpush1.bf16.msra.mxu0 0
  %98 = vmatprep.subr.bf16.mxu0 0
  %99 = vmatpush1.bf16.msra.mxu0 0
  %100 = vmatprep.subr.bf16.mxu0 0
  %101 = vmatpush1.bf16.msra.mxu0 0
  %102 = vmatprep.subr.bf16.mxu0 0
  %103 = vmatpush1.bf16.msra.mxu0 0
  %104 = vmatprep.subr.bf16.mxu0 0
  %105 = vmatpush1.bf16.msra.mxu0 0
  %106 = vmatprep.subr.bf16.mxu0 0
  %107 = vmatpush1.bf16.msra.mxu0 0
  %108 = vmatprep.subr.bf16.mxu0 0
  %109 = vmatpush1.bf16.msra.mxu0 0
  %110 = vmatprep.mubr.bf16.mxu0 0
  %111 = vmatmul.mubr.bf16.gmra.mrb[0].mxu0 %v72
  %v112 = vpop.f32.mrb[0].mxu0
  %v113 = vadd.f32 %v31, %v112
  %v114 = vpop.f32.mrb[0].mxu0
  %v115 = vpop.f32.mrb[0].mxu0
  %v116 = vadd.f32 %v36, %v115
  %v117 = vpop.f32.mrb[0].mxu0
  %118 = vdwg.mxu0
  %v119 = vmax.f32 %v113, 0.0
  %v120 = vmax.f32 %v116, 0.0
  %vm121 = vcmask 523264
  %122 = vst.msk [vmem:[%s3] sm:$0xff] %vm121, %v119
  %123 = vst.msk [vmem:[%s3 + $0x8] sm:$0xff] %vm121, %v120
  // Predicated region
  $region14: #{lpips_distance_sampler_forward.14} parent=0 // pred_check
    _
  $region15: #{lpips_distance_sampler_forward.14} parent=0 // pred_check_branch
    %125 = sbr.rel (0) target = $region17
  $region16: #{lpips_distance_sampler_forward.14} parent=0 // pred_region
    _
  $region17: #{lpips_distance_sampler_forward.14} parent=0 // pred_fallthru
    _
  // Predicated region
  $region18: #{lpips_distance_sampler_forward.14} parent=0 // pred_check
    _
  $region19: #{lpips_distance_sampler_forward.14} parent=0 // pred_check_branch
    %127 = sbr.rel (0) target = $region21
  $region20: #{lpips_distance_sampler_forward.14} parent=0 // pred_region
    _
  $region21: #{lpips_distance_sampler_forward.14} parent=0 // pred_fallthru
    _

// kernel: lpips_distance_sampler_forward.15
$region0: #{lpips_distance_sampler_forward.15}
  #allocation0 [shape = 'u32[]', space=smem, size = 0x4, offset = 0x4, fixed_abs, tag = 'smem constant byte address 0x4 - core index']
  #allocation1 [shape = 'u32[144,128]{1,0:T(1,128)}', space=vmem, size = 0x12000, scoped, tag = 'internal scratch']
  %s0 = inlined_call_operand.vmem [shape: f32[8,128], index: 0, kind: input, shape index: {}]
  %s1 = inlined_call_operand.vmem [shape: f32[8,128], index: 1, kind: input, shape index: {}]
  %s2 = inlined_call_operand.vmem [shape: f32[8,1], index: 2, kind: input, shape index: {}]
  %s3 = inlined_call_operand.vmem [shape: f32[16,32], index: 3, kind: input, shape index: {}]
  %s4 = inlined_call_operand.vmem [shape: f32[16,32], index: 4, kind: input, shape index: {}]
  %s5 = inlined_call_operand.vmem [shape: f32[16,1], index: 5, kind: input, shape index: {}]
  %s6 = inlined_call_operand.hbm [shape: f32[1,1], index: 6, kind: output, shape index: {}]
  %s7 = sld [smem:[#allocation0]]
  $region34: #{lpips_distance_sampler_forward.15} parent=0
    _
  %s9 = ssub.s32 1, %s7
  %s10 = scalar_select 0, %s9, %s7
  $region1: #{lpips_distance_sampler_forward.15} parent=0
    #allocation2 [shape = 'u8[512]{0}', space=vmem, size = 0x400, scoped, tag = 'output window, operand 0, single buffered']
    #allocation3 [shape = 's32[1]{0}', space=sflag, size = 0x4, scoped, tag = 'scoped memory for lpips_distance_sampler_forward.15']
    %11 = vsyncpa [#allocation3], 0
    // Predicated region
    $region2: #{lpips_distance_sampler_forward.15} parent=1 // pred_check
      _
    $region3: #{lpips_distance_sampler_forward.15} parent=1 // pred_check_branch
      %13 = sbr.rel (0) target = $region5
    $region4: #{lpips_distance_sampler_forward.15} parent=1 // pred_region
      _
    $region5: #{lpips_distance_sampler_forward.15} parent=1 // pred_fallthru
      _
    // Predicated region
    $region6: #{lpips_distance_sampler_forward.15} parent=1 // pred_check
      _
    $region7: #{lpips_distance_sampler_forward.15} parent=1 // pred_check_branch
      %15 = sbr.rel (0) target = $region9
    $region8: #{lpips_distance_sampler_forward.15} parent=1 // pred_region
      _
    $region9: #{lpips_distance_sampler_forward.15} parent=1 // pred_fallthru
      _
    // Predicated region
    $region10: #{lpips_distance_sampler_forward.15} parent=1 // pred_check
      _
    $region11: #{lpips_distance_sampler_forward.15} parent=1 // pred_check_branch
      %17 = sbr.rel (0) target = $region13
    $region12: #{lpips_distance_sampler_forward.15} parent=1 // pred_region
      _
    $region13: #{lpips_distance_sampler_forward.15} parent=1 // pred_fallthru
      _
    // Predicated region
    $region14: #{lpips_distance_sampler_forward.15} parent=1 // pred_check
      _
    $region15: #{lpips_distance_sampler_forward.15} parent=1 // pred_check_branch
      %19 = sbr.rel (0) target = $region17
    $region16: #{lpips_distance_sampler_forward.15} parent=1 // pred_region
      _
    $region17: #{lpips_distance_sampler_forward.15} parent=1 // pred_fallthru
      _
    // Predicated region
    $region18: #{lpips_distance_sampler_forward.15} parent=1 // pred_check
      _
    $region19: #{lpips_distance_sampler_forward.15} parent=1 // pred_check_branch
      %21 = sbr.rel (0) target = $region21
    $region20: #{lpips_distance_sampler_forward.15} parent=1 // pred_region
      _
    $region21: #{lpips_distance_sampler_forward.15} parent=1 // pred_fallthru
      _
    // Predicated region
    $region22: #{lpips_distance_sampler_forward.15} parent=1 // pred_check
      _
    $region23: #{lpips_distance_sampler_forward.15} parent=1 // pred_check_branch
      %23 = sbr.rel (0) target = $region25
    $region24: #{lpips_distance_sampler_forward.15} parent=1 // pred_region
      _
    $region25: #{lpips_distance_sampler_forward.15} parent=1 // pred_fallthru
      _
    %v24 = vld [vmem:[%s0] sm:$0xff]
    %v25 = vld [vmem:[%s1] sm:$0xff]
    %v26 = vld [vmem:[%s2] sm:$0xff]
    %v27 = vmul.f32 %v24, %v24
    %v28 = vrot.slane %v27, 4
    %v29 = vadd.f32 %v27, %v28
    %v30 = vrot.slane %v29, 2
    %v31 = vadd.f32 %v29, %v30
    %v32 = vrot.slane %v31, 1
    %v33 = vadd.f32 %v31, %v32
    %v34 = vadd.f32 %v33, 1e-10
    %v35 = vrsqrt.pop %v34
    %v36 = vmul.f32 %v24, %v35
    %v37 = vmul.f32 %v25, %v25
    %v38 = vrot.slane %v37, 4
    %v39 = vadd.f32 %v37, %v38
    %v40 = vrot.slane %v39, 2
    %v41 = vadd.f32 %v39, %v40
    %v42 = vrot.slane %v41, 1
    %v43 = vadd.f32 %v41, %v42
    %v44 = vadd.f32 %v43, 1e-10
    %v45 = vrsqrt.pop %v44
    %v46 = vmul.f32 %v25, %v45
    %v47 = vsub.f32 %v36, %v46
    %49 = vset.pattern.permute.xlu0 0
    %50 = vperm.xlu0 %49, %v26
    %v51 = vpop.permute.xlu0 %50
    %v53 = vmul.f32 %v47, %v51
    %v54 = vmul.f32 %v53, %v53
    %v55 = vrot.slane %v54, 4
    %v56 = vadd.f32 %v54, %v55
    %v57 = vrot.slane %v56, 2
    %v58 = vadd.f32 %v56, %v57
    %v59 = vrot.slane %v58, 1
    %v60 = vadd.f32 %v58, %v59
    %61 = vadd.xlane.f32.xlu0 %v60
    %v62 = vpop.xlane.xlu0 %61
    %v63 = vld [vmem:[%s3] sm:$0xff]
    %v64 = vld [vmem:[%s3 + $0x8] sm:$0xff]
    %v65 = vld [vmem:[%s4] sm:$0xff]
    %v66 = vld [vmem:[%s4 + $0x8] sm:$0xff]
    %v67 = vld [vmem:[%s5] sm:$0xff]
    %v68 = vld [vmem:[%s5 + $0x8] sm:$0xff]
    %v69 = vmul.f32 %v63, %v63
    %v70 = vmul.f32 %v64, %v64
    %vm71 = vcmask 261120
    %v72 = vsel %vm71, %v69, 0.0
    %v73 = vsel %vm71, %v70, 0.0
    %v74 = vadd.f32 %v72, %v73
    %v75 = vrot.slane %v74, 4
    %v76 = vadd.f32 %v74, %v75
    %v77 = vrot.slane %v76, 2
    %v78 = vadd.f32 %v76, %v77
    %v79 = vrot.slane %v78, 1
    %v80 = vadd.f32 %v78, %v79
    %v81 = vadd.f32 %v80, 1e-10
    %v82 = vrsqrt.pop %v81
    %v83 = vmul.f32 %v63, %v82
    %v84 = vmul.f32 %v64, %v82
    %v85 = vmul.f32 %v65, %v65
    %v86 = vmul.f32 %v66, %v66
    %v87 = vsel %vm71, %v85, 0.0
    %v88 = vsel %vm71, %v86, 0.0
    %v89 = vadd.f32 %v87, %v88
    %v90 = vrot.slane %v89, 4
    %v91 = vadd.f32 %v89, %v90
    %v92 = vrot.slane %v91, 2
    %v93 = vadd.f32 %v91, %v92
    %v94 = vrot.slane %v93, 1
    %v95 = vadd.f32 %v93, %v94
    %v96 = vadd.f32 %v95, 1e-10
    %v97 = vrsqrt.pop %v96
    %v98 = vmul.f32 %v65, %v97
    %v99 = vmul.f32 %v66, %v97
    %v100 = vsub.f32 %v83, %v98
    %v101 = vsub.f32 %v84, %v99
    %103 = vset.pattern.permute.xlu0 0
    %104 = vperm.xlu0 %103, %v67
    %v105 = vpop.permute.xlu0 %104
    %108 = vset.pattern.permute.xlu0 0
    %109 = vperm.xlu0 %108, %v68
    %v110 = vpop.permute.xlu0 %109
    %v112 = vmul.f32 %v100, %v105
    %v113 = vmul.f32 %v101, %v110
    %v114 = vmul.f32 %v112, %v112
    %v115 = vmul.f32 %v113, %v113
    %v116 = vsel %vm71, %v114, 0.0
    %v117 = vsel %vm71, %v115, 0.0
    %v118 = vadd.f32 %v116, %v117
    %v119 = vrot.slane %v118, 4
    %v120 = vadd.f32 %v118, %v119
    %v121 = vrot.slane %v120, 2
    %v122 = vadd.f32 %v120, %v121
    %v123 = vrot.slane %v122, 1
    %v124 = vadd.f32 %v122, %v123
    %v125 = vsel %vm71, %v124, 0.0
    %126 = vadd.xlane.f32.xlu0 %v125
    %v127 = vpop.xlane.xlu0 %126
    %v128 = vadd.f32 %v62, %v127
    %vm129 = vcmask 0
    %130 = vst.msk [vmem:[#allocation2] sm:$0x1] %vm129, %v128
    // Predicated region
    $region26: #{lpips_distance_sampler_forward.15} parent=1 // pred_check
      _
    $region27: #{lpips_distance_sampler_forward.15} parent=1 // pred_check_branch
      %132 = sbr.rel (0) target = $region29
    $region28: #{lpips_distance_sampler_forward.15} parent=1 // pred_region
      %s134 = ssub.s32 16, 16
      %135 = vsyncadd [#allocation3], %s134
      %s137 = sshll.u32 [#allocation2], 4
      %s138 = int_to_ptr.vmem [resolvable:$true] %s137
      %140 = dma.vmem_to_hbm [thread:$0]  %s138, 16, %s6, [#allocation3]
    $region29: #{lpips_distance_sampler_forward.15} parent=1 // pred_fallthru
      _
    // Predicated region
    $region30: #{lpips_distance_sampler_forward.15} parent=1 // pred_check
      _
    $region31: #{lpips_distance_sampler_forward.15} parent=1 // pred_check_branch
      %142 = sbr.rel (0) target = $region33
    $region32: #{lpips_distance_sampler_forward.15} parent=1 // pred_region
      %143 = dma.done [#allocation3], 16
    $region33: #{lpips_distance_sampler_forward.15} parent=1 // pred_fallthru
      _
    %144 = vsyncpa [#allocation3], 1

</llo_original>
